<compile_context>
chip_gen: v7x
topology: tpu7x:2x2x1
jax: 0.10.0
libtpu: 0.0.40
codegen_flags: <defaults>
</compile_context>

<pallas_src>
import math

import jax
import jax.numpy as jnp
from jax.experimental import pallas as pl
from jax.experimental.pallas import tpu as pltpu

# ----- scheme_var equivalents (small, self-consistent) -----
TP = 32          # timepoints
CH = 4           # EEG channels
SF = 40          # sampling frequency
N_CLASS = 2

OCTSF = int(math.ceil(SF * 0.1))                 # 4   conv1 temporal kernel width
TPCONV1 = int(TP - OCTSF + 1)                    # 29  width after conv1
APSTRIDE = int(math.ceil(OCTSF / 2))             # 2   pool stride
POOL_K = int(APSTRIDE * 5)                       # 10  pool kernel width
POOL_OUT = (TPCONV1 - POOL_K) // APSTRIDE + 1    # 10  pooled width (floor rule of AvgPool2d)
FEAT = int(40 * math.ceil((TPCONV1 - POOL_K) / APSTRIDE))   # 400 classifier in_features
assert FEAT == 40 * POOL_OUT, "chosen (tp, sf) must make view() consistent, as in the torch model"

BN_EPS = 1e-5
CONV_OUT = 40 * TPCONV1          # 1160  flattened (channel, time) width after fused conv+BN
CONV_OUT_PAD = 1280              # zero-padded to a multiple of 256 (MXU / vreg friendly)
N_CLASS_PAD = 128                # lane-dense output width (sliced back to N_CLASS)
MAX_TILE_B = 512                 # batch tile; sweep 512->1024 on v6e/v7x


def _round_up(n, m):
    return ((n + m - 1) // m) * m


def shallow_convnet_kernel(x_ref, a_ref, bias_ref, pool_ref, lwt_ref, lb_ref, o_ref):
    # x_ref    : (TILE_B, CH*TP)           bf16 batch tile (channel-major, time minor)
    # a_ref    : (CH*TP, CONV_OUT_PAD)     bf16 fused conv1∘conv2∘BN weight (Toeplitz, 0-padded)
    # bias_ref : (1, CONV_OUT_PAD)         f32 fused BN bias (zero in padded columns)
    # pool_ref : (CONV_OUT_PAD, FEAT)      bf16 0/1 block-diagonal pooling mask
    # lwt_ref  : (FEAT, N_CLASS_PAD)       f32 classifier weight, pre-transposed, 0-padded cols
    # lb_ref   : (1, N_CLASS_PAD)          f32 classifier bias, 0-padded
    # o_ref    : (TILE_B, N_CLASS_PAD)     f32

    # fused conv1 -> conv2 -> BatchNorm (inference affine): bf16 MXU matmul, f32 accumulation
    y = jnp.dot(x_ref[...], a_ref[...], preferred_element_type=jnp.float32) + bias_ref[...]

    # square nonlinearity (VPU; free filler under the MXU-bound regime)
    z = y * y

    # AvgPool2d((1, POOL_K), stride=(1, APSTRIDE)): 0/1-mask matmul (bf16, f32 acc) + f32 scale,
    # then log on the EUP.
    pooled = jnp.dot(z.astype(jnp.bfloat16), pool_ref[...],
                     preferred_element_type=jnp.float32) * (1.0 / POOL_K)
    feat = jnp.log(pooled)

    # Dropout(0.25) is identity in eval mode.
    # TODO(synk): training-mode dropout / batch-statistics BN not implemented (inference semantics).

    # classifier kept in f32 (flatten order matches torch .view: channel-major, pooled-time minor)
    o_ref[...] = jnp.dot(feat, lwt_ref[...], preferred_element_type=jnp.float32) + lb_ref[...]


def prepare_params(w1, w2, bn, lw, lb):
    """One-time (model-load) fold of conv1+conv2+BN, pooling mask and classifier into padded,
    kernel-ready arrays.  Exact linear transforms in eval mode; bf16 cast only at the end."""
    hp = jax.lax.Precision.HIGHEST
    gamma, beta, mean, var = bn[:, 0], bn[:, 1], bn[:, 2], bn[:, 3]
    scale = gamma * jax.lax.rsqrt(var + BN_EPS)                                  # (40,)
    # fused conv weight: Wf[c, h, k] = scale[c] * sum_o w2[c, o, h] * w1[o, k]
    wf = jnp.einsum('coh,ok->chk', w2, w1, precision=hp) * scale[:, None, None]  # (40, CH, OCTSF)
    bias = beta - mean * scale                                                   # (40,)

    # Toeplitz-unrolled fused conv matrix: A[h*TP + (t+k), c*TPCONV1 + t] = wf[c, h, k]
    t_in = jnp.arange(TP)
    t_out = jnp.arange(TPCONV1)
    kk = jnp.arange(OCTSF)
    sel = (t_in[None, :, None] == (t_out[None, None, :] + kk[:, None, None])
           ).astype(jnp.float32)                                                 # (K, TP, T1)
    A = jnp.einsum('chk,kio->hico', wf, sel, precision=hp).reshape(CH * TP, CONV_OUT)
    A = jnp.pad(A, ((0, 0), (0, CONV_OUT_PAD - CONV_OUT))).astype(jnp.bfloat16)
    bias_row = jnp.broadcast_to(bias[:, None], (40, TPCONV1)).reshape(1, CONV_OUT)
    bias_row = jnp.pad(bias_row, ((0, 0), (0, CONV_OUT_PAD - CONV_OUT))).astype(jnp.float32)

    # block-diagonal 0/1 pooling mask (1/POOL_K scale is applied in-kernel in f32)
    jcol = jnp.arange(POOL_OUT)
    P = ((t_out[:, None] >= jcol[None, :] * APSTRIDE) &
         (t_out[:, None] < jcol[None, :] * APSTRIDE + POOL_K)).astype(jnp.float32)  # (T1, POOL_OUT)
    Pbig = jnp.einsum('cd,tj->ctdj', jnp.eye(40, dtype=jnp.float32), P
                      ).reshape(CONV_OUT, FEAT)                                  # (1160, 400)
    Pbig = jnp.pad(Pbig, ((0, CONV_OUT_PAD - CONV_OUT), (0, 0))).astype(jnp.bfloat16)

    # classifier: pre-transposed, lane-dense padded (zero cols -> zero outputs, sliced off later)
    lwT = jnp.pad(lw.T.astype(jnp.float32), ((0, 0), (0, N_CLASS_PAD - N_CLASS)))
    lbp = jnp.pad(lb.astype(jnp.float32).reshape(1, N_CLASS),
                  ((0, 0), (0, N_CLASS_PAD - N_CLASS)))
    return A, bias_row, Pbig, lwT, lbp


@jax.jit
def shallow_convnet_forward(x_nchw, A, bias_row, Pbig, lwT, lbp):
    """x_nchw: (B, 1, CH, TP) float32, as in PyTorch. Returns (B, N_CLASS) float32."""
    B = x_nchw.shape[0]
    # flatten (CH, TP) into one lane-dense row per sample; bf16 operands for the MXU
    x2d = x_nchw[:, 0, :, :].reshape(B, CH * TP).astype(jnp.bfloat16)

    # batch tiling: sublane multiple of 16 (bf16 packing) and >=2 grid steps so both v7x
    # TensorCores get work even for small batches (grid axis is "parallel").
    tile_b = min(MAX_TILE_B, _round_up(B, 16))
    if _round_up(B, tile_b) // tile_b < 2:
        tile_b = max(16, _round_up((B + 1) // 2, 16))
    Bp = max(_round_up(B, tile_b), 2 * tile_b)
    if Bp != B:
        # pad with 1.0 (not 0.0): keeps log() finite in the throwaway padded rows
        x2d = jnp.pad(x2d, ((0, Bp - B), (0, 0)), constant_values=1.0)

    out = pl.pallas_call(
        shallow_convnet_kernel,
        out_shape=jax.ShapeDtypeStruct((Bp, N_CLASS_PAD), jnp.float32),
        grid_spec=pltpu.PrefetchScalarGridSpec(
            num_scalar_prefetch=0,
            grid=(Bp // tile_b,),
            in_specs=[
                pl.BlockSpec((tile_b, CH * TP), lambda i: (i, 0)),
                pl.BlockSpec((CH * TP, CONV_OUT_PAD), lambda i: (0, 0)),
                pl.BlockSpec((1, CONV_OUT_PAD), lambda i: (0, 0)),
                pl.BlockSpec((CONV_OUT_PAD, FEAT), lambda i: (0, 0)),
                pl.BlockSpec((FEAT, N_CLASS_PAD), lambda i: (0, 0)),
                pl.BlockSpec((1, N_CLASS_PAD), lambda i: (0, 0)),
            ],
            out_specs=pl.BlockSpec((tile_b, N_CLASS_PAD), lambda i: (i, 0)),
        ),
        compiler_params=pltpu.CompilerParams(
            dimension_semantics=("parallel",),
            vmem_limit_bytes=48 * 1024 * 1024,
        ),
    )(x2d, A, bias_row, Pbig, lwT, lbp)
    return out[:B, :N_CLASS]


def reference_forward(x_nchw, w1, w2, bn, lw, lb):
    """Plain-JAX f32 reference replicating the PyTorch forward (eval mode)."""
    hp = jax.lax.Precision.HIGHEST
    x = x_nchw[:, 0, :, :].astype(jnp.float32)                      # (B, CH, TP)
    # conv1
    xs = jnp.stack([x[:, :, k:k + TPCONV1] for k in range(OCTSF)], axis=-1)  # (B,CH,T1,K)
    y1 = jnp.einsum('bhtk,ok->boht', xs, w1, precision=hp)          # (B,40,CH,T1)
    # conv2
    y2 = jnp.einsum('boht,coh->bct', y1, w2, precision=hp)          # (B,40,T1)
    gamma, beta, mean, var = bn[:, 0], bn[:, 1], bn[:, 2], bn[:, 3]
    y = (y2 - mean[None, :, None]) * (gamma * jax.lax.rsqrt(var + BN_EPS))[None, :, None] \
        + beta[None, :, None]
    y = y * y
    cols = [jnp.mean(y[:, :, j * APSTRIDE:j * APSTRIDE + POOL_K], axis=2) for j in range(POOL_OUT)]
    pooled = jnp.log(jnp.stack(cols, axis=-1))                      # (B,40,POOL_OUT)
    feat = pooled.reshape(-1, FEAT)
    return feat @ lw.T + lb[0]


if __name__ == "__main__":
    key = jax.random.PRNGKey(0)
    kx, k1, k2, kg, kb, km, kv, klw, klb = jax.random.split(key, 9)

    B = 2
    x = jax.random.normal(kx, (B, 1, CH, TP), dtype=jnp.float32)    # NCHW like PyTorch

    # Deterministic synthetic parameters (shapes from the module's __init__).
    w1 = 0.1 * jax.random.normal(k1, (40, OCTSF), dtype=jnp.float32)       # conv1 (40,1,1,OCTSF)
    w2 = 0.1 * jax.random.normal(k2, (40, 40, CH), dtype=jnp.float32)      # conv2 (40,40,CH,1)
    gamma = 1.0 + 0.1 * jax.random.normal(kg, (40,), dtype=jnp.float32)
    beta = 0.1 * jax.random.normal(kb, (40,), dtype=jnp.float32)
    rmean = 0.05 * jax.random.normal(km, (40,), dtype=jnp.float32)
    rvar = jax.random.uniform(kv, (40,), minval=0.5, maxval=1.5, dtype=jnp.float32)
    bn = jnp.stack([gamma, beta, rmean, rvar], axis=1)                      # (40, 4)
    lw = 0.05 * jax.random.normal(klw, (N_CLASS, FEAT), dtype=jnp.float32)  # classifier weight
    lb = 0.05 * jax.random.normal(klb, (1, N_CLASS), dtype=jnp.float32)     # classifier bias

    params = prepare_params(w1, w2, bn, lw, lb)       # one-time, model-load cost (hoisted)
    out = shallow_convnet_forward(x, *params)
    out = jax.block_until_ready(out)

    ref = reference_forward(x, w1, w2, bn, lw, lb)
    assert out.shape == (B, N_CLASS)
    # tolerance sized for bf16 matmul operands with f32 accumulation; outputs are O(1)
    max_err = jnp.max(jnp.abs(out - ref))
    assert jnp.allclose(out, ref, atol=3e-2, rtol=3e-2), (out, ref, max_err)

    print("KERNEL_OK")
</pallas_src>

<mosaic_0001>
module attributes {stable_mosaic.version = 11 : i64} {
  func.func @shallow_convnet_kernel(%arg0: i32, %arg1: memref<16x128xbf16, #tpu.memory_space<vmem>>, %arg2: memref<128x1280xbf16, #tpu.memory_space<vmem>>, %arg3: memref<1x1280xf32, #tpu.memory_space<vmem>>, %arg4: memref<1280x400xbf16, #tpu.memory_space<vmem>>, %arg5: memref<400x128xf32, #tpu.memory_space<vmem>>, %arg6: memref<1x128xf32, #tpu.memory_space<vmem>>, %arg7: memref<16x128xf32, #tpu.memory_space<vmem>>) attributes {dimension_semantics = [#tpu.dimension_semantics<parallel>], iteration_bounds = array<i64: 2>, scalar_prefetch = 0 : i64, scratch_operands = 0 : i64, tpu.core_type = #tpu.core_type<tc>, window_params = [{transform_indices = @transform_0, window_bounds = array<i64: 16, 128>}, {pipeline_mode = #tpu.pipeline_mode<synchronous>, transform_indices = @transform_1, window_bounds = array<i64: 128, 1280>}, {pipeline_mode = #tpu.pipeline_mode<synchronous>, transform_indices = @transform_2, window_bounds = array<i64: 1, 1280>}, {pipeline_mode = #tpu.pipeline_mode<synchronous>, transform_indices = @transform_3, window_bounds = array<i64: 1280, 400>}, {pipeline_mode = #tpu.pipeline_mode<synchronous>, transform_indices = @transform_4, window_bounds = array<i64: 400, 128>}, {pipeline_mode = #tpu.pipeline_mode<synchronous>, transform_indices = @transform_5, window_bounds = array<i64: 1, 128>}, {transform_indices = @transform_6, window_bounds = array<i64: 16, 128>}]} {
    %c0 = arith.constant 0 : index
    %c0_0 = arith.constant 0 : index
    %0 = vector.load %arg1[%c0, %c0_0] : memref<16x128xbf16, #tpu.memory_space<vmem>>, vector<16x128xbf16>
    %c0_1 = arith.constant 0 : index
    %c0_2 = arith.constant 0 : index
    %1 = vector.load %arg2[%c0_1, %c0_2] : memref<128x1280xbf16, #tpu.memory_space<vmem>>, vector<128x1280xbf16>
    %cst = arith.constant dense<0.000000e+00> : vector<16x1280xf32>
    %2 = tpu.matmul %0, %1, %cst {dimension_numbers = #tpu.dot_dimension_numbers<[1], [0], [0], [1], [0, 0, 1, 1], [], []>} : vector<16x128xbf16>, vector<128x1280xbf16>, vector<16x1280xf32> -> vector<16x1280xf32>
    %c0_3 = arith.constant 0 : index
    %c0_4 = arith.constant 0 : index
    %3 = vector.load %arg3[%c0_3, %c0_4] : memref<1x1280xf32, #tpu.memory_space<vmem>>, vector<1x1280xf32>
    %4 = vector.broadcast %3 : vector<1x1280xf32> to vector<16x1280xf32>
    %5 = arith.addf %2, %4 : vector<16x1280xf32>
    %6 = arith.mulf %5, %5 : vector<16x1280xf32>
    %7 = arith.truncf %6 : vector<16x1280xf32> to vector<16x1280xbf16>
    %c0_5 = arith.constant 0 : index
    %c0_6 = arith.constant 0 : index
    %8 = vector.load %arg4[%c0_5, %c0_6] : memref<1280x400xbf16, #tpu.memory_space<vmem>>, vector<1280x400xbf16>
    %cst_7 = arith.constant dense<0.000000e+00> : vector<16x400xf32>
    %9 = tpu.matmul %7, %8, %cst_7 {dimension_numbers = #tpu.dot_dimension_numbers<[1], [0], [0], [1], [0, 0, 1, 1], [], []>} : vector<16x1280xbf16>, vector<1280x400xbf16>, vector<16x400xf32> -> vector<16x400xf32>
    %cst_8 = arith.constant 1.000000e-01 : f32
    %10 = vector.broadcast %cst_8 : f32 to vector<16x400xf32>
    %11 = arith.mulf %9, %10 : vector<16x400xf32>
    %12 = math.log %11 : vector<16x400xf32>
    %c0_9 = arith.constant 0 : index
    %c0_10 = arith.constant 0 : index
    %13 = vector.load %arg5[%c0_9, %c0_10] : memref<400x128xf32, #tpu.memory_space<vmem>>, vector<400x128xf32>
    %cst_11 = arith.constant dense<0.000000e+00> : vector<16x128xf32>
    %14 = tpu.matmul %12, %13, %cst_11 {dimension_numbers = #tpu.dot_dimension_numbers<[1], [0], [0], [1], [0, 0, 1, 1], [], []>} : vector<16x400xf32>, vector<400x128xf32>, vector<16x128xf32> -> vector<16x128xf32>
    %c0_12 = arith.constant 0 : index
    %c0_13 = arith.constant 0 : index
    %15 = vector.load %arg6[%c0_12, %c0_13] : memref<1x128xf32, #tpu.memory_space<vmem>>, vector<1x128xf32>
    %16 = vector.broadcast %15 : vector<1x128xf32> to vector<16x128xf32>
    %17 = arith.addf %14, %16 : vector<16x128xf32>
    %c0_14 = arith.constant 0 : index
    %c0_15 = arith.constant 0 : index
    %18 = vector.load %arg7[%c0_14, %c0_15] : memref<16x128xf32, #tpu.memory_space<vmem>>, vector<16x128xf32>
    tpu.vector_store %arg7[%c0_14, %c0_15], %17 {strides = array<i32>} : memref<16x128xf32, #tpu.memory_space<vmem>>, vector<16x128xf32>,
    return
  }
  func.func @transform_0(%arg0: i32) -> (i32, i32) {
    %c0_i32 = arith.constant 0 : i32
    %c0_i32_0 = arith.constant 0 : i32
    return %arg0, %c0_i32 : i32, i32
  }
  func.func @transform_1(%arg0: i32) -> (i32, i32) {
    %c0_i32 = arith.constant 0 : i32
    %c0_i32_0 = arith.constant 0 : i32
    %c0_i32_1 = arith.constant 0 : i32
    return %c0_i32, %c0_i32_0 : i32, i32
  }
  func.func @transform_2(%arg0: i32) -> (i32, i32) {
    %c0_i32 = arith.constant 0 : i32
    %c0_i32_0 = arith.constant 0 : i32
    %c0_i32_1 = arith.constant 0 : i32
    return %c0_i32, %c0_i32_0 : i32, i32
  }
  func.func @transform_3(%arg0: i32) -> (i32, i32) {
    %c0_i32 = arith.constant 0 : i32
    %c0_i32_0 = arith.constant 0 : i32
    %c0_i32_1 = arith.constant 0 : i32
    return %c0_i32, %c0_i32_0 : i32, i32
  }
  func.func @transform_4(%arg0: i32) -> (i32, i32) {
    %c0_i32 = arith.constant 0 : i32
    %c0_i32_0 = arith.constant 0 : i32
    %c0_i32_1 = arith.constant 0 : i32
    return %c0_i32, %c0_i32_0 : i32, i32
  }
  func.func @transform_5(%arg0: i32) -> (i32, i32) {
    %c0_i32 = arith.constant 0 : i32
    %c0_i32_0 = arith.constant 0 : i32
    %c0_i32_1 = arith.constant 0 : i32
    return %c0_i32, %c0_i32_0 : i32, i32
  }
  func.func @transform_6(%arg0: i32) -> (i32, i32) {
    %c0_i32 = arith.constant 0 : i32
    %c0_i32_0 = arith.constant 0 : i32
    return %arg0, %c0_i32 : i32, i32
  }
}

</mosaic_0001>

<llo_original>
// kernel: shallow_convnet_forward.1
$region0: #{shallow_convnet_forward.1}
  #allocation0 [shape = 'u32[]', space=smem, size = 0x4, offset = 0x4, fixed_abs, tag = 'smem constant byte address 0x4 - core index']
  #allocation1 [shape = 'u32[144,128]{1,0:T(1,128)}', space=vmem, size = 0x12000, scoped, tag = 'internal scratch']
  %s0 = inlined_call_operand.vmem [shape: bf16[32,128], index: 0, kind: input, shape index: {}]
  %s1 = inlined_call_operand.vmem [shape: bf16[128,1280], index: 1, kind: input, shape index: {}]
  %s2 = inlined_call_operand.vmem [shape: f32[1,1280], index: 2, kind: input, shape index: {}]
  %s3 = inlined_call_operand.vmem [shape: bf16[1280,400], index: 3, kind: input, shape index: {}]
  %s4 = inlined_call_operand.vmem [shape: f32[400,128], index: 4, kind: input, shape index: {}]
  %s5 = inlined_call_operand.vmem [shape: f32[1,128], index: 5, kind: input, shape index: {}]
  %s6 = inlined_call_operand.vmem [shape: f32[32,128], index: 6, kind: output, shape index: {}]
  %s7 = sld [smem:[#allocation0]]
  $region57: #{shallow_convnet_forward.1} parent=0
    _
  %s9 = ssub.s32 1, %s7
  %s10 = scalar_select 0, %s9, %s7
  loop: start=0, step=1, limit=4
  $region2: #{shallow_convnet_forward.1} parent=0 // loop_pre_header
    _
  $region3: #{shallow_convnet_forward.1} parent=0 // loop_header
    %s12 = sphi 0, %s16
    %p13 = scmp.ge.s32.totalorder %s12, 4
    %s22 = sphi 0, %s24
    %s25 = sphi 0, %s22
    %s26 = sphi 0, %s25
    %s42 = sphi 0, %s26
    %s46 = sphi 0, %s46
    %s48 = sphi 0, %s46
    %s49 = sphi 0, %s48
    %s63 = sphi 0, %s49
    %s67 = sphi 0, %s67
    %s69 = sphi 0, %s67
    %s70 = sphi 0, %s69
    %s84 = sphi 0, %s70
    %s88 = sphi 0, %s88
    %s90 = sphi 0, %s88
    %s91 = sphi 0, %s90
    %s105 = sphi 0, %s91
    %s109 = sphi 0, %s109
    %s111 = sphi 0, %s109
    %s112 = sphi 0, %s111
    %s126 = sphi 0, %s112
    %s130 = sphi 0, %s130
    %s132 = sphi 0, %s130
    %s133 = sphi 0, %s132
    %s147 = sphi 0, %s133
    %s153 = sphi 0, %s155
    %s156 = sphi 0, %s153
    %s157 = sphi 0, %s156
    %s173 = sphi 0, %s157
  $region4: #{shallow_convnet_forward.1} parent=0 // loop_header_branch
    %15 = sbr.rel (%p13) target = $region8
  $region5: #{shallow_convnet_forward.1} parent=0 // loop_body
    %s17 = ssub.s32 %s12, 1
    %s18 = ssub.s32 %s12, 2
    %s19 = sadd.s32 %s12, 1
    %s20 = ssub.s32 %s12, %s19
    %p21 = scmp.eq.s32.totalorder %s20, 0
    %s23 = sadd.s32 %s22, 1
    %s24 = scalar_select %p21, %s22, %s23
    %p27 = pneg %p21
    %p28 = scmp.eq.s32.totalorder %s12, 1
    %p29 = por %p27, %p28
    %p30 = scmp.ne.s32.totalorder %s22, %s25
    %p31 = scmp.eq.s32.totalorder %s12, 0
    %p32 = por %p30, %p31
    %p33 = scmp.ne.s32.totalorder %s22, %s25
    %p34 = scmp.eq.s32.totalorder %s17, 1
    %p35 = por %p33, %p34
    %p36 = scmp.ne.s32.totalorder %s25, %s26
    %p37 = scmp.eq.s32.totalorder %s17, 0
    %p38 = por %p36, %p37
    %p39 = scmp.ne.s32.totalorder %s25, %s26
    %p40 = scmp.eq.s32.totalorder %s18, 1
    %p41 = por %p39, %p40
    %p43 = scmp.ne.s32.totalorder %s26, %s42
    %p44 = scmp.eq.s32.totalorder %s18, 0
    %p45 = por %p43, %p44
    %s47 = sadd.s32 %s46, 1
    %p50 = scmp.eq.s32.totalorder %s12, 1
    %p51 = scmp.ne.s32.totalorder %s46, %s48
    %p52 = scmp.eq.s32.totalorder %s12, 0
    %p53 = por %p51, %p52
    %p54 = scmp.ne.s32.totalorder %s46, %s48
    %p55 = scmp.eq.s32.totalorder %s17, 1
    %p56 = por %p54, %p55
    %p57 = scmp.ne.s32.totalorder %s48, %s49
    %p58 = scmp.eq.s32.totalorder %s17, 0
    %p59 = por %p57, %p58
    %p60 = scmp.ne.s32.totalorder %s48, %s49
    %p61 = scmp.eq.s32.totalorder %s18, 1
    %p62 = por %p60, %p61
    %p64 = scmp.ne.s32.totalorder %s49, %s63
    %p65 = scmp.eq.s32.totalorder %s18, 0
    %p66 = por %p64, %p65
    %s68 = sadd.s32 %s67, 1
    %p71 = scmp.eq.s32.totalorder %s12, 1
    %p72 = scmp.ne.s32.totalorder %s67, %s69
    %p73 = scmp.eq.s32.totalorder %s12, 0
    %p74 = por %p72, %p73
    %p75 = scmp.ne.s32.totalorder %s67, %s69
    %p76 = scmp.eq.s32.totalorder %s17, 1
    %p77 = por %p75, %p76
    %p78 = scmp.ne.s32.totalorder %s69, %s70
    %p79 = scmp.eq.s32.totalorder %s17, 0
    %p80 = por %p78, %p79
    %p81 = scmp.ne.s32.totalorder %s69, %s70
    %p82 = scmp.eq.s32.totalorder %s18, 1
    %p83 = por %p81, %p82
    %p85 = scmp.ne.s32.totalorder %s70, %s84
    %p86 = scmp.eq.s32.totalorder %s18, 0
    %p87 = por %p85, %p86
    %s89 = sadd.s32 %s88, 1
    %p92 = scmp.eq.s32.totalorder %s12, 1
    %p93 = scmp.ne.s32.totalorder %s88, %s90
    %p94 = scmp.eq.s32.totalorder %s12, 0
    %p95 = por %p93, %p94
    %p96 = scmp.ne.s32.totalorder %s88, %s90
    %p97 = scmp.eq.s32.totalorder %s17, 1
    %p98 = por %p96, %p97
    %p99 = scmp.ne.s32.totalorder %s90, %s91
    %p100 = scmp.eq.s32.totalorder %s17, 0
    %p101 = por %p99, %p100
    %p102 = scmp.ne.s32.totalorder %s90, %s91
    %p103 = scmp.eq.s32.totalorder %s18, 1
    %p104 = por %p102, %p103
    %p106 = scmp.ne.s32.totalorder %s91, %s105
    %p107 = scmp.eq.s32.totalorder %s18, 0
    %p108 = por %p106, %p107
    %s110 = sadd.s32 %s109, 1
    %p113 = scmp.eq.s32.totalorder %s12, 1
    %p114 = scmp.ne.s32.totalorder %s109, %s111
    %p115 = scmp.eq.s32.totalorder %s12, 0
    %p116 = por %p114, %p115
    %p117 = scmp.ne.s32.totalorder %s109, %s111
    %p118 = scmp.eq.s32.totalorder %s17, 1
    %p119 = por %p117, %p118
    %p120 = scmp.ne.s32.totalorder %s111, %s112
    %p121 = scmp.eq.s32.totalorder %s17, 0
    %p122 = por %p120, %p121
    %p123 = scmp.ne.s32.totalorder %s111, %s112
    %p124 = scmp.eq.s32.totalorder %s18, 1
    %p125 = por %p123, %p124
    %p127 = scmp.ne.s32.totalorder %s112, %s126
    %p128 = scmp.eq.s32.totalorder %s18, 0
    %p129 = por %p127, %p128
    %s131 = sadd.s32 %s130, 1
    %p134 = scmp.eq.s32.totalorder %s12, 1
    %p135 = scmp.ne.s32.totalorder %s130, %s132
    %p136 = scmp.eq.s32.totalorder %s12, 0
    %p137 = por %p135, %p136
    %p138 = scmp.ne.s32.totalorder %s130, %s132
    %p139 = scmp.eq.s32.totalorder %s17, 1
    %p140 = por %p138, %p139
    %p141 = scmp.ne.s32.totalorder %s132, %s133
    %p142 = scmp.eq.s32.totalorder %s17, 0
    %p143 = por %p141, %p142
    %p144 = scmp.ne.s32.totalorder %s132, %s133
    %p145 = scmp.eq.s32.totalorder %s18, 1
    %p146 = por %p144, %p145
    %p148 = scmp.ne.s32.totalorder %s133, %s147
    %p149 = scmp.eq.s32.totalorder %s18, 0
    %p150 = por %p148, %p149
    %s151 = ssub.s32 %s12, %s19
    %p152 = scmp.eq.s32.totalorder %s151, 0
    %s154 = sadd.s32 %s153, 1
    %s155 = scalar_select %p152, %s153, %s154
    %p158 = pneg %p152
    %p159 = scmp.eq.s32.totalorder %s12, 1
    %p160 = por %p158, %p159
    %p161 = scmp.ne.s32.totalorder %s153, %s156
    %p162 = scmp.eq.s32.totalorder %s12, 0
    %p163 = por %p161, %p162
    %p164 = scmp.ne.s32.totalorder %s153, %s156
    %p165 = scmp.eq.s32.totalorder %s17, 1
    %p166 = por %p164, %p165
    %p167 = scmp.ne.s32.totalorder %s156, %s157
    %p168 = scmp.eq.s32.totalorder %s17, 0
    %p169 = por %p167, %p168
    %p170 = scmp.ne.s32.totalorder %s156, %s157
    %p171 = scmp.eq.s32.totalorder %s18, 1
    %p172 = por %p170, %p171
    %p174 = scmp.ne.s32.totalorder %s157, %s173
    %p175 = scmp.eq.s32.totalorder %s18, 0
    %p176 = por %p174, %p175
    %p177 = scmp.le.s32.totalorder 1, %s12
    %p178 = scmp.lt.s32.totalorder %s12, 3
    %p179 = pnand %p177, %p178
    %p180 = pneg %p179
    // Predicated region
    $region9: #{shallow_convnet_forward.1} parent=5 // pred_check
      _
    $region10: #{shallow_convnet_forward.1} parent=5 // pred_check_branch
      %182 = sbr.rel (%p179) target = $region12
    $region11: #{shallow_convnet_forward.1} parent=5 // pred_region
      %s183 = ssub.s32 %s12, 1
      // Predicated region
      $region13: #{shallow_convnet_forward.1} parent=11 // pred_check
        %p184 = pneg %p59
      $region14: #{shallow_convnet_forward.1} parent=11 // pred_check_branch
        %186 = sbr.rel (%p184) target = $region16
      $region15: #{shallow_convnet_forward.1} parent=11 // pred_region
        _
      $region16: #{shallow_convnet_forward.1} parent=11 // pred_fallthru
        _
      // Predicated region
      $region17: #{shallow_convnet_forward.1} parent=11 // pred_check
        %p187 = pneg %p80
      $region18: #{shallow_convnet_forward.1} parent=11 // pred_check_branch
        %189 = sbr.rel (%p187) target = $region20
      $region19: #{shallow_convnet_forward.1} parent=11 // pred_region
        _
      $region20: #{shallow_convnet_forward.1} parent=11 // pred_fallthru
        _
      // Predicated region
      $region21: #{shallow_convnet_forward.1} parent=11 // pred_check
        %p190 = pneg %p101
      $region22: #{shallow_convnet_forward.1} parent=11 // pred_check_branch
        %192 = sbr.rel (%p190) target = $region24
      $region23: #{shallow_convnet_forward.1} parent=11 // pred_region
        _
      $region24: #{shallow_convnet_forward.1} parent=11 // pred_fallthru
        _
      // Predicated region
      $region25: #{shallow_convnet_forward.1} parent=11 // pred_check
        %p193 = pneg %p122
      $region26: #{shallow_convnet_forward.1} parent=11 // pred_check_branch
        %195 = sbr.rel (%p193) target = $region28
      $region27: #{shallow_convnet_forward.1} parent=11 // pred_region
        _
      $region28: #{shallow_convnet_forward.1} parent=11 // pred_fallthru
        _
      // Predicated region
      $region29: #{shallow_convnet_forward.1} parent=11 // pred_check
        %p196 = pneg %p143
      $region30: #{shallow_convnet_forward.1} parent=11 // pred_check_branch
        %198 = sbr.rel (%p196) target = $region32
      $region31: #{shallow_convnet_forward.1} parent=11 // pred_region
        _
      $region32: #{shallow_convnet_forward.1} parent=11 // pred_fallthru
        _
    $region12: #{shallow_convnet_forward.1} parent=5 // pred_fallthru
      _
    %p199 = scmp.lt.s32.totalorder %s12, 2
    // Predicated region
    $region33: #{shallow_convnet_forward.1} parent=5 // pred_check
      %p200 = pneg %p199
    $region34: #{shallow_convnet_forward.1} parent=5 // pred_check_branch
      %202 = sbr.rel (%p200) target = $region36
    $region35: #{shallow_convnet_forward.1} parent=5 // pred_region
      // Predicated region
      $region37: #{shallow_convnet_forward.1} parent=35 // pred_check
        %p203 = pneg %p32
      $region38: #{shallow_convnet_forward.1} parent=35 // pred_check_branch
        %205 = sbr.rel (%p203) target = $region40
      $region39: #{shallow_convnet_forward.1} parent=35 // pred_region
        %s206 = smul.u32 2, %s12
        %p207 = scmp.lt.s32.totalorder %s206, 3
        %s208 = scalar_select %p207, %s206, 3
        %s209 = smul.addr %s208, 4
        %s210 = scalar_lea.vmem %s0, %s209
        %s211 = smul.u32 2, %s12
      $region40: #{shallow_convnet_forward.1} parent=35 // pred_fallthru
        _
    $region36: #{shallow_convnet_forward.1} parent=5 // pred_fallthru
      _
    %p212 = scmp.le.s32.totalorder 1, %s12
    %p213 = scmp.lt.s32.totalorder %s12, 3
    %p214 = pnand %p212, %p213
    %p215 = pneg %p214
    // Predicated region
    $region41: #{shallow_convnet_forward.1} parent=5 // pred_check
      _
    $region42: #{shallow_convnet_forward.1} parent=5 // pred_check_branch
      %217 = sbr.rel (%p214) target = $region44
    $region43: #{shallow_convnet_forward.1} parent=5 // pred_region
      %s218 = ssub.s32 %s12, 1
      %s219 = smul.u32 2, %s17
      %p220 = scmp.lt.s32.totalorder %s219, 3
      %s221 = scalar_select %p220, %s219, 3
      %s222 = smul.addr %s221, 4
      %s223 = scalar_lea.vmem %s0, %s222
      %p224 = pneg %p38
      %p225 = pneg %p35
      %p226 = pneg %p59
      %p227 = pneg %p56
      %p228 = pneg %p80
      %p229 = pneg %p77
      %p230 = pneg %p101
      %p231 = pneg %p98
      %p232 = pneg %p122
      %p233 = pneg %p119
      %p234 = pneg %p143
      %p235 = pneg %p140
      %p236 = pneg %p169
      %p237 = pneg %p166
      %s238 = smul.u32 2, %s17
      %p239 = scmp.lt.s32.totalorder %s238, 3
      %s240 = scalar_select %p239, %s238, 3
      %s241 = smul.addr %s240, 8
      %s242 = scalar_lea.vmem %s6, %s241
      %s243 = smul.u32 2, %s17
      %p244 = scmp.lt.s32.totalorder %s243, 3
      %s245 = scalar_select %p244, %s243, 3
      %s246 = smul.addr %s245, 4
      %s247 = scalar_lea.vmem %s0, %s246
      %s248 = smul.u32 2, %s17
      %s249 = smul.u32 2, %s17
      %p250 = scmp.lt.s32.totalorder %s249, 3
      %s251 = scalar_select %p250, %s249, 3
      %s252 = smul.addr %s251, 8
      %s253 = scalar_lea.vmem %s6, %s252
      %s254 = smul.u32 2, %s17
      %v256 = vld [vmem:[%s247] sm:$0xf]
      %v257 = vld [vmem:[%s247 + $0x4] sm:$0xf]
      %v258 = vld [vmem:[%s1] sm:$0xff]
      %v259 = vld [vmem:[%s1 + $0x8] sm:$0xff]
      %v260 = vld [vmem:[%s1 + $0x10] sm:$0xff]
      %v261 = vld [vmem:[%s1 + $0x18] sm:$0xff]
      %v262 = vld [vmem:[%s1 + $0x20] sm:$0xff]
      %v263 = vld [vmem:[%s1 + $0x28] sm:$0xff]
      %v264 = vld [vmem:[%s1 + $0x30] sm:$0xff]
      %v265 = vld [vmem:[%s1 + $0x38] sm:$0xff]
      %v266 = vld [vmem:[%s1 + $0x40] sm:$0xff]
      %v267 = vld [vmem:[%s1 + $0x48] sm:$0xff]
      %v268 = vld [vmem:[%s1 + $0x50] sm:$0xff]
      %v269 = vld [vmem:[%s1 + $0x58] sm:$0xff]
      %v270 = vld [vmem:[%s1 + $0x60] sm:$0xff]
      %v271 = vld [vmem:[%s1 + $0x68] sm:$0xff]
      %v272 = vld [vmem:[%s1 + $0x70] sm:$0xff]
      %v273 = vld [vmem:[%s1 + $0x78] sm:$0xff]
      %v274 = vld [vmem:[%s1 + $0x80] sm:$0xff]
      %v275 = vld [vmem:[%s1 + $0x88] sm:$0xff]
      %v276 = vld [vmem:[%s1 + $0x90] sm:$0xff]
      %v277 = vld [vmem:[%s1 + $0x98] sm:$0xff]
      %v278 = vld [vmem:[%s1 + $0xa0] sm:$0xff]
      %v279 = vld [vmem:[%s1 + $0xa8] sm:$0xff]
      %v280 = vld [vmem:[%s1 + $0xb0] sm:$0xff]
      %v281 = vld [vmem:[%s1 + $0xb8] sm:$0xff]
      %v282 = vld [vmem:[%s1 + $0xc0] sm:$0xff]
      %v283 = vld [vmem:[%s1 + $0xc8] sm:$0xff]
      %v284 = vld [vmem:[%s1 + $0xd0] sm:$0xff]
      %v285 = vld [vmem:[%s1 + $0xd8] sm:$0xff]
      %v286 = vld [vmem:[%s1 + $0xe0] sm:$0xff]
      %v287 = vld [vmem:[%s1 + $0xe8] sm:$0xff]
      %v288 = vld [vmem:[%s1 + $0xf0] sm:$0xff]
      %v289 = vld [vmem:[%s1 + $0xf8] sm:$0xff]
      %v290 = vld [vmem:[%s1 + $0x100] sm:$0xff]
      %v291 = vld [vmem:[%s1 + $0x108] sm:$0xff]
      %v292 = vld [vmem:[%s1 + $0x110] sm:$0xff]
      %v293 = vld [vmem:[%s1 + $0x118] sm:$0xff]
      %v294 = vld [vmem:[%s1 + $0x120] sm:$0xff]
      %v295 = vld [vmem:[%s1 + $0x128] sm:$0xff]
      %v296 = vld [vmem:[%s1 + $0x130] sm:$0xff]
      %v297 = vld [vmem:[%s1 + $0x138] sm:$0xff]
      %v298 = vld [vmem:[%s1 + $0x140] sm:$0xff]
      %v299 = vld [vmem:[%s1 + $0x148] sm:$0xff]
      %v300 = vld [vmem:[%s1 + $0x150] sm:$0xff]
      %v301 = vld [vmem:[%s1 + $0x158] sm:$0xff]
      %v302 = vld [vmem:[%s1 + $0x160] sm:$0xff]
      %v303 = vld [vmem:[%s1 + $0x168] sm:$0xff]
      %v304 = vld [vmem:[%s1 + $0x170] sm:$0xff]
      %v305 = vld [vmem:[%s1 + $0x178] sm:$0xff]
      %v306 = vld [vmem:[%s1 + $0x180] sm:$0xff]
      %v307 = vld [vmem:[%s1 + $0x188] sm:$0xff]
      %v308 = vld [vmem:[%s1 + $0x190] sm:$0xff]
      %v309 = vld [vmem:[%s1 + $0x198] sm:$0xff]
      %v310 = vld [vmem:[%s1 + $0x1a0] sm:$0xff]
      %v311 = vld [vmem:[%s1 + $0x1a8] sm:$0xff]
      %v312 = vld [vmem:[%s1 + $0x1b0] sm:$0xff]
      %v313 = vld [vmem:[%s1 + $0x1b8] sm:$0xff]
      %v314 = vld [vmem:[%s1 + $0x1c0] sm:$0xff]
      %v315 = vld [vmem:[%s1 + $0x1c8] sm:$0xff]
      %v316 = vld [vmem:[%s1 + $0x1d0] sm:$0xff]
      %v317 = vld [vmem:[%s1 + $0x1d8] sm:$0xff]
      %v318 = vld [vmem:[%s1 + $0x1e0] sm:$0xff]
      %v319 = vld [vmem:[%s1 + $0x1e8] sm:$0xff]
      %v320 = vld [vmem:[%s1 + $0x1f0] sm:$0xff]
      %v321 = vld [vmem:[%s1 + $0x1f8] sm:$0xff]
      %v322 = vld [vmem:[%s1 + $0x200] sm:$0xff]
      %v323 = vld [vmem:[%s1 + $0x208] sm:$0xff]
      %v324 = vld [vmem:[%s1 + $0x210] sm:$0xff]
      %v325 = vld [vmem:[%s1 + $0x218] sm:$0xff]
      %v326 = vld [vmem:[%s1 + $0x220] sm:$0xff]
      %v327 = vld [vmem:[%s1 + $0x228] sm:$0xff]
      %v328 = vld [vmem:[%s1 + $0x230] sm:$0xff]
      %v329 = vld [vmem:[%s1 + $0x238] sm:$0xff]
      %v330 = vld [vmem:[%s1 + $0x240] sm:$0xff]
      %v331 = vld [vmem:[%s1 + $0x248] sm:$0xff]
      %v332 = vld [vmem:[%s1 + $0x250] sm:$0xff]
      %v333 = vld [vmem:[%s1 + $0x258] sm:$0xff]
      %v334 = vld [vmem:[%s1 + $0x260] sm:$0xff]
      %v335 = vld [vmem:[%s1 + $0x268] sm:$0xff]
      %v336 = vld [vmem:[%s1 + $0x270] sm:$0xff]
      %v337 = vld [vmem:[%s1 + $0x278] sm:$0xff]
      %v338 = vld [vmem:[%s2] sm:$0xff]
      %v339 = vld [vmem:[%s2 + $0x8] sm:$0x3]
      %v342 = vlaneseq
      %v343 = vshrl.u32 %v342, 7
      %v344 = vsub.s32 0, %v343
      %v345 = vrot.slane %v338, %v344
      %v346 = vlaneseq
      %v347 = vshrl.u32 %v346, 7
      %v348 = vsub.s32 1, %v347
      %v349 = vrot.slane %v338, %v348
      %v350 = vlaneseq
      %v351 = vshrl.u32 %v350, 7
      %v352 = vsub.s32 2, %v351
      %v353 = vrot.slane %v338, %v352
      %v354 = vlaneseq
      %v355 = vshrl.u32 %v354, 7
      %v356 = vsub.s32 3, %v355
      %v357 = vrot.slane %v338, %v356
      %v358 = vlaneseq
      %v359 = vshrl.u32 %v358, 7
      %v360 = vsub.s32 4, %v359
      %v361 = vrot.slane %v338, %v360
      %v362 = vlaneseq
      %v363 = vshrl.u32 %v362, 7
      %v364 = vsub.s32 5, %v363
      %v365 = vrot.slane %v338, %v364
      %v366 = vlaneseq
      %v367 = vshrl.u32 %v366, 7
      %v368 = vsub.s32 6, %v367
      %v369 = vrot.slane %v338, %v368
      %v370 = vlaneseq
      %v371 = vshrl.u32 %v370, 7
      %v372 = vsub.s32 7, %v371
      %v373 = vrot.slane %v338, %v372
      %v374 = vlaneseq
      %v375 = vshrl.u32 %v374, 7
      %v376 = vsub.s32 0, %v375
      %v377 = vrot.slane %v339, %v376
      %v378 = vlaneseq
      %v379 = vshrl.u32 %v378, 7
      %v380 = vsub.s32 1, %v379
      %v381 = vrot.slane %v339, %v380
      %v394 = vunpack.c.l.b16 %v256
      %v395 = vunpack.c.l.b16 %v257
      %v396 = vpack.c.b16 %v395, %v394
      %v478 = vunpack.c.l.b16 %v258
      %v479 = vunpack.c.h.b16 %v258
      %v480 = vunpack.c.l.b16 %v259
      %v481 = vunpack.c.h.b16 %v259
      %v482 = vunpack.c.l.b16 %v260
      %v483 = vunpack.c.h.b16 %v260
      %v484 = vunpack.c.l.b16 %v261
      %v485 = vunpack.c.h.b16 %v261
      %v486 = vunpack.c.l.b16 %v262
      %v487 = vunpack.c.h.b16 %v262
      %v488 = vunpack.c.l.b16 %v263
      %v489 = vunpack.c.h.b16 %v263
      %v490 = vunpack.c.l.b16 %v264
      %v491 = vunpack.c.h.b16 %v264
      %v492 = vunpack.c.l.b16 %v265
      %v493 = vunpack.c.h.b16 %v265
      %v494 = vunpack.c.l.b16 %v266
      %v495 = vunpack.c.h.b16 %v266
      %v496 = vunpack.c.l.b16 %v267
      %v497 = vunpack.c.h.b16 %v267
      %v498 = vunpack.c.l.b16 %v268
      %v499 = vunpack.c.h.b16 %v268
      %v500 = vunpack.c.l.b16 %v269
      %v501 = vunpack.c.h.b16 %v269
      %v502 = vunpack.c.l.b16 %v270
      %v503 = vunpack.c.h.b16 %v270
      %v504 = vunpack.c.l.b16 %v271
      %v505 = vunpack.c.h.b16 %v271
      %v506 = vunpack.c.l.b16 %v272
      %v507 = vunpack.c.h.b16 %v272
      %v508 = vunpack.c.l.b16 %v273
      %v509 = vunpack.c.h.b16 %v273
      %v510 = vunpack.c.l.b16 %v274
      %v511 = vunpack.c.h.b16 %v274
      %v512 = vunpack.c.l.b16 %v275
      %v513 = vunpack.c.h.b16 %v275
      %v514 = vunpack.c.l.b16 %v276
      %v515 = vunpack.c.h.b16 %v276
      %v516 = vunpack.c.l.b16 %v277
      %v517 = vunpack.c.h.b16 %v277
      %v518 = vunpack.c.l.b16 %v278
      %v519 = vunpack.c.h.b16 %v278
      %v520 = vunpack.c.l.b16 %v279
      %v521 = vunpack.c.h.b16 %v279
      %v522 = vunpack.c.l.b16 %v280
      %v523 = vunpack.c.h.b16 %v280
      %v524 = vunpack.c.l.b16 %v281
      %v525 = vunpack.c.h.b16 %v281
      %v526 = vunpack.c.l.b16 %v282
      %v527 = vunpack.c.h.b16 %v282
      %v528 = vunpack.c.l.b16 %v283
      %v529 = vunpack.c.h.b16 %v283
      %v530 = vunpack.c.l.b16 %v284
      %v531 = vunpack.c.h.b16 %v284
      %v532 = vunpack.c.l.b16 %v285
      %v533 = vunpack.c.h.b16 %v285
      %v534 = vunpack.c.l.b16 %v286
      %v535 = vunpack.c.h.b16 %v286
      %v536 = vunpack.c.l.b16 %v287
      %v537 = vunpack.c.h.b16 %v287
      %v538 = vunpack.c.l.b16 %v288
      %v539 = vunpack.c.h.b16 %v288
      %v540 = vunpack.c.l.b16 %v289
      %v541 = vunpack.c.h.b16 %v289
      %v542 = vunpack.c.l.b16 %v290
      %v543 = vunpack.c.h.b16 %v290
      %v544 = vunpack.c.l.b16 %v291
      %v545 = vunpack.c.h.b16 %v291
      %v546 = vunpack.c.l.b16 %v292
      %v547 = vunpack.c.h.b16 %v292
      %v548 = vunpack.c.l.b16 %v293
      %v549 = vunpack.c.h.b16 %v293
      %v550 = vunpack.c.l.b16 %v294
      %v551 = vunpack.c.h.b16 %v294
      %v552 = vunpack.c.l.b16 %v295
      %v553 = vunpack.c.h.b16 %v295
      %v554 = vunpack.c.l.b16 %v296
      %v555 = vunpack.c.h.b16 %v296
      %v556 = vunpack.c.l.b16 %v297
      %v557 = vunpack.c.h.b16 %v297
      %v558 = vunpack.c.l.b16 %v298
      %v559 = vunpack.c.h.b16 %v298
      %v560 = vunpack.c.l.b16 %v299
      %v561 = vunpack.c.h.b16 %v299
      %v562 = vunpack.c.l.b16 %v300
      %v563 = vunpack.c.h.b16 %v300
      %v564 = vunpack.c.l.b16 %v301
      %v565 = vunpack.c.h.b16 %v301
      %v566 = vunpack.c.l.b16 %v302
      %v567 = vunpack.c.h.b16 %v302
      %v568 = vunpack.c.l.b16 %v303
      %v569 = vunpack.c.h.b16 %v303
      %v570 = vunpack.c.l.b16 %v304
      %v571 = vunpack.c.h.b16 %v304
      %v572 = vunpack.c.l.b16 %v305
      %v573 = vunpack.c.h.b16 %v305
      %v574 = vunpack.c.l.b16 %v306
      %v575 = vunpack.c.h.b16 %v306
      %v576 = vunpack.c.l.b16 %v307
      %v577 = vunpack.c.h.b16 %v307
      %v578 = vunpack.c.l.b16 %v308
      %v579 = vunpack.c.h.b16 %v308
      %v580 = vunpack.c.l.b16 %v309
      %v581 = vunpack.c.h.b16 %v309
      %v582 = vunpack.c.l.b16 %v310
      %v583 = vunpack.c.h.b16 %v310
      %v584 = vunpack.c.l.b16 %v311
      %v585 = vunpack.c.h.b16 %v311
      %v586 = vunpack.c.l.b16 %v312
      %v587 = vunpack.c.h.b16 %v312
      %v588 = vunpack.c.l.b16 %v313
      %v589 = vunpack.c.h.b16 %v313
      %v590 = vunpack.c.l.b16 %v314
      %v591 = vunpack.c.h.b16 %v314
      %v592 = vunpack.c.l.b16 %v315
      %v593 = vunpack.c.h.b16 %v315
      %v594 = vunpack.c.l.b16 %v316
      %v595 = vunpack.c.h.b16 %v316
      %v596 = vunpack.c.l.b16 %v317
      %v597 = vunpack.c.h.b16 %v317
      %v598 = vunpack.c.l.b16 %v318
      %v599 = vunpack.c.h.b16 %v318
      %v600 = vunpack.c.l.b16 %v319
      %v601 = vunpack.c.h.b16 %v319
      %v602 = vunpack.c.l.b16 %v320
      %v603 = vunpack.c.h.b16 %v320
      %v604 = vunpack.c.l.b16 %v321
      %v605 = vunpack.c.h.b16 %v321
      %v606 = vunpack.c.l.b16 %v322
      %v607 = vunpack.c.h.b16 %v322
      %v608 = vunpack.c.l.b16 %v323
      %v609 = vunpack.c.h.b16 %v323
      %v610 = vunpack.c.l.b16 %v324
      %v611 = vunpack.c.h.b16 %v324
      %v612 = vunpack.c.l.b16 %v325
      %v613 = vunpack.c.h.b16 %v325
      %v614 = vunpack.c.l.b16 %v326
      %v615 = vunpack.c.h.b16 %v326
      %v616 = vunpack.c.l.b16 %v327
      %v617 = vunpack.c.h.b16 %v327
      %v618 = vunpack.c.l.b16 %v328
      %v619 = vunpack.c.h.b16 %v328
      %v620 = vunpack.c.l.b16 %v329
      %v621 = vunpack.c.h.b16 %v329
      %v622 = vunpack.c.l.b16 %v330
      %v623 = vunpack.c.h.b16 %v330
      %v624 = vunpack.c.l.b16 %v331
      %v625 = vunpack.c.h.b16 %v331
      %v626 = vunpack.c.l.b16 %v332
      %v627 = vunpack.c.h.b16 %v332
      %v628 = vunpack.c.l.b16 %v333
      %v629 = vunpack.c.h.b16 %v333
      %v630 = vunpack.c.l.b16 %v334
      %v631 = vunpack.c.h.b16 %v334
      %v632 = vunpack.c.l.b16 %v335
      %v633 = vunpack.c.h.b16 %v335
      %v634 = vunpack.c.l.b16 %v336
      %v635 = vunpack.c.h.b16 %v336
      %v636 = vunpack.c.l.b16 %v337
      %v637 = vunpack.c.h.b16 %v337
      %v638 = vpack.c.b16 %v488, %v478
      %v639 = vpack.c.b16 %v489, %v479
      %v640 = vpack.c.b16 %v490, %v480
      %v641 = vpack.c.b16 %v491, %v481
      %v642 = vpack.c.b16 %v492, %v482
      %v643 = vpack.c.b16 %v493, %v483
      %v644 = vpack.c.b16 %v494, %v484
      %v645 = vpack.c.b16 %v495, %v485
      %v646 = vpack.c.b16 %v496, %v486
      %v647 = vpack.c.b16 %v497, %v487
      %v648 = vpack.c.b16 %v508, %v498
      %v649 = vpack.c.b16 %v509, %v499
      %v650 = vpack.c.b16 %v510, %v500
      %v651 = vpack.c.b16 %v511, %v501
      %v652 = vpack.c.b16 %v512, %v502
      %v653 = vpack.c.b16 %v513, %v503
      %v654 = vpack.c.b16 %v514, %v504
      %v655 = vpack.c.b16 %v515, %v505
      %v656 = vpack.c.b16 %v516, %v506
      %v657 = vpack.c.b16 %v517, %v507
      %v658 = vpack.c.b16 %v528, %v518
      %v659 = vpack.c.b16 %v529, %v519
      %v660 = vpack.c.b16 %v530, %v520
      %v661 = vpack.c.b16 %v531, %v521
      %v662 = vpack.c.b16 %v532, %v522
      %v663 = vpack.c.b16 %v533, %v523
      %v664 = vpack.c.b16 %v534, %v524
      %v665 = vpack.c.b16 %v535, %v525
      %v666 = vpack.c.b16 %v536, %v526
      %v667 = vpack.c.b16 %v537, %v527
      %v668 = vpack.c.b16 %v548, %v538
      %v669 = vpack.c.b16 %v549, %v539
      %v670 = vpack.c.b16 %v550, %v540
      %v671 = vpack.c.b16 %v551, %v541
      %v672 = vpack.c.b16 %v552, %v542
      %v673 = vpack.c.b16 %v553, %v543
      %v674 = vpack.c.b16 %v554, %v544
      %v675 = vpack.c.b16 %v555, %v545
      %v676 = vpack.c.b16 %v556, %v546
      %v677 = vpack.c.b16 %v557, %v547
      %v678 = vpack.c.b16 %v568, %v558
      %v679 = vpack.c.b16 %v569, %v559
      %v680 = vpack.c.b16 %v570, %v560
      %v681 = vpack.c.b16 %v571, %v561
      %v682 = vpack.c.b16 %v572, %v562
      %v683 = vpack.c.b16 %v573, %v563
      %v684 = vpack.c.b16 %v574, %v564
      %v685 = vpack.c.b16 %v575, %v565
      %v686 = vpack.c.b16 %v576, %v566
      %v687 = vpack.c.b16 %v577, %v567
      %v688 = vpack.c.b16 %v588, %v578
      %v689 = vpack.c.b16 %v589, %v579
      %v690 = vpack.c.b16 %v590, %v580
      %v691 = vpack.c.b16 %v591, %v581
      %v692 = vpack.c.b16 %v592, %v582
      %v693 = vpack.c.b16 %v593, %v583
      %v694 = vpack.c.b16 %v594, %v584
      %v695 = vpack.c.b16 %v595, %v585
      %v696 = vpack.c.b16 %v596, %v586
      %v697 = vpack.c.b16 %v597, %v587
      %v698 = vpack.c.b16 %v608, %v598
      %v699 = vpack.c.b16 %v609, %v599
      %v700 = vpack.c.b16 %v610, %v600
      %v701 = vpack.c.b16 %v611, %v601
      %v702 = vpack.c.b16 %v612, %v602
      %v703 = vpack.c.b16 %v613, %v603
      %v704 = vpack.c.b16 %v614, %v604
      %v705 = vpack.c.b16 %v615, %v605
      %v706 = vpack.c.b16 %v616, %v606
      %v707 = vpack.c.b16 %v617, %v607
      %v708 = vpack.c.b16 %v628, %v618
      %v709 = vpack.c.b16 %v629, %v619
      %v710 = vpack.c.b16 %v630, %v620
      %v711 = vpack.c.b16 %v631, %v621
      %v712 = vpack.c.b16 %v632, %v622
      %v713 = vpack.c.b16 %v633, %v623
      %v714 = vpack.c.b16 %v634, %v624
      %v715 = vpack.c.b16 %v635, %v625
      %v716 = vpack.c.b16 %v636, %v626
      %v717 = vpack.c.b16 %v637, %v627
      %798 = vmatprep.subr.bf16.mxu0 %v639
      %799 = vmatpush1.bf16.msra.mxu0 %v638
      %800 = vmatprep.subr.bf16.mxu0 %v649
      %801 = vmatpush1.bf16.msra.mxu0 %v648
      %802 = vmatprep.subr.bf16.mxu0 %v659
      %803 = vmatpush1.bf16.msra.mxu0 %v658
      %804 = vmatprep.subr.bf16.mxu0 %v669
      %805 = vmatpush1.bf16.msra.mxu0 %v668
      %806 = vmatprep.subr.bf16.mxu0 %v679
      %807 = vmatpush1.bf16.msra.mxu0 %v678
      %808 = vmatprep.subr.bf16.mxu0 %v689
      %809 = vmatpush1.bf16.msra.mxu0 %v688
      %810 = vmatprep.subr.bf16.mxu0 %v699
      %811 = vmatpush1.bf16.msra.mxu0 %v698
      %812 = vmatprep.subr.bf16.mxu0 %v709
      %813 = vmatpush1.bf16.msra.mxu0 %v708
      %814 = vmatprep.subr.bf16.mxu0 0
      %815 = vmatpush1.bf16.msra.mxu0 0
      %816 = vmatprep.subr.bf16.mxu0 0
      %817 = vmatpush1.bf16.msra.mxu0 0
      %818 = vmatprep.subr.bf16.mxu0 0
      %819 = vmatpush1.bf16.msra.mxu0 0
      %820 = vmatprep.subr.bf16.mxu0 0
      %821 = vmatpush1.bf16.msra.mxu0 0
      %822 = vmatprep.subr.bf16.mxu0 0
      %823 = vmatpush1.bf16.msra.mxu0 0
      %824 = vmatprep.subr.bf16.mxu0 0
      %825 = vmatpush1.bf16.msra.mxu0 0
      %826 = vmatprep.subr.bf16.mxu0 0
      %827 = vmatpush1.bf16.msra.mxu0 0
      %828 = vmatprep.subr.bf16.mxu0 0
      %829 = vmatpush1.bf16.msra.mxu0 0
      %830 = vmatprep.mubr.bf16.mxu0 0
      %831 = vmatmul.mubr.bf16.gmra.mrb[0].mxu0 %v396
      %v832 = vpop.f32.mrb[0].mxu0
      %v833 = vadd.f32 %v345, %v832
      %v834 = vpop.f32.mrb[0].mxu0
      %v835 = vadd.f32 %v349, %v834
      %v836 = vpop.f32.mrb[0].mxu0
      %v837 = vadd.f32 %v345, %v836
      %v838 = vpop.f32.mrb[0].mxu0
      %v839 = vadd.f32 %v349, %v838
      %840 = vdwg.mxu0
      %841 = vmatprep.subr.bf16.mxu0 %v641
      %842 = vmatpush1.bf16.msra.mxu0 %v640
      %843 = vmatprep.subr.bf16.mxu0 %v651
      %844 = vmatpush1.bf16.msra.mxu0 %v650
      %845 = vmatprep.subr.bf16.mxu0 %v661
      %846 = vmatpush1.bf16.msra.mxu0 %v660
      %847 = vmatprep.subr.bf16.mxu0 %v671
      %848 = vmatpush1.bf16.msra.mxu0 %v670
      %849 = vmatprep.subr.bf16.mxu0 %v681
      %850 = vmatpush1.bf16.msra.mxu0 %v680
      %851 = vmatprep.subr.bf16.mxu0 %v691
      %852 = vmatpush1.bf16.msra.mxu0 %v690
      %853 = vmatprep.subr.bf16.mxu0 %v701
      %854 = vmatpush1.bf16.msra.mxu0 %v700
      %855 = vmatprep.subr.bf16.mxu0 %v711
      %856 = vmatpush1.bf16.msra.mxu0 %v710
      %857 = vmatprep.subr.bf16.mxu0 0
      %858 = vmatpush1.bf16.msra.mxu0 0
      %859 = vmatprep.subr.bf16.mxu0 0
      %860 = vmatpush1.bf16.msra.mxu0 0
      %861 = vmatprep.subr.bf16.mxu0 0
      %862 = vmatpush1.bf16.msra.mxu0 0
      %863 = vmatprep.subr.bf16.mxu0 0
      %864 = vmatpush1.bf16.msra.mxu0 0
      %865 = vmatprep.subr.bf16.mxu0 0
      %866 = vmatpush1.bf16.msra.mxu0 0
      %867 = vmatprep.subr.bf16.mxu0 0
      %868 = vmatpush1.bf16.msra.mxu0 0
      %869 = vmatprep.subr.bf16.mxu0 0
      %870 = vmatpush1.bf16.msra.mxu0 0
      %871 = vmatprep.subr.bf16.mxu0 0
      %872 = vmatpush1.bf16.msra.mxu0 0
      %873 = vmatprep.mubr.bf16.mxu0 0
      %874 = vmatmul.mubr.bf16.gmra.mrb[0].mxu0 %v396
      %v875 = vpop.f32.mrb[0].mxu0
      %v876 = vadd.f32 %v353, %v875
      %v877 = vpop.f32.mrb[0].mxu0
      %v878 = vadd.f32 %v357, %v877
      %v879 = vpop.f32.mrb[0].mxu0
      %v880 = vadd.f32 %v353, %v879
      %v881 = vpop.f32.mrb[0].mxu0
      %v882 = vadd.f32 %v357, %v881
      %883 = vdwg.mxu0
      %884 = vmatprep.subr.bf16.mxu0 %v643
      %885 = vmatpush1.bf16.msra.mxu0 %v642
      %886 = vmatprep.subr.bf16.mxu0 %v653
      %887 = vmatpush1.bf16.msra.mxu0 %v652
      %888 = vmatprep.subr.bf16.mxu0 %v663
      %889 = vmatpush1.bf16.msra.mxu0 %v662
      %890 = vmatprep.subr.bf16.mxu0 %v673
      %891 = vmatpush1.bf16.msra.mxu0 %v672
      %892 = vmatprep.subr.bf16.mxu0 %v683
      %893 = vmatpush1.bf16.msra.mxu0 %v682
      %894 = vmatprep.subr.bf16.mxu0 %v693
      %895 = vmatpush1.bf16.msra.mxu0 %v692
      %896 = vmatprep.subr.bf16.mxu0 %v703
      %897 = vmatpush1.bf16.msra.mxu0 %v702
      %898 = vmatprep.subr.bf16.mxu0 %v713
      %899 = vmatpush1.bf16.msra.mxu0 %v712
      %900 = vmatprep.subr.bf16.mxu0 0
      %901 = vmatpush1.bf16.msra.mxu0 0
      %902 = vmatprep.subr.bf16.mxu0 0
      %903 = vmatpush1.bf16.msra.mxu0 0
      %904 = vmatprep.subr.bf16.mxu0 0
      %905 = vmatpush1.bf16.msra.mxu0 0
      %906 = vmatprep.subr.bf16.mxu0 0
      %907 = vmatpush1.bf16.msra.mxu0 0
      %908 = vmatprep.subr.bf16.mxu0 0
      %909 = vmatpush1.bf16.msra.mxu0 0
      %910 = vmatprep.subr.bf16.mxu0 0
      %911 = vmatpush1.bf16.msra.mxu0 0
      %912 = vmatprep.subr.bf16.mxu0 0
      %913 = vmatpush1.bf16.msra.mxu0 0
      %914 = vmatprep.subr.bf16.mxu0 0
      %915 = vmatpush1.bf16.msra.mxu0 0
      %916 = vmatprep.mubr.bf16.mxu0 0
      %917 = vmatmul.mubr.bf16.gmra.mrb[0].mxu0 %v396
      %v918 = vpop.f32.mrb[0].mxu0
      %v919 = vadd.f32 %v361, %v918
      %v920 = vpop.f32.mrb[0].mxu0
      %v921 = vadd.f32 %v365, %v920
      %v922 = vpop.f32.mrb[0].mxu0
      %v923 = vadd.f32 %v361, %v922
      %v924 = vpop.f32.mrb[0].mxu0
      %v925 = vadd.f32 %v365, %v924
      %926 = vdwg.mxu0
      %927 = vmatprep.subr.bf16.mxu0 %v645
      %928 = vmatpush1.bf16.msra.mxu0 %v644
      %929 = vmatprep.subr.bf16.mxu0 %v655
      %930 = vmatpush1.bf16.msra.mxu0 %v654
      %931 = vmatprep.subr.bf16.mxu0 %v665
      %932 = vmatpush1.bf16.msra.mxu0 %v664
      %933 = vmatprep.subr.bf16.mxu0 %v675
      %934 = vmatpush1.bf16.msra.mxu0 %v674
      %935 = vmatprep.subr.bf16.mxu0 %v685
      %936 = vmatpush1.bf16.msra.mxu0 %v684
      %937 = vmatprep.subr.bf16.mxu0 %v695
      %938 = vmatpush1.bf16.msra.mxu0 %v694
      %939 = vmatprep.subr.bf16.mxu0 %v705
      %940 = vmatpush1.bf16.msra.mxu0 %v704
      %941 = vmatprep.subr.bf16.mxu0 %v715
      %942 = vmatpush1.bf16.msra.mxu0 %v714
      %943 = vmatprep.subr.bf16.mxu0 0
      %944 = vmatpush1.bf16.msra.mxu0 0
      %945 = vmatprep.subr.bf16.mxu0 0
      %946 = vmatpush1.bf16.msra.mxu0 0
      %947 = vmatprep.subr.bf16.mxu0 0
      %948 = vmatpush1.bf16.msra.mxu0 0
      %949 = vmatprep.subr.bf16.mxu0 0
      %950 = vmatpush1.bf16.msra.mxu0 0
      %951 = vmatprep.subr.bf16.mxu0 0
      %952 = vmatpush1.bf16.msra.mxu0 0
      %953 = vmatprep.subr.bf16.mxu0 0
      %954 = vmatpush1.bf16.msra.mxu0 0
      %955 = vmatprep.subr.bf16.mxu0 0
      %956 = vmatpush1.bf16.msra.mxu0 0
      %957 = vmatprep.subr.bf16.mxu0 0
      %958 = vmatpush1.bf16.msra.mxu0 0
      %959 = vmatprep.mubr.bf16.mxu0 0
      %960 = vmatmul.mubr.bf16.gmra.mrb[0].mxu0 %v396
      %v961 = vpop.f32.mrb[0].mxu0
      %v962 = vadd.f32 %v369, %v961
      %v963 = vpop.f32.mrb[0].mxu0
      %v964 = vadd.f32 %v373, %v963
      %v965 = vpop.f32.mrb[0].mxu0
      %v966 = vadd.f32 %v369, %v965
      %v967 = vpop.f32.mrb[0].mxu0
      %v968 = vadd.f32 %v373, %v967
      %969 = vdwg.mxu0
      %970 = vmatprep.subr.bf16.mxu0 %v647
      %971 = vmatpush1.bf16.msra.mxu0 %v646
      %972 = vmatprep.subr.bf16.mxu0 %v657
      %973 = vmatpush1.bf16.msra.mxu0 %v656
      %974 = vmatprep.subr.bf16.mxu0 %v667
      %975 = vmatpush1.bf16.msra.mxu0 %v666
      %976 = vmatprep.subr.bf16.mxu0 %v677
      %977 = vmatpush1.bf16.msra.mxu0 %v676
      %978 = vmatprep.subr.bf16.mxu0 %v687
      %979 = vmatpush1.bf16.msra.mxu0 %v686
      %980 = vmatprep.subr.bf16.mxu0 %v697
      %981 = vmatpush1.bf16.msra.mxu0 %v696
      %982 = vmatprep.subr.bf16.mxu0 %v707
      %983 = vmatpush1.bf16.msra.mxu0 %v706
      %984 = vmatprep.subr.bf16.mxu0 %v717
      %985 = vmatpush1.bf16.msra.mxu0 %v716
      %986 = vmatprep.subr.bf16.mxu0 0
      %987 = vmatpush1.bf16.msra.mxu0 0
      %988 = vmatprep.subr.bf16.mxu0 0
      %989 = vmatpush1.bf16.msra.mxu0 0
      %990 = vmatprep.subr.bf16.mxu0 0
      %991 = vmatpush1.bf16.msra.mxu0 0
      %992 = vmatprep.subr.bf16.mxu0 0
      %993 = vmatpush1.bf16.msra.mxu0 0
      %994 = vmatprep.subr.bf16.mxu0 0
      %995 = vmatpush1.bf16.msra.mxu0 0
      %996 = vmatprep.subr.bf16.mxu0 0
      %997 = vmatpush1.bf16.msra.mxu0 0
      %998 = vmatprep.subr.bf16.mxu0 0
      %999 = vmatpush1.bf16.msra.mxu0 0
      %1000 = vmatprep.subr.bf16.mxu0 0
      %1001 = vmatpush1.bf16.msra.mxu0 0
      %1002 = vmatprep.mubr.bf16.mxu0 0
      %1003 = vmatmul.mubr.bf16.gmra.mrb[0].mxu0 %v396
      %v1004 = vpop.f32.mrb[0].mxu0
      %v1005 = vadd.f32 %v377, %v1004
      %v1006 = vpop.f32.mrb[0].mxu0
      %v1007 = vadd.f32 %v381, %v1006
      %v1008 = vpop.f32.mrb[0].mxu0
      %v1009 = vadd.f32 %v377, %v1008
      %v1010 = vpop.f32.mrb[0].mxu0
      %v1011 = vadd.f32 %v381, %v1010
      %1012 = vdwg.mxu0
      %v1013 = vmul.f32 %v833, %v833
      %v1014 = vmul.f32 %v835, %v835
      %v1015 = vmul.f32 %v876, %v876
      %v1016 = vmul.f32 %v878, %v878
      %v1017 = vmul.f32 %v919, %v919
      %v1018 = vmul.f32 %v921, %v921
      %v1019 = vmul.f32 %v962, %v962
      %v1020 = vmul.f32 %v964, %v964
      %v1021 = vmul.f32 %v1005, %v1005
      %v1022 = vmul.f32 %v1007, %v1007
      %v1023 = vmul.f32 %v837, %v837
      %v1024 = vmul.f32 %v839, %v839
      %v1025 = vmul.f32 %v880, %v880
      %v1026 = vmul.f32 %v882, %v882
      %v1027 = vmul.f32 %v923, %v923
      %v1028 = vmul.f32 %v925, %v925
      %v1029 = vmul.f32 %v966, %v966
      %v1030 = vmul.f32 %v968, %v968
      %v1031 = vmul.f32 %v1009, %v1009
      %v1032 = vmul.f32 %v1011, %v1011
      %v1033 = vpack.c.bf16 %v1023, %v1013
      %v1034 = vpack.c.bf16 %v1024, %v1014
      %v1035 = vpack.c.bf16 %v1025, %v1015
      %v1036 = vpack.c.bf16 %v1026, %v1016
      %v1037 = vpack.c.bf16 %v1027, %v1017
      %v1038 = vpack.c.bf16 %v1028, %v1018
      %v1039 = vpack.c.bf16 %v1029, %v1019
      %v1040 = vpack.c.bf16 %v1030, %v1020
      %v1041 = vpack.c.bf16 %v1031, %v1021
      %v1042 = vpack.c.bf16 %v1032, %v1022
      %v1043 = vld [vmem:[%s3] sm:$0xff]
      %v1044 = vld [vmem:[%s3 + $0x8] sm:$0xff]
      %v1045 = vld [vmem:[%s3 + $0x10] sm:$0xff]
      %v1046 = vld [vmem:[%s3 + $0x18] sm:$0xff]
      %v1047 = vld [vmem:[%s3 + $0x20] sm:$0xff]
      %v1048 = vld [vmem:[%s3 + $0x28] sm:$0xff]
      %v1049 = vld [vmem:[%s3 + $0x30] sm:$0xff]
      %v1050 = vld [vmem:[%s3 + $0x38] sm:$0xff]
      %v1051 = vld [vmem:[%s3 + $0x40] sm:$0xff]
      %v1052 = vld [vmem:[%s3 + $0x48] sm:$0xff]
      %v1053 = vld [vmem:[%s3 + $0x50] sm:$0xff]
      %v1054 = vld [vmem:[%s3 + $0x58] sm:$0xff]
      %v1055 = vld [vmem:[%s3 + $0x60] sm:$0xff]
      %v1056 = vld [vmem:[%s3 + $0x68] sm:$0xff]
      %v1057 = vld [vmem:[%s3 + $0x70] sm:$0xff]
      %v1058 = vld [vmem:[%s3 + $0x78] sm:$0xff]
      %v1059 = vld [vmem:[%s3 + $0x80] sm:$0xff]
      %v1060 = vld [vmem:[%s3 + $0x88] sm:$0xff]
      %v1061 = vld [vmem:[%s3 + $0x90] sm:$0xff]
      %v1062 = vld [vmem:[%s3 + $0x98] sm:$0xff]
      %v1063 = vld [vmem:[%s3 + $0xa0] sm:$0xff]
      %v1064 = vld [vmem:[%s3 + $0xa8] sm:$0xff]
      %v1065 = vld [vmem:[%s3 + $0xb0] sm:$0xff]
      %v1066 = vld [vmem:[%s3 + $0xb8] sm:$0xff]
      %v1067 = vld [vmem:[%s3 + $0xc0] sm:$0xff]
      %v1068 = vld [vmem:[%s3 + $0xc8] sm:$0xff]
      %v1069 = vld [vmem:[%s3 + $0xd0] sm:$0xff]
      %v1070 = vld [vmem:[%s3 + $0xd8] sm:$0xff]
      %v1071 = vld [vmem:[%s3 + $0xe0] sm:$0xff]
      %v1072 = vld [vmem:[%s3 + $0xe8] sm:$0xff]
      %v1073 = vld [vmem:[%s3 + $0xf0] sm:$0xff]
      %v1074 = vld [vmem:[%s3 + $0xf8] sm:$0xff]
      %v1075 = vld [vmem:[%s3 + $0x100] sm:$0xff]
      %v1076 = vld [vmem:[%s3 + $0x108] sm:$0xff]
      %v1077 = vld [vmem:[%s3 + $0x110] sm:$0xff]
      %v1078 = vld [vmem:[%s3 + $0x118] sm:$0xff]
      %v1079 = vld [vmem:[%s3 + $0x120] sm:$0xff]
      %v1080 = vld [vmem:[%s3 + $0x128] sm:$0xff]
      %v1081 = vld [vmem:[%s3 + $0x130] sm:$0xff]
      %v1082 = vld [vmem:[%s3 + $0x138] sm:$0xff]
      %v1083 = vld [vmem:[%s3 + $0x140] sm:$0xff]
      %v1084 = vld [vmem:[%s3 + $0x148] sm:$0xff]
      %v1085 = vld [vmem:[%s3 + $0x150] sm:$0xff]
      %v1086 = vld [vmem:[%s3 + $0x158] sm:$0xff]
      %v1087 = vld [vmem:[%s3 + $0x160] sm:$0xff]
      %v1088 = vld [vmem:[%s3 + $0x168] sm:$0xff]
      %v1089 = vld [vmem:[%s3 + $0x170] sm:$0xff]
      %v1090 = vld [vmem:[%s3 + $0x178] sm:$0xff]
      %v1091 = vld [vmem:[%s3 + $0x180] sm:$0xff]
      %v1092 = vld [vmem:[%s3 + $0x188] sm:$0xff]
      %v1093 = vld [vmem:[%s3 + $0x190] sm:$0xff]
      %v1094 = vld [vmem:[%s3 + $0x198] sm:$0xff]
      %v1095 = vld [vmem:[%s3 + $0x1a0] sm:$0xff]
      %v1096 = vld [vmem:[%s3 + $0x1a8] sm:$0xff]
      %v1097 = vld [vmem:[%s3 + $0x1b0] sm:$0xff]
      %v1098 = vld [vmem:[%s3 + $0x1b8] sm:$0xff]
      %v1099 = vld [vmem:[%s3 + $0x1c0] sm:$0xff]
      %v1100 = vld [vmem:[%s3 + $0x1c8] sm:$0xff]
      %v1101 = vld [vmem:[%s3 + $0x1d0] sm:$0xff]
      %v1102 = vld [vmem:[%s3 + $0x1d8] sm:$0xff]
      %v1103 = vld [vmem:[%s3 + $0x1e0] sm:$0xff]
      %v1104 = vld [vmem:[%s3 + $0x1e8] sm:$0xff]
      %v1105 = vld [vmem:[%s3 + $0x1f0] sm:$0xff]
      %v1106 = vld [vmem:[%s3 + $0x1f8] sm:$0xff]
      %v1107 = vld [vmem:[%s3 + $0x200] sm:$0xff]
      %v1108 = vld [vmem:[%s3 + $0x208] sm:$0xff]
      %v1109 = vld [vmem:[%s3 + $0x210] sm:$0xff]
      %v1110 = vld [vmem:[%s3 + $0x218] sm:$0xff]
      %v1111 = vld [vmem:[%s3 + $0x220] sm:$0xff]
      %v1112 = vld [vmem:[%s3 + $0x228] sm:$0xff]
      %v1113 = vld [vmem:[%s3 + $0x230] sm:$0xff]
      %v1114 = vld [vmem:[%s3 + $0x238] sm:$0xff]
      %v1115 = vld [vmem:[%s3 + $0x240] sm:$0xff]
      %v1116 = vld [vmem:[%s3 + $0x248] sm:$0xff]
      %v1117 = vld [vmem:[%s3 + $0x250] sm:$0xff]
      %v1118 = vld [vmem:[%s3 + $0x258] sm:$0xff]
      %v1119 = vld [vmem:[%s3 + $0x260] sm:$0xff]
      %v1120 = vld [vmem:[%s3 + $0x268] sm:$0xff]
      %v1121 = vld [vmem:[%s3 + $0x270] sm:$0xff]
      %v1122 = vld [vmem:[%s3 + $0x278] sm:$0xff]
      %v1123 = vld [vmem:[%s3 + $0x280] sm:$0xff]
      %v1124 = vld [vmem:[%s3 + $0x288] sm:$0xff]
      %v1125 = vld [vmem:[%s3 + $0x290] sm:$0xff]
      %v1126 = vld [vmem:[%s3 + $0x298] sm:$0xff]
      %v1127 = vld [vmem:[%s3 + $0x2a0] sm:$0xff]
      %v1128 = vld [vmem:[%s3 + $0x2a8] sm:$0xff]
      %v1129 = vld [vmem:[%s3 + $0x2b0] sm:$0xff]
      %v1130 = vld [vmem:[%s3 + $0x2b8] sm:$0xff]
      %v1131 = vld [vmem:[%s3 + $0x2c0] sm:$0xff]
      %v1132 = vld [vmem:[%s3 + $0x2c8] sm:$0xff]
      %v1133 = vld [vmem:[%s3 + $0x2d0] sm:$0xff]
      %v1134 = vld [vmem:[%s3 + $0x2d8] sm:$0xff]
      %v1135 = vld [vmem:[%s3 + $0x2e0] sm:$0xff]
      %v1136 = vld [vmem:[%s3 + $0x2e8] sm:$0xff]
      %v1137 = vld [vmem:[%s3 + $0x2f0] sm:$0xff]
      %v1138 = vld [vmem:[%s3 + $0x2f8] sm:$0xff]
      %v1139 = vld [vmem:[%s3 + $0x300] sm:$0xff]
      %v1140 = vld [vmem:[%s3 + $0x308] sm:$0xff]
      %v1141 = vld [vmem:[%s3 + $0x310] sm:$0xff]
      %v1142 = vld [vmem:[%s3 + $0x318] sm:$0xff]
      %v1143 = vld [vmem:[%s3 + $0x320] sm:$0xff]
      %v1144 = vld [vmem:[%s3 + $0x328] sm:$0xff]
      %v1145 = vld [vmem:[%s3 + $0x330] sm:$0xff]
      %v1146 = vld [vmem:[%s3 + $0x338] sm:$0xff]
      %v1147 = vld [vmem:[%s3 + $0x340] sm:$0xff]
      %v1148 = vld [vmem:[%s3 + $0x348] sm:$0xff]
      %v1149 = vld [vmem:[%s3 + $0x350] sm:$0xff]
      %v1150 = vld [vmem:[%s3 + $0x358] sm:$0xff]
      %v1151 = vld [vmem:[%s3 + $0x360] sm:$0xff]
      %v1152 = vld [vmem:[%s3 + $0x368] sm:$0xff]
      %v1153 = vld [vmem:[%s3 + $0x370] sm:$0xff]
      %v1154 = vld [vmem:[%s3 + $0x378] sm:$0xff]
      %v1155 = vld [vmem:[%s3 + $0x380] sm:$0xff]
      %v1156 = vld [vmem:[%s3 + $0x388] sm:$0xff]
      %v1157 = vld [vmem:[%s3 + $0x390] sm:$0xff]
      %v1158 = vld [vmem:[%s3 + $0x398] sm:$0xff]
      %v1159 = vld [vmem:[%s3 + $0x3a0] sm:$0xff]
      %v1160 = vld [vmem:[%s3 + $0x3a8] sm:$0xff]
      %v1161 = vld [vmem:[%s3 + $0x3b0] sm:$0xff]
      %v1162 = vld [vmem:[%s3 + $0x3b8] sm:$0xff]
      %v1163 = vld [vmem:[%s3 + $0x3c0] sm:$0xff]
      %v1164 = vld [vmem:[%s3 + $0x3c8] sm:$0xff]
      %v1165 = vld [vmem:[%s3 + $0x3d0] sm:$0xff]
      %v1166 = vld [vmem:[%s3 + $0x3d8] sm:$0xff]
      %v1167 = vld [vmem:[%s3 + $0x3e0] sm:$0xff]
      %v1168 = vld [vmem:[%s3 + $0x3e8] sm:$0xff]
      %v1169 = vld [vmem:[%s3 + $0x3f0] sm:$0xff]
      %v1170 = vld [vmem:[%s3 + $0x3f8] sm:$0xff]
      %v1171 = vld [vmem:[%s3 + $0x400] sm:$0xff]
      %v1172 = vld [vmem:[%s3 + $0x408] sm:$0xff]
      %v1173 = vld [vmem:[%s3 + $0x410] sm:$0xff]
      %v1174 = vld [vmem:[%s3 + $0x418] sm:$0xff]
      %v1175 = vld [vmem:[%s3 + $0x420] sm:$0xff]
      %v1176 = vld [vmem:[%s3 + $0x428] sm:$0xff]
      %v1177 = vld [vmem:[%s3 + $0x430] sm:$0xff]
      %v1178 = vld [vmem:[%s3 + $0x438] sm:$0xff]
      %v1179 = vld [vmem:[%s3 + $0x440] sm:$0xff]
      %v1180 = vld [vmem:[%s3 + $0x448] sm:$0xff]
      %v1181 = vld [vmem:[%s3 + $0x450] sm:$0xff]
      %v1182 = vld [vmem:[%s3 + $0x458] sm:$0xff]
      %v1183 = vld [vmem:[%s3 + $0x460] sm:$0xff]
      %v1184 = vld [vmem:[%s3 + $0x468] sm:$0xff]
      %v1185 = vld [vmem:[%s3 + $0x470] sm:$0xff]
      %v1186 = vld [vmem:[%s3 + $0x478] sm:$0xff]
      %v1187 = vld [vmem:[%s3 + $0x480] sm:$0xff]
      %v1188 = vld [vmem:[%s3 + $0x488] sm:$0xff]
      %v1189 = vld [vmem:[%s3 + $0x490] sm:$0xff]
      %v1190 = vld [vmem:[%s3 + $0x498] sm:$0xff]
      %v1191 = vld [vmem:[%s3 + $0x4a0] sm:$0xff]
      %v1192 = vld [vmem:[%s3 + $0x4a8] sm:$0xff]
      %v1193 = vld [vmem:[%s3 + $0x4b0] sm:$0xff]
      %v1194 = vld [vmem:[%s3 + $0x4b8] sm:$0xff]
      %v1195 = vld [vmem:[%s3 + $0x4c0] sm:$0xff]
      %v1196 = vld [vmem:[%s3 + $0x4c8] sm:$0xff]
      %v1197 = vld [vmem:[%s3 + $0x4d0] sm:$0xff]
      %v1198 = vld [vmem:[%s3 + $0x4d8] sm:$0xff]
      %v1199 = vld [vmem:[%s3 + $0x4e0] sm:$0xff]
      %v1200 = vld [vmem:[%s3 + $0x4e8] sm:$0xff]
      %v1201 = vld [vmem:[%s3 + $0x4f0] sm:$0xff]
      %v1202 = vld [vmem:[%s3 + $0x4f8] sm:$0xff]
      %v1203 = vld [vmem:[%s3 + $0x500] sm:$0xff]
      %v1204 = vld [vmem:[%s3 + $0x508] sm:$0xff]
      %v1205 = vld [vmem:[%s3 + $0x510] sm:$0xff]
      %v1206 = vld [vmem:[%s3 + $0x518] sm:$0xff]
      %v1207 = vld [vmem:[%s3 + $0x520] sm:$0xff]
      %v1208 = vld [vmem:[%s3 + $0x528] sm:$0xff]
      %v1209 = vld [vmem:[%s3 + $0x530] sm:$0xff]
      %v1210 = vld [vmem:[%s3 + $0x538] sm:$0xff]
      %v1211 = vld [vmem:[%s3 + $0x540] sm:$0xff]
      %v1212 = vld [vmem:[%s3 + $0x548] sm:$0xff]
      %v1213 = vld [vmem:[%s3 + $0x550] sm:$0xff]
      %v1214 = vld [vmem:[%s3 + $0x558] sm:$0xff]
      %v1215 = vld [vmem:[%s3 + $0x560] sm:$0xff]
      %v1216 = vld [vmem:[%s3 + $0x568] sm:$0xff]
      %v1217 = vld [vmem:[%s3 + $0x570] sm:$0xff]
      %v1218 = vld [vmem:[%s3 + $0x578] sm:$0xff]
      %v1219 = vld [vmem:[%s3 + $0x580] sm:$0xff]
      %v1220 = vld [vmem:[%s3 + $0x588] sm:$0xff]
      %v1221 = vld [vmem:[%s3 + $0x590] sm:$0xff]
      %v1222 = vld [vmem:[%s3 + $0x598] sm:$0xff]
      %v1223 = vld [vmem:[%s3 + $0x5a0] sm:$0xff]
      %v1224 = vld [vmem:[%s3 + $0x5a8] sm:$0xff]
      %v1225 = vld [vmem:[%s3 + $0x5b0] sm:$0xff]
      %v1226 = vld [vmem:[%s3 + $0x5b8] sm:$0xff]
      %v1227 = vld [vmem:[%s3 + $0x5c0] sm:$0xff]
      %v1228 = vld [vmem:[%s3 + $0x5c8] sm:$0xff]
      %v1229 = vld [vmem:[%s3 + $0x5d0] sm:$0xff]
      %v1230 = vld [vmem:[%s3 + $0x5d8] sm:$0xff]
      %v1231 = vld [vmem:[%s3 + $0x5e0] sm:$0xff]
      %v1232 = vld [vmem:[%s3 + $0x5e8] sm:$0xff]
      %v1233 = vld [vmem:[%s3 + $0x5f0] sm:$0xff]
      %v1234 = vld [vmem:[%s3 + $0x5f8] sm:$0xff]
      %v1235 = vld [vmem:[%s3 + $0x600] sm:$0xff]
      %v1236 = vld [vmem:[%s3 + $0x608] sm:$0xff]
      %v1237 = vld [vmem:[%s3 + $0x610] sm:$0xff]
      %v1238 = vld [vmem:[%s3 + $0x618] sm:$0xff]
      %v1239 = vld [vmem:[%s3 + $0x620] sm:$0xff]
      %v1240 = vld [vmem:[%s3 + $0x628] sm:$0xff]
      %v1241 = vld [vmem:[%s3 + $0x630] sm:$0xff]
      %v1242 = vld [vmem:[%s3 + $0x638] sm:$0xff]
      %v1243 = vld [vmem:[%s3 + $0x640] sm:$0xff]
      %v1244 = vld [vmem:[%s3 + $0x648] sm:$0xff]
      %v1245 = vld [vmem:[%s3 + $0x650] sm:$0xff]
      %v1246 = vld [vmem:[%s3 + $0x658] sm:$0xff]
      %v1247 = vld [vmem:[%s3 + $0x660] sm:$0xff]
      %v1248 = vld [vmem:[%s3 + $0x668] sm:$0xff]
      %v1249 = vld [vmem:[%s3 + $0x670] sm:$0xff]
      %v1250 = vld [vmem:[%s3 + $0x678] sm:$0xff]
      %v1251 = vld [vmem:[%s3 + $0x680] sm:$0xff]
      %v1252 = vld [vmem:[%s3 + $0x688] sm:$0xff]
      %v1253 = vld [vmem:[%s3 + $0x690] sm:$0xff]
      %v1254 = vld [vmem:[%s3 + $0x698] sm:$0xff]
      %v1255 = vld [vmem:[%s3 + $0x6a0] sm:$0xff]
      %v1256 = vld [vmem:[%s3 + $0x6a8] sm:$0xff]
      %v1257 = vld [vmem:[%s3 + $0x6b0] sm:$0xff]
      %v1258 = vld [vmem:[%s3 + $0x6b8] sm:$0xff]
      %v1259 = vld [vmem:[%s3 + $0x6c0] sm:$0xff]
      %v1260 = vld [vmem:[%s3 + $0x6c8] sm:$0xff]
      %v1261 = vld [vmem:[%s3 + $0x6d0] sm:$0xff]
      %v1262 = vld [vmem:[%s3 + $0x6d8] sm:$0xff]
      %v1263 = vld [vmem:[%s3 + $0x6e0] sm:$0xff]
      %v1264 = vld [vmem:[%s3 + $0x6e8] sm:$0xff]
      %v1265 = vld [vmem:[%s3 + $0x6f0] sm:$0xff]
      %v1266 = vld [vmem:[%s3 + $0x6f8] sm:$0xff]
      %v1267 = vld [vmem:[%s3 + $0x700] sm:$0xff]
      %v1268 = vld [vmem:[%s3 + $0x708] sm:$0xff]
      %v1269 = vld [vmem:[%s3 + $0x710] sm:$0xff]
      %v1270 = vld [vmem:[%s3 + $0x718] sm:$0xff]
      %v1271 = vld [vmem:[%s3 + $0x720] sm:$0xff]
      %v1272 = vld [vmem:[%s3 + $0x728] sm:$0xff]
      %v1273 = vld [vmem:[%s3 + $0x730] sm:$0xff]
      %v1274 = vld [vmem:[%s3 + $0x738] sm:$0xff]
      %v1275 = vld [vmem:[%s3 + $0x740] sm:$0xff]
      %v1276 = vld [vmem:[%s3 + $0x748] sm:$0xff]
      %v1277 = vld [vmem:[%s3 + $0x750] sm:$0xff]
      %v1278 = vld [vmem:[%s3 + $0x758] sm:$0xff]
      %v1279 = vld [vmem:[%s3 + $0x760] sm:$0xff]
      %v1280 = vld [vmem:[%s3 + $0x768] sm:$0xff]
      %v1281 = vld [vmem:[%s3 + $0x770] sm:$0xff]
      %v1282 = vld [vmem:[%s3 + $0x778] sm:$0xff]
      %v1283 = vld [vmem:[%s3 + $0x780] sm:$0xff]
      %v1284 = vld [vmem:[%s3 + $0x788] sm:$0xff]
      %v1285 = vld [vmem:[%s3 + $0x790] sm:$0xff]
      %v1286 = vld [vmem:[%s3 + $0x798] sm:$0xff]
      %v1287 = vld [vmem:[%s3 + $0x7a0] sm:$0xff]
      %v1288 = vld [vmem:[%s3 + $0x7a8] sm:$0xff]
      %v1289 = vld [vmem:[%s3 + $0x7b0] sm:$0xff]
      %v1290 = vld [vmem:[%s3 + $0x7b8] sm:$0xff]
      %v1291 = vld [vmem:[%s3 + $0x7c0] sm:$0xff]
      %v1292 = vld [vmem:[%s3 + $0x7c8] sm:$0xff]
      %v1293 = vld [vmem:[%s3 + $0x7d0] sm:$0xff]
      %v1294 = vld [vmem:[%s3 + $0x7d8] sm:$0xff]
      %v1295 = vld [vmem:[%s3 + $0x7e0] sm:$0xff]
      %v1296 = vld [vmem:[%s3 + $0x7e8] sm:$0xff]
      %v1297 = vld [vmem:[%s3 + $0x7f0] sm:$0xff]
      %v1298 = vld [vmem:[%s3 + $0x7f8] sm:$0xff]
      %v1299 = vld [vmem:[%s3 + $0x800] sm:$0xff]
      %v1300 = vld [vmem:[%s3 + $0x808] sm:$0xff]
      %v1301 = vld [vmem:[%s3 + $0x810] sm:$0xff]
      %v1302 = vld [vmem:[%s3 + $0x818] sm:$0xff]
      %v1303 = vld [vmem:[%s3 + $0x820] sm:$0xff]
      %v1304 = vld [vmem:[%s3 + $0x828] sm:$0xff]
      %v1305 = vld [vmem:[%s3 + $0x830] sm:$0xff]
      %v1306 = vld [vmem:[%s3 + $0x838] sm:$0xff]
      %v1307 = vld [vmem:[%s3 + $0x840] sm:$0xff]
      %v1308 = vld [vmem:[%s3 + $0x848] sm:$0xff]
      %v1309 = vld [vmem:[%s3 + $0x850] sm:$0xff]
      %v1310 = vld [vmem:[%s3 + $0x858] sm:$0xff]
      %v1311 = vld [vmem:[%s3 + $0x860] sm:$0xff]
      %v1312 = vld [vmem:[%s3 + $0x868] sm:$0xff]
      %v1313 = vld [vmem:[%s3 + $0x870] sm:$0xff]
      %v1314 = vld [vmem:[%s3 + $0x878] sm:$0xff]
      %v1315 = vld [vmem:[%s3 + $0x880] sm:$0xff]
      %v1316 = vld [vmem:[%s3 + $0x888] sm:$0xff]
      %v1317 = vld [vmem:[%s3 + $0x890] sm:$0xff]
      %v1318 = vld [vmem:[%s3 + $0x898] sm:$0xff]
      %v1319 = vld [vmem:[%s3 + $0x8a0] sm:$0xff]
      %v1320 = vld [vmem:[%s3 + $0x8a8] sm:$0xff]
      %v1321 = vld [vmem:[%s3 + $0x8b0] sm:$0xff]
      %v1322 = vld [vmem:[%s3 + $0x8b8] sm:$0xff]
      %v1323 = vld [vmem:[%s3 + $0x8c0] sm:$0xff]
      %v1324 = vld [vmem:[%s3 + $0x8c8] sm:$0xff]
      %v1325 = vld [vmem:[%s3 + $0x8d0] sm:$0xff]
      %v1326 = vld [vmem:[%s3 + $0x8d8] sm:$0xff]
      %v1327 = vld [vmem:[%s3 + $0x8e0] sm:$0xff]
      %v1328 = vld [vmem:[%s3 + $0x8e8] sm:$0xff]
      %v1329 = vld [vmem:[%s3 + $0x8f0] sm:$0xff]
      %v1330 = vld [vmem:[%s3 + $0x8f8] sm:$0xff]
      %v1331 = vld [vmem:[%s3 + $0x900] sm:$0xff]
      %v1332 = vld [vmem:[%s3 + $0x908] sm:$0xff]
      %v1333 = vld [vmem:[%s3 + $0x910] sm:$0xff]
      %v1334 = vld [vmem:[%s3 + $0x918] sm:$0xff]
      %v1335 = vld [vmem:[%s3 + $0x920] sm:$0xff]
      %v1336 = vld [vmem:[%s3 + $0x928] sm:$0xff]
      %v1337 = vld [vmem:[%s3 + $0x930] sm:$0xff]
      %v1338 = vld [vmem:[%s3 + $0x938] sm:$0xff]
      %v1339 = vld [vmem:[%s3 + $0x940] sm:$0xff]
      %v1340 = vld [vmem:[%s3 + $0x948] sm:$0xff]
      %v1341 = vld [vmem:[%s3 + $0x950] sm:$0xff]
      %v1342 = vld [vmem:[%s3 + $0x958] sm:$0xff]
      %v1343 = vld [vmem:[%s3 + $0x960] sm:$0xff]
      %v1344 = vld [vmem:[%s3 + $0x968] sm:$0xff]
      %v1345 = vld [vmem:[%s3 + $0x970] sm:$0xff]
      %v1346 = vld [vmem:[%s3 + $0x978] sm:$0xff]
      %v1347 = vld [vmem:[%s3 + $0x980] sm:$0xff]
      %v1348 = vld [vmem:[%s3 + $0x988] sm:$0xff]
      %v1349 = vld [vmem:[%s3 + $0x990] sm:$0xff]
      %v1350 = vld [vmem:[%s3 + $0x998] sm:$0xff]
      %v1351 = vld [vmem:[%s3 + $0x9a0] sm:$0xff]
      %v1352 = vld [vmem:[%s3 + $0x9a8] sm:$0xff]
      %v1353 = vld [vmem:[%s3 + $0x9b0] sm:$0xff]
      %v1354 = vld [vmem:[%s3 + $0x9b8] sm:$0xff]
      %v1355 = vld [vmem:[%s3 + $0x9c0] sm:$0xff]
      %v1356 = vld [vmem:[%s3 + $0x9c8] sm:$0xff]
      %v1357 = vld [vmem:[%s3 + $0x9d0] sm:$0xff]
      %v1358 = vld [vmem:[%s3 + $0x9d8] sm:$0xff]
      %v1359 = vld [vmem:[%s3 + $0x9e0] sm:$0xff]
      %v1360 = vld [vmem:[%s3 + $0x9e8] sm:$0xff]
      %v1361 = vld [vmem:[%s3 + $0x9f0] sm:$0xff]
      %v1362 = vld [vmem:[%s3 + $0x9f8] sm:$0xff]
      %v1683 = vunpack.c.l.b16 %v1043
      %v1684 = vunpack.c.h.b16 %v1043
      %v1685 = vunpack.c.l.b16 %v1044
      %v1686 = vunpack.c.h.b16 %v1044
      %v1687 = vunpack.c.l.b16 %v1045
      %v1688 = vunpack.c.h.b16 %v1045
      %v1689 = vunpack.c.l.b16 %v1046
      %v1690 = vunpack.c.h.b16 %v1046
      %v1691 = vunpack.c.l.b16 %v1047
      %v1692 = vunpack.c.h.b16 %v1047
      %v1693 = vunpack.c.l.b16 %v1048
      %v1694 = vunpack.c.h.b16 %v1048
      %v1695 = vunpack.c.l.b16 %v1049
      %v1696 = vunpack.c.h.b16 %v1049
      %v1697 = vunpack.c.l.b16 %v1050
      %v1698 = vunpack.c.h.b16 %v1050
      %v1699 = vunpack.c.l.b16 %v1051
      %v1700 = vunpack.c.h.b16 %v1051
      %v1701 = vunpack.c.l.b16 %v1052
      %v1702 = vunpack.c.h.b16 %v1052
      %v1703 = vunpack.c.l.b16 %v1053
      %v1704 = vunpack.c.h.b16 %v1053
      %v1705 = vunpack.c.l.b16 %v1054
      %v1706 = vunpack.c.h.b16 %v1054
      %v1707 = vunpack.c.l.b16 %v1055
      %v1708 = vunpack.c.h.b16 %v1055
      %v1709 = vunpack.c.l.b16 %v1056
      %v1710 = vunpack.c.h.b16 %v1056
      %v1711 = vunpack.c.l.b16 %v1057
      %v1712 = vunpack.c.h.b16 %v1057
      %v1713 = vunpack.c.l.b16 %v1058
      %v1714 = vunpack.c.h.b16 %v1058
      %v1715 = vunpack.c.l.b16 %v1059
      %v1716 = vunpack.c.h.b16 %v1059
      %v1717 = vunpack.c.l.b16 %v1060
      %v1718 = vunpack.c.h.b16 %v1060
      %v1719 = vunpack.c.l.b16 %v1061
      %v1720 = vunpack.c.h.b16 %v1061
      %v1721 = vunpack.c.l.b16 %v1062
      %v1722 = vunpack.c.h.b16 %v1062
      %v1723 = vunpack.c.l.b16 %v1063
      %v1724 = vunpack.c.h.b16 %v1063
      %v1725 = vunpack.c.l.b16 %v1064
      %v1726 = vunpack.c.h.b16 %v1064
      %v1727 = vunpack.c.l.b16 %v1065
      %v1728 = vunpack.c.h.b16 %v1065
      %v1729 = vunpack.c.l.b16 %v1066
      %v1730 = vunpack.c.h.b16 %v1066
      %v1731 = vunpack.c.l.b16 %v1067
      %v1732 = vunpack.c.h.b16 %v1067
      %v1733 = vunpack.c.l.b16 %v1068
      %v1734 = vunpack.c.h.b16 %v1068
      %v1735 = vunpack.c.l.b16 %v1069
      %v1736 = vunpack.c.h.b16 %v1069
      %v1737 = vunpack.c.l.b16 %v1070
      %v1738 = vunpack.c.h.b16 %v1070
      %v1739 = vunpack.c.l.b16 %v1071
      %v1740 = vunpack.c.h.b16 %v1071
      %v1741 = vunpack.c.l.b16 %v1072
      %v1742 = vunpack.c.h.b16 %v1072
      %v1743 = vunpack.c.l.b16 %v1073
      %v1744 = vunpack.c.h.b16 %v1073
      %v1745 = vunpack.c.l.b16 %v1074
      %v1746 = vunpack.c.h.b16 %v1074
      %v1747 = vunpack.c.l.b16 %v1075
      %v1748 = vunpack.c.h.b16 %v1075
      %v1749 = vunpack.c.l.b16 %v1076
      %v1750 = vunpack.c.h.b16 %v1076
      %v1751 = vunpack.c.l.b16 %v1077
      %v1752 = vunpack.c.h.b16 %v1077
      %v1753 = vunpack.c.l.b16 %v1078
      %v1754 = vunpack.c.h.b16 %v1078
      %v1755 = vunpack.c.l.b16 %v1079
      %v1756 = vunpack.c.h.b16 %v1079
      %v1757 = vunpack.c.l.b16 %v1080
      %v1758 = vunpack.c.h.b16 %v1080
      %v1759 = vunpack.c.l.b16 %v1081
      %v1760 = vunpack.c.h.b16 %v1081
      %v1761 = vunpack.c.l.b16 %v1082
      %v1762 = vunpack.c.h.b16 %v1082
      %v1763 = vunpack.c.l.b16 %v1083
      %v1764 = vunpack.c.h.b16 %v1083
      %v1765 = vunpack.c.l.b16 %v1084
      %v1766 = vunpack.c.h.b16 %v1084
      %v1767 = vunpack.c.l.b16 %v1085
      %v1768 = vunpack.c.h.b16 %v1085
      %v1769 = vunpack.c.l.b16 %v1086
      %v1770 = vunpack.c.h.b16 %v1086
      %v1771 = vunpack.c.l.b16 %v1087
      %v1772 = vunpack.c.h.b16 %v1087
      %v1773 = vunpack.c.l.b16 %v1088
      %v1774 = vunpack.c.h.b16 %v1088
      %v1775 = vunpack.c.l.b16 %v1089
      %v1776 = vunpack.c.h.b16 %v1089
      %v1777 = vunpack.c.l.b16 %v1090
      %v1778 = vunpack.c.h.b16 %v1090
      %v1779 = vunpack.c.l.b16 %v1091
      %v1780 = vunpack.c.h.b16 %v1091
      %v1781 = vunpack.c.l.b16 %v1092
      %v1782 = vunpack.c.h.b16 %v1092
      %v1783 = vunpack.c.l.b16 %v1093
      %v1784 = vunpack.c.h.b16 %v1093
      %v1785 = vunpack.c.l.b16 %v1094
      %v1786 = vunpack.c.h.b16 %v1094
      %v1787 = vunpack.c.l.b16 %v1095
      %v1788 = vunpack.c.h.b16 %v1095
      %v1789 = vunpack.c.l.b16 %v1096
      %v1790 = vunpack.c.h.b16 %v1096
      %v1791 = vunpack.c.l.b16 %v1097
      %v1792 = vunpack.c.h.b16 %v1097
      %v1793 = vunpack.c.l.b16 %v1098
      %v1794 = vunpack.c.h.b16 %v1098
      %v1795 = vunpack.c.l.b16 %v1099
      %v1796 = vunpack.c.h.b16 %v1099
      %v1797 = vunpack.c.l.b16 %v1100
      %v1798 = vunpack.c.h.b16 %v1100
      %v1799 = vunpack.c.l.b16 %v1101
      %v1800 = vunpack.c.h.b16 %v1101
      %v1801 = vunpack.c.l.b16 %v1102
      %v1802 = vunpack.c.h.b16 %v1102
      %v1803 = vunpack.c.l.b16 %v1103
      %v1804 = vunpack.c.h.b16 %v1103
      %v1805 = vunpack.c.l.b16 %v1104
      %v1806 = vunpack.c.h.b16 %v1104
      %v1807 = vunpack.c.l.b16 %v1105
      %v1808 = vunpack.c.h.b16 %v1105
      %v1809 = vunpack.c.l.b16 %v1106
      %v1810 = vunpack.c.h.b16 %v1106
      %v1811 = vunpack.c.l.b16 %v1107
      %v1812 = vunpack.c.h.b16 %v1107
      %v1813 = vunpack.c.l.b16 %v1108
      %v1814 = vunpack.c.h.b16 %v1108
      %v1815 = vunpack.c.l.b16 %v1109
      %v1816 = vunpack.c.h.b16 %v1109
      %v1817 = vunpack.c.l.b16 %v1110
      %v1818 = vunpack.c.h.b16 %v1110
      %v1819 = vunpack.c.l.b16 %v1111
      %v1820 = vunpack.c.h.b16 %v1111
      %v1821 = vunpack.c.l.b16 %v1112
      %v1822 = vunpack.c.h.b16 %v1112
      %v1823 = vunpack.c.l.b16 %v1113
      %v1824 = vunpack.c.h.b16 %v1113
      %v1825 = vunpack.c.l.b16 %v1114
      %v1826 = vunpack.c.h.b16 %v1114
      %v1827 = vunpack.c.l.b16 %v1115
      %v1828 = vunpack.c.h.b16 %v1115
      %v1829 = vunpack.c.l.b16 %v1116
      %v1830 = vunpack.c.h.b16 %v1116
      %v1831 = vunpack.c.l.b16 %v1117
      %v1832 = vunpack.c.h.b16 %v1117
      %v1833 = vunpack.c.l.b16 %v1118
      %v1834 = vunpack.c.h.b16 %v1118
      %v1835 = vunpack.c.l.b16 %v1119
      %v1836 = vunpack.c.h.b16 %v1119
      %v1837 = vunpack.c.l.b16 %v1120
      %v1838 = vunpack.c.h.b16 %v1120
      %v1839 = vunpack.c.l.b16 %v1121
      %v1840 = vunpack.c.h.b16 %v1121
      %v1841 = vunpack.c.l.b16 %v1122
      %v1842 = vunpack.c.h.b16 %v1122
      %v1843 = vunpack.c.l.b16 %v1123
      %v1844 = vunpack.c.h.b16 %v1123
      %v1845 = vunpack.c.l.b16 %v1124
      %v1846 = vunpack.c.h.b16 %v1124
      %v1847 = vunpack.c.l.b16 %v1125
      %v1848 = vunpack.c.h.b16 %v1125
      %v1849 = vunpack.c.l.b16 %v1126
      %v1850 = vunpack.c.h.b16 %v1126
      %v1851 = vunpack.c.l.b16 %v1127
      %v1852 = vunpack.c.h.b16 %v1127
      %v1853 = vunpack.c.l.b16 %v1128
      %v1854 = vunpack.c.h.b16 %v1128
      %v1855 = vunpack.c.l.b16 %v1129
      %v1856 = vunpack.c.h.b16 %v1129
      %v1857 = vunpack.c.l.b16 %v1130
      %v1858 = vunpack.c.h.b16 %v1130
      %v1859 = vunpack.c.l.b16 %v1131
      %v1860 = vunpack.c.h.b16 %v1131
      %v1861 = vunpack.c.l.b16 %v1132
      %v1862 = vunpack.c.h.b16 %v1132
      %v1863 = vunpack.c.l.b16 %v1133
      %v1864 = vunpack.c.h.b16 %v1133
      %v1865 = vunpack.c.l.b16 %v1134
      %v1866 = vunpack.c.h.b16 %v1134
      %v1867 = vunpack.c.l.b16 %v1135
      %v1868 = vunpack.c.h.b16 %v1135
      %v1869 = vunpack.c.l.b16 %v1136
      %v1870 = vunpack.c.h.b16 %v1136
      %v1871 = vunpack.c.l.b16 %v1137
      %v1872 = vunpack.c.h.b16 %v1137
      %v1873 = vunpack.c.l.b16 %v1138
      %v1874 = vunpack.c.h.b16 %v1138
      %v1875 = vunpack.c.l.b16 %v1139
      %v1876 = vunpack.c.h.b16 %v1139
      %v1877 = vunpack.c.l.b16 %v1140
      %v1878 = vunpack.c.h.b16 %v1140
      %v1879 = vunpack.c.l.b16 %v1141
      %v1880 = vunpack.c.h.b16 %v1141
      %v1881 = vunpack.c.l.b16 %v1142
      %v1882 = vunpack.c.h.b16 %v1142
      %v1883 = vunpack.c.l.b16 %v1143
      %v1884 = vunpack.c.h.b16 %v1143
      %v1885 = vunpack.c.l.b16 %v1144
      %v1886 = vunpack.c.h.b16 %v1144
      %v1887 = vunpack.c.l.b16 %v1145
      %v1888 = vunpack.c.h.b16 %v1145
      %v1889 = vunpack.c.l.b16 %v1146
      %v1890 = vunpack.c.h.b16 %v1146
      %v1891 = vunpack.c.l.b16 %v1147
      %v1892 = vunpack.c.h.b16 %v1147
      %v1893 = vunpack.c.l.b16 %v1148
      %v1894 = vunpack.c.h.b16 %v1148
      %v1895 = vunpack.c.l.b16 %v1149
      %v1896 = vunpack.c.h.b16 %v1149
      %v1897 = vunpack.c.l.b16 %v1150
      %v1898 = vunpack.c.h.b16 %v1150
      %v1899 = vunpack.c.l.b16 %v1151
      %v1900 = vunpack.c.h.b16 %v1151
      %v1901 = vunpack.c.l.b16 %v1152
      %v1902 = vunpack.c.h.b16 %v1152
      %v1903 = vunpack.c.l.b16 %v1153
      %v1904 = vunpack.c.h.b16 %v1153
      %v1905 = vunpack.c.l.b16 %v1154
      %v1906 = vunpack.c.h.b16 %v1154
      %v1907 = vunpack.c.l.b16 %v1155
      %v1908 = vunpack.c.h.b16 %v1155
      %v1909 = vunpack.c.l.b16 %v1156
      %v1910 = vunpack.c.h.b16 %v1156
      %v1911 = vunpack.c.l.b16 %v1157
      %v1912 = vunpack.c.h.b16 %v1157
      %v1913 = vunpack.c.l.b16 %v1158
      %v1914 = vunpack.c.h.b16 %v1158
      %v1915 = vunpack.c.l.b16 %v1159
      %v1916 = vunpack.c.h.b16 %v1159
      %v1917 = vunpack.c.l.b16 %v1160
      %v1918 = vunpack.c.h.b16 %v1160
      %v1919 = vunpack.c.l.b16 %v1161
      %v1920 = vunpack.c.h.b16 %v1161
      %v1921 = vunpack.c.l.b16 %v1162
      %v1922 = vunpack.c.h.b16 %v1162
      %v1923 = vunpack.c.l.b16 %v1163
      %v1924 = vunpack.c.h.b16 %v1163
      %v1925 = vunpack.c.l.b16 %v1164
      %v1926 = vunpack.c.h.b16 %v1164
      %v1927 = vunpack.c.l.b16 %v1165
      %v1928 = vunpack.c.h.b16 %v1165
      %v1929 = vunpack.c.l.b16 %v1166
      %v1930 = vunpack.c.h.b16 %v1166
      %v1931 = vunpack.c.l.b16 %v1167
      %v1932 = vunpack.c.h.b16 %v1167
      %v1933 = vunpack.c.l.b16 %v1168
      %v1934 = vunpack.c.h.b16 %v1168
      %v1935 = vunpack.c.l.b16 %v1169
      %v1936 = vunpack.c.h.b16 %v1169
      %v1937 = vunpack.c.l.b16 %v1170
      %v1938 = vunpack.c.h.b16 %v1170
      %v1939 = vunpack.c.l.b16 %v1171
      %v1940 = vunpack.c.h.b16 %v1171
      %v1941 = vunpack.c.l.b16 %v1172
      %v1942 = vunpack.c.h.b16 %v1172
      %v1943 = vunpack.c.l.b16 %v1173
      %v1944 = vunpack.c.h.b16 %v1173
      %v1945 = vunpack.c.l.b16 %v1174
      %v1946 = vunpack.c.h.b16 %v1174
      %v1947 = vunpack.c.l.b16 %v1175
      %v1948 = vunpack.c.h.b16 %v1175
      %v1949 = vunpack.c.l.b16 %v1176
      %v1950 = vunpack.c.h.b16 %v1176
      %v1951 = vunpack.c.l.b16 %v1177
      %v1952 = vunpack.c.h.b16 %v1177
      %v1953 = vunpack.c.l.b16 %v1178
      %v1954 = vunpack.c.h.b16 %v1178
      %v1955 = vunpack.c.l.b16 %v1179
      %v1956 = vunpack.c.h.b16 %v1179
      %v1957 = vunpack.c.l.b16 %v1180
      %v1958 = vunpack.c.h.b16 %v1180
      %v1959 = vunpack.c.l.b16 %v1181
      %v1960 = vunpack.c.h.b16 %v1181
      %v1961 = vunpack.c.l.b16 %v1182
      %v1962 = vunpack.c.h.b16 %v1182
      %v1963 = vunpack.c.l.b16 %v1183
      %v1964 = vunpack.c.h.b16 %v1183
      %v1965 = vunpack.c.l.b16 %v1184
      %v1966 = vunpack.c.h.b16 %v1184
      %v1967 = vunpack.c.l.b16 %v1185
      %v1968 = vunpack.c.h.b16 %v1185
      %v1969 = vunpack.c.l.b16 %v1186
      %v1970 = vunpack.c.h.b16 %v1186
      %v1971 = vunpack.c.l.b16 %v1187
      %v1972 = vunpack.c.h.b16 %v1187
      %v1973 = vunpack.c.l.b16 %v1188
      %v1974 = vunpack.c.h.b16 %v1188
      %v1975 = vunpack.c.l.b16 %v1189
      %v1976 = vunpack.c.h.b16 %v1189
      %v1977 = vunpack.c.l.b16 %v1190
      %v1978 = vunpack.c.h.b16 %v1190
      %v1979 = vunpack.c.l.b16 %v1191
      %v1980 = vunpack.c.h.b16 %v1191
      %v1981 = vunpack.c.l.b16 %v1192
      %v1982 = vunpack.c.h.b16 %v1192
      %v1983 = vunpack.c.l.b16 %v1193
      %v1984 = vunpack.c.h.b16 %v1193
      %v1985 = vunpack.c.l.b16 %v1194
      %v1986 = vunpack.c.h.b16 %v1194
      %v1987 = vunpack.c.l.b16 %v1195
      %v1988 = vunpack.c.h.b16 %v1195
      %v1989 = vunpack.c.l.b16 %v1196
      %v1990 = vunpack.c.h.b16 %v1196
      %v1991 = vunpack.c.l.b16 %v1197
      %v1992 = vunpack.c.h.b16 %v1197
      %v1993 = vunpack.c.l.b16 %v1198
      %v1994 = vunpack.c.h.b16 %v1198
      %v1995 = vunpack.c.l.b16 %v1199
      %v1996 = vunpack.c.h.b16 %v1199
      %v1997 = vunpack.c.l.b16 %v1200
      %v1998 = vunpack.c.h.b16 %v1200
      %v1999 = vunpack.c.l.b16 %v1201
      %v2000 = vunpack.c.h.b16 %v1201
      %v2001 = vunpack.c.l.b16 %v1202
      %v2002 = vunpack.c.h.b16 %v1202
      %v2003 = vunpack.c.l.b16 %v1203
      %v2004 = vunpack.c.h.b16 %v1203
      %v2005 = vunpack.c.l.b16 %v1204
      %v2006 = vunpack.c.h.b16 %v1204
      %v2007 = vunpack.c.l.b16 %v1205
      %v2008 = vunpack.c.h.b16 %v1205
      %v2009 = vunpack.c.l.b16 %v1206
      %v2010 = vunpack.c.h.b16 %v1206
      %v2011 = vunpack.c.l.b16 %v1207
      %v2012 = vunpack.c.h.b16 %v1207
      %v2013 = vunpack.c.l.b16 %v1208
      %v2014 = vunpack.c.h.b16 %v1208
      %v2015 = vunpack.c.l.b16 %v1209
      %v2016 = vunpack.c.h.b16 %v1209
      %v2017 = vunpack.c.l.b16 %v1210
      %v2018 = vunpack.c.h.b16 %v1210
      %v2019 = vunpack.c.l.b16 %v1211
      %v2020 = vunpack.c.h.b16 %v1211
      %v2021 = vunpack.c.l.b16 %v1212
      %v2022 = vunpack.c.h.b16 %v1212
      %v2023 = vunpack.c.l.b16 %v1213
      %v2024 = vunpack.c.h.b16 %v1213
      %v2025 = vunpack.c.l.b16 %v1214
      %v2026 = vunpack.c.h.b16 %v1214
      %v2027 = vunpack.c.l.b16 %v1215
      %v2028 = vunpack.c.h.b16 %v1215
      %v2029 = vunpack.c.l.b16 %v1216
      %v2030 = vunpack.c.h.b16 %v1216
      %v2031 = vunpack.c.l.b16 %v1217
      %v2032 = vunpack.c.h.b16 %v1217
      %v2033 = vunpack.c.l.b16 %v1218
      %v2034 = vunpack.c.h.b16 %v1218
      %v2035 = vunpack.c.l.b16 %v1219
      %v2036 = vunpack.c.h.b16 %v1219
      %v2037 = vunpack.c.l.b16 %v1220
      %v2038 = vunpack.c.h.b16 %v1220
      %v2039 = vunpack.c.l.b16 %v1221
      %v2040 = vunpack.c.h.b16 %v1221
      %v2041 = vunpack.c.l.b16 %v1222
      %v2042 = vunpack.c.h.b16 %v1222
      %v2043 = vunpack.c.l.b16 %v1223
      %v2044 = vunpack.c.h.b16 %v1223
      %v2045 = vunpack.c.l.b16 %v1224
      %v2046 = vunpack.c.h.b16 %v1224
      %v2047 = vunpack.c.l.b16 %v1225
      %v2048 = vunpack.c.h.b16 %v1225
      %v2049 = vunpack.c.l.b16 %v1226
      %v2050 = vunpack.c.h.b16 %v1226
      %v2051 = vunpack.c.l.b16 %v1227
      %v2052 = vunpack.c.h.b16 %v1227
      %v2053 = vunpack.c.l.b16 %v1228
      %v2054 = vunpack.c.h.b16 %v1228
      %v2055 = vunpack.c.l.b16 %v1229
      %v2056 = vunpack.c.h.b16 %v1229
      %v2057 = vunpack.c.l.b16 %v1230
      %v2058 = vunpack.c.h.b16 %v1230
      %v2059 = vunpack.c.l.b16 %v1231
      %v2060 = vunpack.c.h.b16 %v1231
      %v2061 = vunpack.c.l.b16 %v1232
      %v2062 = vunpack.c.h.b16 %v1232
      %v2063 = vunpack.c.l.b16 %v1233
      %v2064 = vunpack.c.h.b16 %v1233
      %v2065 = vunpack.c.l.b16 %v1234
      %v2066 = vunpack.c.h.b16 %v1234
      %v2067 = vunpack.c.l.b16 %v1235
      %v2068 = vunpack.c.h.b16 %v1235
      %v2069 = vunpack.c.l.b16 %v1236
      %v2070 = vunpack.c.h.b16 %v1236
      %v2071 = vunpack.c.l.b16 %v1237
      %v2072 = vunpack.c.h.b16 %v1237
      %v2073 = vunpack.c.l.b16 %v1238
      %v2074 = vunpack.c.h.b16 %v1238
      %v2075 = vunpack.c.l.b16 %v1239
      %v2076 = vunpack.c.h.b16 %v1239
      %v2077 = vunpack.c.l.b16 %v1240
      %v2078 = vunpack.c.h.b16 %v1240
      %v2079 = vunpack.c.l.b16 %v1241
      %v2080 = vunpack.c.h.b16 %v1241
      %v2081 = vunpack.c.l.b16 %v1242
      %v2082 = vunpack.c.h.b16 %v1242
      %v2083 = vunpack.c.l.b16 %v1243
      %v2084 = vunpack.c.h.b16 %v1243
      %v2085 = vunpack.c.l.b16 %v1244
      %v2086 = vunpack.c.h.b16 %v1244
      %v2087 = vunpack.c.l.b16 %v1245
      %v2088 = vunpack.c.h.b16 %v1245
      %v2089 = vunpack.c.l.b16 %v1246
      %v2090 = vunpack.c.h.b16 %v1246
      %v2091 = vunpack.c.l.b16 %v1247
      %v2092 = vunpack.c.h.b16 %v1247
      %v2093 = vunpack.c.l.b16 %v1248
      %v2094 = vunpack.c.h.b16 %v1248
      %v2095 = vunpack.c.l.b16 %v1249
      %v2096 = vunpack.c.h.b16 %v1249
      %v2097 = vunpack.c.l.b16 %v1250
      %v2098 = vunpack.c.h.b16 %v1250
      %v2099 = vunpack.c.l.b16 %v1251
      %v2100 = vunpack.c.h.b16 %v1251
      %v2101 = vunpack.c.l.b16 %v1252
      %v2102 = vunpack.c.h.b16 %v1252
      %v2103 = vunpack.c.l.b16 %v1253
      %v2104 = vunpack.c.h.b16 %v1253
      %v2105 = vunpack.c.l.b16 %v1254
      %v2106 = vunpack.c.h.b16 %v1254
      %v2107 = vunpack.c.l.b16 %v1255
      %v2108 = vunpack.c.h.b16 %v1255
      %v2109 = vunpack.c.l.b16 %v1256
      %v2110 = vunpack.c.h.b16 %v1256
      %v2111 = vunpack.c.l.b16 %v1257
      %v2112 = vunpack.c.h.b16 %v1257
      %v2113 = vunpack.c.l.b16 %v1258
      %v2114 = vunpack.c.h.b16 %v1258
      %v2115 = vunpack.c.l.b16 %v1259
      %v2116 = vunpack.c.h.b16 %v1259
      %v2117 = vunpack.c.l.b16 %v1260
      %v2118 = vunpack.c.h.b16 %v1260
      %v2119 = vunpack.c.l.b16 %v1261
      %v2120 = vunpack.c.h.b16 %v1261
      %v2121 = vunpack.c.l.b16 %v1262
      %v2122 = vunpack.c.h.b16 %v1262
      %v2123 = vunpack.c.l.b16 %v1263
      %v2124 = vunpack.c.h.b16 %v1263
      %v2125 = vunpack.c.l.b16 %v1264
      %v2126 = vunpack.c.h.b16 %v1264
      %v2127 = vunpack.c.l.b16 %v1265
      %v2128 = vunpack.c.h.b16 %v1265
      %v2129 = vunpack.c.l.b16 %v1266
      %v2130 = vunpack.c.h.b16 %v1266
      %v2131 = vunpack.c.l.b16 %v1267
      %v2132 = vunpack.c.h.b16 %v1267
      %v2133 = vunpack.c.l.b16 %v1268
      %v2134 = vunpack.c.h.b16 %v1268
      %v2135 = vunpack.c.l.b16 %v1269
      %v2136 = vunpack.c.h.b16 %v1269
      %v2137 = vunpack.c.l.b16 %v1270
      %v2138 = vunpack.c.h.b16 %v1270
      %v2139 = vunpack.c.l.b16 %v1271
      %v2140 = vunpack.c.h.b16 %v1271
      %v2141 = vunpack.c.l.b16 %v1272
      %v2142 = vunpack.c.h.b16 %v1272
      %v2143 = vunpack.c.l.b16 %v1273
      %v2144 = vunpack.c.h.b16 %v1273
      %v2145 = vunpack.c.l.b16 %v1274
      %v2146 = vunpack.c.h.b16 %v1274
      %v2147 = vunpack.c.l.b16 %v1275
      %v2148 = vunpack.c.h.b16 %v1275
      %v2149 = vunpack.c.l.b16 %v1276
      %v2150 = vunpack.c.h.b16 %v1276
      %v2151 = vunpack.c.l.b16 %v1277
      %v2152 = vunpack.c.h.b16 %v1277
      %v2153 = vunpack.c.l.b16 %v1278
      %v2154 = vunpack.c.h.b16 %v1278
      %v2155 = vunpack.c.l.b16 %v1279
      %v2156 = vunpack.c.h.b16 %v1279
      %v2157 = vunpack.c.l.b16 %v1280
      %v2158 = vunpack.c.h.b16 %v1280
      %v2159 = vunpack.c.l.b16 %v1281
      %v2160 = vunpack.c.h.b16 %v1281
      %v2161 = vunpack.c.l.b16 %v1282
      %v2162 = vunpack.c.h.b16 %v1282
      %v2163 = vunpack.c.l.b16 %v1283
      %v2164 = vunpack.c.h.b16 %v1283
      %v2165 = vunpack.c.l.b16 %v1284
      %v2166 = vunpack.c.h.b16 %v1284
      %v2167 = vunpack.c.l.b16 %v1285
      %v2168 = vunpack.c.h.b16 %v1285
      %v2169 = vunpack.c.l.b16 %v1286
      %v2170 = vunpack.c.h.b16 %v1286
      %v2171 = vunpack.c.l.b16 %v1287
      %v2172 = vunpack.c.h.b16 %v1287
      %v2173 = vunpack.c.l.b16 %v1288
      %v2174 = vunpack.c.h.b16 %v1288
      %v2175 = vunpack.c.l.b16 %v1289
      %v2176 = vunpack.c.h.b16 %v1289
      %v2177 = vunpack.c.l.b16 %v1290
      %v2178 = vunpack.c.h.b16 %v1290
      %v2179 = vunpack.c.l.b16 %v1291
      %v2180 = vunpack.c.h.b16 %v1291
      %v2181 = vunpack.c.l.b16 %v1292
      %v2182 = vunpack.c.h.b16 %v1292
      %v2183 = vunpack.c.l.b16 %v1293
      %v2184 = vunpack.c.h.b16 %v1293
      %v2185 = vunpack.c.l.b16 %v1294
      %v2186 = vunpack.c.h.b16 %v1294
      %v2187 = vunpack.c.l.b16 %v1295
      %v2188 = vunpack.c.h.b16 %v1295
      %v2189 = vunpack.c.l.b16 %v1296
      %v2190 = vunpack.c.h.b16 %v1296
      %v2191 = vunpack.c.l.b16 %v1297
      %v2192 = vunpack.c.h.b16 %v1297
      %v2193 = vunpack.c.l.b16 %v1298
      %v2194 = vunpack.c.h.b16 %v1298
      %v2195 = vunpack.c.l.b16 %v1299
      %v2196 = vunpack.c.h.b16 %v1299
      %v2197 = vunpack.c.l.b16 %v1300
      %v2198 = vunpack.c.h.b16 %v1300
      %v2199 = vunpack.c.l.b16 %v1301
      %v2200 = vunpack.c.h.b16 %v1301
      %v2201 = vunpack.c.l.b16 %v1302
      %v2202 = vunpack.c.h.b16 %v1302
      %v2203 = vunpack.c.l.b16 %v1303
      %v2204 = vunpack.c.h.b16 %v1303
      %v2205 = vunpack.c.l.b16 %v1304
      %v2206 = vunpack.c.h.b16 %v1304
      %v2207 = vunpack.c.l.b16 %v1305
      %v2208 = vunpack.c.h.b16 %v1305
      %v2209 = vunpack.c.l.b16 %v1306
      %v2210 = vunpack.c.h.b16 %v1306
      %v2211 = vunpack.c.l.b16 %v1307
      %v2212 = vunpack.c.h.b16 %v1307
      %v2213 = vunpack.c.l.b16 %v1308
      %v2214 = vunpack.c.h.b16 %v1308
      %v2215 = vunpack.c.l.b16 %v1309
      %v2216 = vunpack.c.h.b16 %v1309
      %v2217 = vunpack.c.l.b16 %v1310
      %v2218 = vunpack.c.h.b16 %v1310
      %v2219 = vunpack.c.l.b16 %v1311
      %v2220 = vunpack.c.h.b16 %v1311
      %v2221 = vunpack.c.l.b16 %v1312
      %v2222 = vunpack.c.h.b16 %v1312
      %v2223 = vunpack.c.l.b16 %v1313
      %v2224 = vunpack.c.h.b16 %v1313
      %v2225 = vunpack.c.l.b16 %v1314
      %v2226 = vunpack.c.h.b16 %v1314
      %v2227 = vunpack.c.l.b16 %v1315
      %v2228 = vunpack.c.h.b16 %v1315
      %v2229 = vunpack.c.l.b16 %v1316
      %v2230 = vunpack.c.h.b16 %v1316
      %v2231 = vunpack.c.l.b16 %v1317
      %v2232 = vunpack.c.h.b16 %v1317
      %v2233 = vunpack.c.l.b16 %v1318
      %v2234 = vunpack.c.h.b16 %v1318
      %v2235 = vunpack.c.l.b16 %v1319
      %v2236 = vunpack.c.h.b16 %v1319
      %v2237 = vunpack.c.l.b16 %v1320
      %v2238 = vunpack.c.h.b16 %v1320
      %v2239 = vunpack.c.l.b16 %v1321
      %v2240 = vunpack.c.h.b16 %v1321
      %v2241 = vunpack.c.l.b16 %v1322
      %v2242 = vunpack.c.h.b16 %v1322
      %v2243 = vunpack.c.l.b16 %v1323
      %v2244 = vunpack.c.h.b16 %v1323
      %v2245 = vunpack.c.l.b16 %v1324
      %v2246 = vunpack.c.h.b16 %v1324
      %v2247 = vunpack.c.l.b16 %v1325
      %v2248 = vunpack.c.h.b16 %v1325
      %v2249 = vunpack.c.l.b16 %v1326
      %v2250 = vunpack.c.h.b16 %v1326
      %v2251 = vunpack.c.l.b16 %v1327
      %v2252 = vunpack.c.h.b16 %v1327
      %v2253 = vunpack.c.l.b16 %v1328
      %v2254 = vunpack.c.h.b16 %v1328
      %v2255 = vunpack.c.l.b16 %v1329
      %v2256 = vunpack.c.h.b16 %v1329
      %v2257 = vunpack.c.l.b16 %v1330
      %v2258 = vunpack.c.h.b16 %v1330
      %v2259 = vunpack.c.l.b16 %v1331
      %v2260 = vunpack.c.h.b16 %v1331
      %v2261 = vunpack.c.l.b16 %v1332
      %v2262 = vunpack.c.h.b16 %v1332
      %v2263 = vunpack.c.l.b16 %v1333
      %v2264 = vunpack.c.h.b16 %v1333
      %v2265 = vunpack.c.l.b16 %v1334
      %v2266 = vunpack.c.h.b16 %v1334
      %v2267 = vunpack.c.l.b16 %v1335
      %v2268 = vunpack.c.h.b16 %v1335
      %v2269 = vunpack.c.l.b16 %v1336
      %v2270 = vunpack.c.h.b16 %v1336
      %v2271 = vunpack.c.l.b16 %v1337
      %v2272 = vunpack.c.h.b16 %v1337
      %v2273 = vunpack.c.l.b16 %v1338
      %v2274 = vunpack.c.h.b16 %v1338
      %v2275 = vunpack.c.l.b16 %v1339
      %v2276 = vunpack.c.h.b16 %v1339
      %v2277 = vunpack.c.l.b16 %v1340
      %v2278 = vunpack.c.h.b16 %v1340
      %v2279 = vunpack.c.l.b16 %v1341
      %v2280 = vunpack.c.h.b16 %v1341
      %v2281 = vunpack.c.l.b16 %v1342
      %v2282 = vunpack.c.h.b16 %v1342
      %v2283 = vunpack.c.l.b16 %v1343
      %v2284 = vunpack.c.h.b16 %v1343
      %v2285 = vunpack.c.l.b16 %v1344
      %v2286 = vunpack.c.h.b16 %v1344
      %v2287 = vunpack.c.l.b16 %v1345
      %v2288 = vunpack.c.h.b16 %v1345
      %v2289 = vunpack.c.l.b16 %v1346
      %v2290 = vunpack.c.h.b16 %v1346
      %v2291 = vunpack.c.l.b16 %v1347
      %v2292 = vunpack.c.h.b16 %v1347
      %v2293 = vunpack.c.l.b16 %v1348
      %v2294 = vunpack.c.h.b16 %v1348
      %v2295 = vunpack.c.l.b16 %v1349
      %v2296 = vunpack.c.h.b16 %v1349
      %v2297 = vunpack.c.l.b16 %v1350
      %v2298 = vunpack.c.h.b16 %v1350
      %v2299 = vunpack.c.l.b16 %v1351
      %v2300 = vunpack.c.h.b16 %v1351
      %v2301 = vunpack.c.l.b16 %v1352
      %v2302 = vunpack.c.h.b16 %v1352
      %v2303 = vunpack.c.l.b16 %v1353
      %v2304 = vunpack.c.h.b16 %v1353
      %v2305 = vunpack.c.l.b16 %v1354
      %v2306 = vunpack.c.h.b16 %v1354
      %v2307 = vunpack.c.l.b16 %v1355
      %v2308 = vunpack.c.h.b16 %v1355
      %v2309 = vunpack.c.l.b16 %v1356
      %v2310 = vunpack.c.h.b16 %v1356
      %v2311 = vunpack.c.l.b16 %v1357
      %v2312 = vunpack.c.h.b16 %v1357
      %v2313 = vunpack.c.l.b16 %v1358
      %v2314 = vunpack.c.h.b16 %v1358
      %v2315 = vunpack.c.l.b16 %v1359
      %v2316 = vunpack.c.h.b16 %v1359
      %v2317 = vunpack.c.l.b16 %v1360
      %v2318 = vunpack.c.h.b16 %v1360
      %v2319 = vunpack.c.l.b16 %v1361
      %v2320 = vunpack.c.h.b16 %v1361
      %v2321 = vunpack.c.l.b16 %v1362
      %v2322 = vunpack.c.h.b16 %v1362
      %v2323 = vpack.c.b16 %v1687, %v1683
      %v2324 = vpack.c.b16 %v1688, %v1684
      %v2325 = vpack.c.b16 %v1689, %v1685
      %v2326 = vpack.c.b16 %v1690, %v1686
      %v2327 = vpack.c.b16 %v1695, %v1691
      %v2328 = vpack.c.b16 %v1696, %v1692
      %v2329 = vpack.c.b16 %v1697, %v1693
      %v2330 = vpack.c.b16 %v1698, %v1694
      %v2331 = vpack.c.b16 %v1703, %v1699
      %v2332 = vpack.c.b16 %v1704, %v1700
      %v2333 = vpack.c.b16 %v1705, %v1701
      %v2334 = vpack.c.b16 %v1706, %v1702
      %v2335 = vpack.c.b16 %v1711, %v1707
      %v2336 = vpack.c.b16 %v1712, %v1708
      %v2337 = vpack.c.b16 %v1713, %v1709
      %v2338 = vpack.c.b16 %v1714, %v1710
      %v2339 = vpack.c.b16 %v1719, %v1715
      %v2340 = vpack.c.b16 %v1720, %v1716
      %v2341 = vpack.c.b16 %v1721, %v1717
      %v2342 = vpack.c.b16 %v1722, %v1718
      %v2343 = vpack.c.b16 %v1727, %v1723
      %v2344 = vpack.c.b16 %v1728, %v1724
      %v2345 = vpack.c.b16 %v1729, %v1725
      %v2346 = vpack.c.b16 %v1730, %v1726
      %v2347 = vpack.c.b16 %v1735, %v1731
      %v2348 = vpack.c.b16 %v1736, %v1732
      %v2349 = vpack.c.b16 %v1737, %v1733
      %v2350 = vpack.c.b16 %v1738, %v1734
      %v2351 = vpack.c.b16 %v1743, %v1739
      %v2352 = vpack.c.b16 %v1744, %v1740
      %v2353 = vpack.c.b16 %v1745, %v1741
      %v2354 = vpack.c.b16 %v1746, %v1742
      %v2355 = vpack.c.b16 %v1751, %v1747
      %v2356 = vpack.c.b16 %v1752, %v1748
      %v2357 = vpack.c.b16 %v1753, %v1749
      %v2358 = vpack.c.b16 %v1754, %v1750
      %v2359 = vpack.c.b16 %v1759, %v1755
      %v2360 = vpack.c.b16 %v1760, %v1756
      %v2361 = vpack.c.b16 %v1761, %v1757
      %v2362 = vpack.c.b16 %v1762, %v1758
      %v2363 = vpack.c.b16 %v1767, %v1763
      %v2364 = vpack.c.b16 %v1768, %v1764
      %v2365 = vpack.c.b16 %v1769, %v1765
      %v2366 = vpack.c.b16 %v1770, %v1766
      %v2367 = vpack.c.b16 %v1775, %v1771
      %v2368 = vpack.c.b16 %v1776, %v1772
      %v2369 = vpack.c.b16 %v1777, %v1773
      %v2370 = vpack.c.b16 %v1778, %v1774
      %v2371 = vpack.c.b16 %v1783, %v1779
      %v2372 = vpack.c.b16 %v1784, %v1780
      %v2373 = vpack.c.b16 %v1785, %v1781
      %v2374 = vpack.c.b16 %v1786, %v1782
      %v2375 = vpack.c.b16 %v1791, %v1787
      %v2376 = vpack.c.b16 %v1792, %v1788
      %v2377 = vpack.c.b16 %v1793, %v1789
      %v2378 = vpack.c.b16 %v1794, %v1790
      %v2379 = vpack.c.b16 %v1799, %v1795
      %v2380 = vpack.c.b16 %v1800, %v1796
      %v2381 = vpack.c.b16 %v1801, %v1797
      %v2382 = vpack.c.b16 %v1802, %v1798
      %v2383 = vpack.c.b16 %v1807, %v1803
      %v2384 = vpack.c.b16 %v1808, %v1804
      %v2385 = vpack.c.b16 %v1809, %v1805
      %v2386 = vpack.c.b16 %v1810, %v1806
      %v2387 = vpack.c.b16 %v1815, %v1811
      %v2388 = vpack.c.b16 %v1816, %v1812
      %v2389 = vpack.c.b16 %v1817, %v1813
      %v2390 = vpack.c.b16 %v1818, %v1814
      %v2391 = vpack.c.b16 %v1823, %v1819
      %v2392 = vpack.c.b16 %v1824, %v1820
      %v2393 = vpack.c.b16 %v1825, %v1821
      %v2394 = vpack.c.b16 %v1826, %v1822
      %v2395 = vpack.c.b16 %v1831, %v1827
      %v2396 = vpack.c.b16 %v1832, %v1828
      %v2397 = vpack.c.b16 %v1833, %v1829
      %v2398 = vpack.c.b16 %v1834, %v1830
      %v2399 = vpack.c.b16 %v1839, %v1835
      %v2400 = vpack.c.b16 %v1840, %v1836
      %v2401 = vpack.c.b16 %v1841, %v1837
      %v2402 = vpack.c.b16 %v1842, %v1838
      %v2403 = vpack.c.b16 %v1847, %v1843
      %v2404 = vpack.c.b16 %v1848, %v1844
      %v2405 = vpack.c.b16 %v1849, %v1845
      %v2406 = vpack.c.b16 %v1850, %v1846
      %v2407 = vpack.c.b16 %v1855, %v1851
      %v2408 = vpack.c.b16 %v1856, %v1852
      %v2409 = vpack.c.b16 %v1857, %v1853
      %v2410 = vpack.c.b16 %v1858, %v1854
      %v2411 = vpack.c.b16 %v1863, %v1859
      %v2412 = vpack.c.b16 %v1864, %v1860
      %v2413 = vpack.c.b16 %v1865, %v1861
      %v2414 = vpack.c.b16 %v1866, %v1862
      %v2415 = vpack.c.b16 %v1871, %v1867
      %v2416 = vpack.c.b16 %v1872, %v1868
      %v2417 = vpack.c.b16 %v1873, %v1869
      %v2418 = vpack.c.b16 %v1874, %v1870
      %v2419 = vpack.c.b16 %v1879, %v1875
      %v2420 = vpack.c.b16 %v1880, %v1876
      %v2421 = vpack.c.b16 %v1881, %v1877
      %v2422 = vpack.c.b16 %v1882, %v1878
      %v2423 = vpack.c.b16 %v1887, %v1883
      %v2424 = vpack.c.b16 %v1888, %v1884
      %v2425 = vpack.c.b16 %v1889, %v1885
      %v2426 = vpack.c.b16 %v1890, %v1886
      %v2427 = vpack.c.b16 %v1895, %v1891
      %v2428 = vpack.c.b16 %v1896, %v1892
      %v2429 = vpack.c.b16 %v1897, %v1893
      %v2430 = vpack.c.b16 %v1898, %v1894
      %v2431 = vpack.c.b16 %v1903, %v1899
      %v2432 = vpack.c.b16 %v1904, %v1900
      %v2433 = vpack.c.b16 %v1905, %v1901
      %v2434 = vpack.c.b16 %v1906, %v1902
      %v2435 = vpack.c.b16 %v1911, %v1907
      %v2436 = vpack.c.b16 %v1912, %v1908
      %v2437 = vpack.c.b16 %v1913, %v1909
      %v2438 = vpack.c.b16 %v1914, %v1910
      %v2439 = vpack.c.b16 %v1919, %v1915
      %v2440 = vpack.c.b16 %v1920, %v1916
      %v2441 = vpack.c.b16 %v1921, %v1917
      %v2442 = vpack.c.b16 %v1922, %v1918
      %v2443 = vpack.c.b16 %v1927, %v1923
      %v2444 = vpack.c.b16 %v1928, %v1924
      %v2445 = vpack.c.b16 %v1929, %v1925
      %v2446 = vpack.c.b16 %v1930, %v1926
      %v2447 = vpack.c.b16 %v1935, %v1931
      %v2448 = vpack.c.b16 %v1936, %v1932
      %v2449 = vpack.c.b16 %v1937, %v1933
      %v2450 = vpack.c.b16 %v1938, %v1934
      %v2451 = vpack.c.b16 %v1943, %v1939
      %v2452 = vpack.c.b16 %v1944, %v1940
      %v2453 = vpack.c.b16 %v1945, %v1941
      %v2454 = vpack.c.b16 %v1946, %v1942
      %v2455 = vpack.c.b16 %v1951, %v1947
      %v2456 = vpack.c.b16 %v1952, %v1948
      %v2457 = vpack.c.b16 %v1953, %v1949
      %v2458 = vpack.c.b16 %v1954, %v1950
      %v2459 = vpack.c.b16 %v1959, %v1955
      %v2460 = vpack.c.b16 %v1960, %v1956
      %v2461 = vpack.c.b16 %v1961, %v1957
      %v2462 = vpack.c.b16 %v1962, %v1958
      %v2463 = vpack.c.b16 %v1967, %v1963
      %v2464 = vpack.c.b16 %v1968, %v1964
      %v2465 = vpack.c.b16 %v1969, %v1965
      %v2466 = vpack.c.b16 %v1970, %v1966
      %v2467 = vpack.c.b16 %v1975, %v1971
      %v2468 = vpack.c.b16 %v1976, %v1972
      %v2469 = vpack.c.b16 %v1977, %v1973
      %v2470 = vpack.c.b16 %v1978, %v1974
      %v2471 = vpack.c.b16 %v1983, %v1979
      %v2472 = vpack.c.b16 %v1984, %v1980
      %v2473 = vpack.c.b16 %v1985, %v1981
      %v2474 = vpack.c.b16 %v1986, %v1982
      %v2475 = vpack.c.b16 %v1991, %v1987
      %v2476 = vpack.c.b16 %v1992, %v1988
      %v2477 = vpack.c.b16 %v1993, %v1989
      %v2478 = vpack.c.b16 %v1994, %v1990
      %v2479 = vpack.c.b16 %v1999, %v1995
      %v2480 = vpack.c.b16 %v2000, %v1996
      %v2481 = vpack.c.b16 %v2001, %v1997
      %v2482 = vpack.c.b16 %v2002, %v1998
      %v2483 = vpack.c.b16 %v2007, %v2003
      %v2484 = vpack.c.b16 %v2008, %v2004
      %v2485 = vpack.c.b16 %v2009, %v2005
      %v2486 = vpack.c.b16 %v2010, %v2006
      %v2487 = vpack.c.b16 %v2015, %v2011
      %v2488 = vpack.c.b16 %v2016, %v2012
      %v2489 = vpack.c.b16 %v2017, %v2013
      %v2490 = vpack.c.b16 %v2018, %v2014
      %v2491 = vpack.c.b16 %v2023, %v2019
      %v2492 = vpack.c.b16 %v2024, %v2020
      %v2493 = vpack.c.b16 %v2025, %v2021
      %v2494 = vpack.c.b16 %v2026, %v2022
      %v2495 = vpack.c.b16 %v2031, %v2027
      %v2496 = vpack.c.b16 %v2032, %v2028
      %v2497 = vpack.c.b16 %v2033, %v2029
      %v2498 = vpack.c.b16 %v2034, %v2030
      %v2499 = vpack.c.b16 %v2039, %v2035
      %v2500 = vpack.c.b16 %v2040, %v2036
      %v2501 = vpack.c.b16 %v2041, %v2037
      %v2502 = vpack.c.b16 %v2042, %v2038
      %v2503 = vpack.c.b16 %v2047, %v2043
      %v2504 = vpack.c.b16 %v2048, %v2044
      %v2505 = vpack.c.b16 %v2049, %v2045
      %v2506 = vpack.c.b16 %v2050, %v2046
      %v2507 = vpack.c.b16 %v2055, %v2051
      %v2508 = vpack.c.b16 %v2056, %v2052
      %v2509 = vpack.c.b16 %v2057, %v2053
      %v2510 = vpack.c.b16 %v2058, %v2054
      %v2511 = vpack.c.b16 %v2063, %v2059
      %v2512 = vpack.c.b16 %v2064, %v2060
      %v2513 = vpack.c.b16 %v2065, %v2061
      %v2514 = vpack.c.b16 %v2066, %v2062
      %v2515 = vpack.c.b16 %v2071, %v2067
      %v2516 = vpack.c.b16 %v2072, %v2068
      %v2517 = vpack.c.b16 %v2073, %v2069
      %v2518 = vpack.c.b16 %v2074, %v2070
      %v2519 = vpack.c.b16 %v2079, %v2075
      %v2520 = vpack.c.b16 %v2080, %v2076
      %v2521 = vpack.c.b16 %v2081, %v2077
      %v2522 = vpack.c.b16 %v2082, %v2078
      %v2523 = vpack.c.b16 %v2087, %v2083
      %v2524 = vpack.c.b16 %v2088, %v2084
      %v2525 = vpack.c.b16 %v2089, %v2085
      %v2526 = vpack.c.b16 %v2090, %v2086
      %v2527 = vpack.c.b16 %v2095, %v2091
      %v2528 = vpack.c.b16 %v2096, %v2092
      %v2529 = vpack.c.b16 %v2097, %v2093
      %v2530 = vpack.c.b16 %v2098, %v2094
      %v2531 = vpack.c.b16 %v2103, %v2099
      %v2532 = vpack.c.b16 %v2104, %v2100
      %v2533 = vpack.c.b16 %v2105, %v2101
      %v2534 = vpack.c.b16 %v2106, %v2102
      %v2535 = vpack.c.b16 %v2111, %v2107
      %v2536 = vpack.c.b16 %v2112, %v2108
      %v2537 = vpack.c.b16 %v2113, %v2109
      %v2538 = vpack.c.b16 %v2114, %v2110
      %v2539 = vpack.c.b16 %v2119, %v2115
      %v2540 = vpack.c.b16 %v2120, %v2116
      %v2541 = vpack.c.b16 %v2121, %v2117
      %v2542 = vpack.c.b16 %v2122, %v2118
      %v2543 = vpack.c.b16 %v2127, %v2123
      %v2544 = vpack.c.b16 %v2128, %v2124
      %v2545 = vpack.c.b16 %v2129, %v2125
      %v2546 = vpack.c.b16 %v2130, %v2126
      %v2547 = vpack.c.b16 %v2135, %v2131
      %v2548 = vpack.c.b16 %v2136, %v2132
      %v2549 = vpack.c.b16 %v2137, %v2133
      %v2550 = vpack.c.b16 %v2138, %v2134
      %v2551 = vpack.c.b16 %v2143, %v2139
      %v2552 = vpack.c.b16 %v2144, %v2140
      %v2553 = vpack.c.b16 %v2145, %v2141
      %v2554 = vpack.c.b16 %v2146, %v2142
      %v2555 = vpack.c.b16 %v2151, %v2147
      %v2556 = vpack.c.b16 %v2152, %v2148
      %v2557 = vpack.c.b16 %v2153, %v2149
      %v2558 = vpack.c.b16 %v2154, %v2150
      %v2559 = vpack.c.b16 %v2159, %v2155
      %v2560 = vpack.c.b16 %v2160, %v2156
      %v2561 = vpack.c.b16 %v2161, %v2157
      %v2562 = vpack.c.b16 %v2162, %v2158
      %v2563 = vpack.c.b16 %v2167, %v2163
      %v2564 = vpack.c.b16 %v2168, %v2164
      %v2565 = vpack.c.b16 %v2169, %v2165
      %v2566 = vpack.c.b16 %v2170, %v2166
      %v2567 = vpack.c.b16 %v2175, %v2171
      %v2568 = vpack.c.b16 %v2176, %v2172
      %v2569 = vpack.c.b16 %v2177, %v2173
      %v2570 = vpack.c.b16 %v2178, %v2174
      %v2571 = vpack.c.b16 %v2183, %v2179
      %v2572 = vpack.c.b16 %v2184, %v2180
      %v2573 = vpack.c.b16 %v2185, %v2181
      %v2574 = vpack.c.b16 %v2186, %v2182
      %v2575 = vpack.c.b16 %v2191, %v2187
      %v2576 = vpack.c.b16 %v2192, %v2188
      %v2577 = vpack.c.b16 %v2193, %v2189
      %v2578 = vpack.c.b16 %v2194, %v2190
      %v2579 = vpack.c.b16 %v2199, %v2195
      %v2580 = vpack.c.b16 %v2200, %v2196
      %v2581 = vpack.c.b16 %v2201, %v2197
      %v2582 = vpack.c.b16 %v2202, %v2198
      %v2583 = vpack.c.b16 %v2207, %v2203
      %v2584 = vpack.c.b16 %v2208, %v2204
      %v2585 = vpack.c.b16 %v2209, %v2205
      %v2586 = vpack.c.b16 %v2210, %v2206
      %v2587 = vpack.c.b16 %v2215, %v2211
      %v2588 = vpack.c.b16 %v2216, %v2212
      %v2589 = vpack.c.b16 %v2217, %v2213
      %v2590 = vpack.c.b16 %v2218, %v2214
      %v2591 = vpack.c.b16 %v2223, %v2219
      %v2592 = vpack.c.b16 %v2224, %v2220
      %v2593 = vpack.c.b16 %v2225, %v2221
      %v2594 = vpack.c.b16 %v2226, %v2222
      %v2595 = vpack.c.b16 %v2231, %v2227
      %v2596 = vpack.c.b16 %v2232, %v2228
      %v2597 = vpack.c.b16 %v2233, %v2229
      %v2598 = vpack.c.b16 %v2234, %v2230
      %v2599 = vpack.c.b16 %v2239, %v2235
      %v2600 = vpack.c.b16 %v2240, %v2236
      %v2601 = vpack.c.b16 %v2241, %v2237
      %v2602 = vpack.c.b16 %v2242, %v2238
      %v2603 = vpack.c.b16 %v2247, %v2243
      %v2604 = vpack.c.b16 %v2248, %v2244
      %v2605 = vpack.c.b16 %v2249, %v2245
      %v2606 = vpack.c.b16 %v2250, %v2246
      %v2607 = vpack.c.b16 %v2255, %v2251
      %v2608 = vpack.c.b16 %v2256, %v2252
      %v2609 = vpack.c.b16 %v2257, %v2253
      %v2610 = vpack.c.b16 %v2258, %v2254
      %v2611 = vpack.c.b16 %v2263, %v2259
      %v2612 = vpack.c.b16 %v2264, %v2260
      %v2613 = vpack.c.b16 %v2265, %v2261
      %v2614 = vpack.c.b16 %v2266, %v2262
      %v2615 = vpack.c.b16 %v2271, %v2267
      %v2616 = vpack.c.b16 %v2272, %v2268
      %v2617 = vpack.c.b16 %v2273, %v2269
      %v2618 = vpack.c.b16 %v2274, %v2270
      %v2619 = vpack.c.b16 %v2279, %v2275
      %v2620 = vpack.c.b16 %v2280, %v2276
      %v2621 = vpack.c.b16 %v2281, %v2277
      %v2622 = vpack.c.b16 %v2282, %v2278
      %v2623 = vpack.c.b16 %v2287, %v2283
      %v2624 = vpack.c.b16 %v2288, %v2284
      %v2625 = vpack.c.b16 %v2289, %v2285
      %v2626 = vpack.c.b16 %v2290, %v2286
      %v2627 = vpack.c.b16 %v2295, %v2291
      %v2628 = vpack.c.b16 %v2296, %v2292
      %v2629 = vpack.c.b16 %v2297, %v2293
      %v2630 = vpack.c.b16 %v2298, %v2294
      %v2631 = vpack.c.b16 %v2303, %v2299
      %v2632 = vpack.c.b16 %v2304, %v2300
      %v2633 = vpack.c.b16 %v2305, %v2301
      %v2634 = vpack.c.b16 %v2306, %v2302
      %v2635 = vpack.c.b16 %v2311, %v2307
      %v2636 = vpack.c.b16 %v2312, %v2308
      %v2637 = vpack.c.b16 %v2313, %v2309
      %v2638 = vpack.c.b16 %v2314, %v2310
      %v2639 = vpack.c.b16 %v2319, %v2315
      %v2640 = vpack.c.b16 %v2320, %v2316
      %v2641 = vpack.c.b16 %v2321, %v2317
      %v2642 = vpack.c.b16 %v2322, %v2318
      %2963 = vmatprep.subr.bf16.mxu0 %v2324
      %2964 = vmatpush1.bf16.msra.mxu0 %v2323
      %2965 = vmatprep.subr.bf16.mxu0 %v2328
      %2966 = vmatpush1.bf16.msra.mxu0 %v2327
      %2967 = vmatprep.subr.bf16.mxu0 %v2332
      %2968 = vmatpush1.bf16.msra.mxu0 %v2331
      %2969 = vmatprep.subr.bf16.mxu0 %v2336
      %2970 = vmatpush1.bf16.msra.mxu0 %v2335
      %2971 = vmatprep.subr.bf16.mxu0 %v2340
      %2972 = vmatpush1.bf16.msra.mxu0 %v2339
      %2973 = vmatprep.subr.bf16.mxu0 %v2344
      %2974 = vmatpush1.bf16.msra.mxu0 %v2343
      %2975 = vmatprep.subr.bf16.mxu0 %v2348
      %2976 = vmatpush1.bf16.msra.mxu0 %v2347
      %2977 = vmatprep.subr.bf16.mxu0 %v2352
      %2978 = vmatpush1.bf16.msra.mxu0 %v2351
      %2979 = vmatprep.subr.bf16.mxu0 %v2356
      %2980 = vmatpush1.bf16.msra.mxu0 %v2355
      %2981 = vmatprep.subr.bf16.mxu0 %v2360
      %2982 = vmatpush1.bf16.msra.mxu0 %v2359
      %2983 = vmatprep.subr.bf16.mxu0 %v2364
      %2984 = vmatpush1.bf16.msra.mxu0 %v2363
      %2985 = vmatprep.subr.bf16.mxu0 %v2368
      %2986 = vmatpush1.bf16.msra.mxu0 %v2367
      %2987 = vmatprep.subr.bf16.mxu0 %v2372
      %2988 = vmatpush1.bf16.msra.mxu0 %v2371
      %2989 = vmatprep.subr.bf16.mxu0 %v2376
      %2990 = vmatpush1.bf16.msra.mxu0 %v2375
      %2991 = vmatprep.subr.bf16.mxu0 %v2380
      %2992 = vmatpush1.bf16.msra.mxu0 %v2379
      %2993 = vmatprep.subr.bf16.mxu0 %v2384
      %2994 = vmatpush1.bf16.msra.mxu0 %v2383
      %2995 = vmatprep.mubr.bf16.mxu0 %v1034
      %2996 = vmatmul.mubr.bf16.gmra.mrb[0].mxu0 %v1033
      %v2997 = vpop.f32.mrb[0].mxu0
      %v2998 = vadd.f32 0.0, %v2997
      %v2999 = vpop.f32.mrb[0].mxu0
      %v3000 = vadd.f32 0.0, %v2999
      %v3001 = vpop.f32.mrb[0].mxu0
      %v3002 = vadd.f32 0.0, %v3001
      %v3003 = vpop.f32.mrb[0].mxu0
      %v3004 = vadd.f32 0.0, %v3003
      %3005 = vdwg.mxu0
      %3006 = vmatprep.subr.bf16.mxu0 %v2388
      %3007 = vmatpush1.bf16.msra.mxu0 %v2387
      %3008 = vmatprep.subr.bf16.mxu0 %v2392
      %3009 = vmatpush1.bf16.msra.mxu0 %v2391
      %3010 = vmatprep.subr.bf16.mxu0 %v2396
      %3011 = vmatpush1.bf16.msra.mxu0 %v2395
      %3012 = vmatprep.subr.bf16.mxu0 %v2400
      %3013 = vmatpush1.bf16.msra.mxu0 %v2399
      %3014 = vmatprep.subr.bf16.mxu0 %v2404
      %3015 = vmatpush1.bf16.msra.mxu0 %v2403
      %3016 = vmatprep.subr.bf16.mxu0 %v2408
      %3017 = vmatpush1.bf16.msra.mxu0 %v2407
      %3018 = vmatprep.subr.bf16.mxu0 %v2412
      %3019 = vmatpush1.bf16.msra.mxu0 %v2411
      %3020 = vmatprep.subr.bf16.mxu0 %v2416
      %3021 = vmatpush1.bf16.msra.mxu0 %v2415
      %3022 = vmatprep.subr.bf16.mxu0 %v2420
      %3023 = vmatpush1.bf16.msra.mxu0 %v2419
      %3024 = vmatprep.subr.bf16.mxu0 %v2424
      %3025 = vmatpush1.bf16.msra.mxu0 %v2423
      %3026 = vmatprep.subr.bf16.mxu0 %v2428
      %3027 = vmatpush1.bf16.msra.mxu0 %v2427
      %3028 = vmatprep.subr.bf16.mxu0 %v2432
      %3029 = vmatpush1.bf16.msra.mxu0 %v2431
      %3030 = vmatprep.subr.bf16.mxu0 %v2436
      %3031 = vmatpush1.bf16.msra.mxu0 %v2435
      %3032 = vmatprep.subr.bf16.mxu0 %v2440
      %3033 = vmatpush1.bf16.msra.mxu0 %v2439
      %3034 = vmatprep.subr.bf16.mxu0 %v2444
      %3035 = vmatpush1.bf16.msra.mxu0 %v2443
      %3036 = vmatprep.subr.bf16.mxu0 %v2448
      %3037 = vmatpush1.bf16.msra.mxu0 %v2447
      %3038 = vmatprep.mubr.bf16.mxu0 %v1036
      %3039 = vmatmul.mubr.bf16.gmra.mrb[0].mxu0 %v1035
      %v3040 = vpop.f32.mrb[0].mxu0
      %v3041 = vadd.f32 %v2998, %v3040
      %v3042 = vpop.f32.mrb[0].mxu0
      %v3043 = vadd.f32 %v3000, %v3042
      %v3044 = vpop.f32.mrb[0].mxu0
      %v3045 = vadd.f32 %v3002, %v3044
      %v3046 = vpop.f32.mrb[0].mxu0
      %v3047 = vadd.f32 %v3004, %v3046
      %3048 = vdwg.mxu0
      %3049 = vmatprep.subr.bf16.mxu0 %v2452
      %3050 = vmatpush1.bf16.msra.mxu0 %v2451
      %3051 = vmatprep.subr.bf16.mxu0 %v2456
      %3052 = vmatpush1.bf16.msra.mxu0 %v2455
      %3053 = vmatprep.subr.bf16.mxu0 %v2460
      %3054 = vmatpush1.bf16.msra.mxu0 %v2459
      %3055 = vmatprep.subr.bf16.mxu0 %v2464
      %3056 = vmatpush1.bf16.msra.mxu0 %v2463
      %3057 = vmatprep.subr.bf16.mxu0 %v2468
      %3058 = vmatpush1.bf16.msra.mxu0 %v2467
      %3059 = vmatprep.subr.bf16.mxu0 %v2472
      %3060 = vmatpush1.bf16.msra.mxu0 %v2471
      %3061 = vmatprep.subr.bf16.mxu0 %v2476
      %3062 = vmatpush1.bf16.msra.mxu0 %v2475
      %3063 = vmatprep.subr.bf16.mxu0 %v2480
      %3064 = vmatpush1.bf16.msra.mxu0 %v2479
      %3065 = vmatprep.subr.bf16.mxu0 %v2484
      %3066 = vmatpush1.bf16.msra.mxu0 %v2483
      %3067 = vmatprep.subr.bf16.mxu0 %v2488
      %3068 = vmatpush1.bf16.msra.mxu0 %v2487
      %3069 = vmatprep.subr.bf16.mxu0 %v2492
      %3070 = vmatpush1.bf16.msra.mxu0 %v2491
      %3071 = vmatprep.subr.bf16.mxu0 %v2496
      %3072 = vmatpush1.bf16.msra.mxu0 %v2495
      %3073 = vmatprep.subr.bf16.mxu0 %v2500
      %3074 = vmatpush1.bf16.msra.mxu0 %v2499
      %3075 = vmatprep.subr.bf16.mxu0 %v2504
      %3076 = vmatpush1.bf16.msra.mxu0 %v2503
      %3077 = vmatprep.subr.bf16.mxu0 %v2508
      %3078 = vmatpush1.bf16.msra.mxu0 %v2507
      %3079 = vmatprep.subr.bf16.mxu0 %v2512
      %3080 = vmatpush1.bf16.msra.mxu0 %v2511
      %3081 = vmatprep.mubr.bf16.mxu0 %v1038
      %3082 = vmatmul.mubr.bf16.gmra.mrb[0].mxu0 %v1037
      %v3083 = vpop.f32.mrb[0].mxu0
      %v3084 = vadd.f32 %v3041, %v3083
      %v3085 = vpop.f32.mrb[0].mxu0
      %v3086 = vadd.f32 %v3043, %v3085
      %v3087 = vpop.f32.mrb[0].mxu0
      %v3088 = vadd.f32 %v3045, %v3087
      %v3089 = vpop.f32.mrb[0].mxu0
      %v3090 = vadd.f32 %v3047, %v3089
      %3091 = vdwg.mxu0
      %3092 = vmatprep.subr.bf16.mxu0 %v2516
      %3093 = vmatpush1.bf16.msra.mxu0 %v2515
      %3094 = vmatprep.subr.bf16.mxu0 %v2520
      %3095 = vmatpush1.bf16.msra.mxu0 %v2519
      %3096 = vmatprep.subr.bf16.mxu0 %v2524
      %3097 = vmatpush1.bf16.msra.mxu0 %v2523
      %3098 = vmatprep.subr.bf16.mxu0 %v2528
      %3099 = vmatpush1.bf16.msra.mxu0 %v2527
      %3100 = vmatprep.subr.bf16.mxu0 %v2532
      %3101 = vmatpush1.bf16.msra.mxu0 %v2531
      %3102 = vmatprep.subr.bf16.mxu0 %v2536
      %3103 = vmatpush1.bf16.msra.mxu0 %v2535
      %3104 = vmatprep.subr.bf16.mxu0 %v2540
      %3105 = vmatpush1.bf16.msra.mxu0 %v2539
      %3106 = vmatprep.subr.bf16.mxu0 %v2544
      %3107 = vmatpush1.bf16.msra.mxu0 %v2543
      %3108 = vmatprep.subr.bf16.mxu0 %v2548
      %3109 = vmatpush1.bf16.msra.mxu0 %v2547
      %3110 = vmatprep.subr.bf16.mxu0 %v2552
      %3111 = vmatpush1.bf16.msra.mxu0 %v2551
      %3112 = vmatprep.subr.bf16.mxu0 %v2556
      %3113 = vmatpush1.bf16.msra.mxu0 %v2555
      %3114 = vmatprep.subr.bf16.mxu0 %v2560
      %3115 = vmatpush1.bf16.msra.mxu0 %v2559
      %3116 = vmatprep.subr.bf16.mxu0 %v2564
      %3117 = vmatpush1.bf16.msra.mxu0 %v2563
      %3118 = vmatprep.subr.bf16.mxu0 %v2568
      %3119 = vmatpush1.bf16.msra.mxu0 %v2567
      %3120 = vmatprep.subr.bf16.mxu0 %v2572
      %3121 = vmatpush1.bf16.msra.mxu0 %v2571
      %3122 = vmatprep.subr.bf16.mxu0 %v2576
      %3123 = vmatpush1.bf16.msra.mxu0 %v2575
      %3124 = vmatprep.mubr.bf16.mxu0 %v1040
      %3125 = vmatmul.mubr.bf16.gmra.mrb[0].mxu0 %v1039
      %v3126 = vpop.f32.mrb[0].mxu0
      %v3127 = vadd.f32 %v3084, %v3126
      %v3128 = vpop.f32.mrb[0].mxu0
      %v3129 = vadd.f32 %v3086, %v3128
      %v3130 = vpop.f32.mrb[0].mxu0
      %v3131 = vadd.f32 %v3088, %v3130
      %v3132 = vpop.f32.mrb[0].mxu0
      %v3133 = vadd.f32 %v3090, %v3132
      %3134 = vdwg.mxu0
      %3135 = vmatprep.subr.bf16.mxu0 %v2580
      %3136 = vmatpush1.bf16.msra.mxu0 %v2579
      %3137 = vmatprep.subr.bf16.mxu0 %v2584
      %3138 = vmatpush1.bf16.msra.mxu0 %v2583
      %3139 = vmatprep.subr.bf16.mxu0 %v2588
      %3140 = vmatpush1.bf16.msra.mxu0 %v2587
      %3141 = vmatprep.subr.bf16.mxu0 %v2592
      %3142 = vmatpush1.bf16.msra.mxu0 %v2591
      %3143 = vmatprep.subr.bf16.mxu0 %v2596
      %3144 = vmatpush1.bf16.msra.mxu0 %v2595
      %3145 = vmatprep.subr.bf16.mxu0 %v2600
      %3146 = vmatpush1.bf16.msra.mxu0 %v2599
      %3147 = vmatprep.subr.bf16.mxu0 %v2604
      %3148 = vmatpush1.bf16.msra.mxu0 %v2603
      %3149 = vmatprep.subr.bf16.mxu0 %v2608
      %3150 = vmatpush1.bf16.msra.mxu0 %v2607
      %3151 = vmatprep.subr.bf16.mxu0 %v2612
      %3152 = vmatpush1.bf16.msra.mxu0 %v2611
      %3153 = vmatprep.subr.bf16.mxu0 %v2616
      %3154 = vmatpush1.bf16.msra.mxu0 %v2615
      %3155 = vmatprep.subr.bf16.mxu0 %v2620
      %3156 = vmatpush1.bf16.msra.mxu0 %v2619
      %3157 = vmatprep.subr.bf16.mxu0 %v2624
      %3158 = vmatpush1.bf16.msra.mxu0 %v2623
      %3159 = vmatprep.subr.bf16.mxu0 %v2628
      %3160 = vmatpush1.bf16.msra.mxu0 %v2627
      %3161 = vmatprep.subr.bf16.mxu0 %v2632
      %3162 = vmatpush1.bf16.msra.mxu0 %v2631
      %3163 = vmatprep.subr.bf16.mxu0 %v2636
      %3164 = vmatpush1.bf16.msra.mxu0 %v2635
      %3165 = vmatprep.subr.bf16.mxu0 %v2640
      %3166 = vmatpush1.bf16.msra.mxu0 %v2639
      %3167 = vmatprep.mubr.bf16.mxu0 %v1042
      %3168 = vmatmul.mubr.bf16.gmra.mrb[0].mxu0 %v1041
      %v3169 = vpop.f32.mrb[0].mxu0
      %v3170 = vadd.f32 %v3127, %v3169
      %v3171 = vpop.f32.mrb[0].mxu0
      %v3172 = vadd.f32 %v3129, %v3171
      %v3173 = vpop.f32.mrb[0].mxu0
      %v3174 = vadd.f32 %v3131, %v3173
      %v3175 = vpop.f32.mrb[0].mxu0
      %v3176 = vadd.f32 %v3133, %v3175
      %3177 = vdwg.mxu0
      %3178 = vmatprep.subr.bf16.mxu0 %v2326
      %3179 = vmatpush1.bf16.msra.mxu0 %v2325
      %3180 = vmatprep.subr.bf16.mxu0 %v2330
      %3181 = vmatpush1.bf16.msra.mxu0 %v2329
      %3182 = vmatprep.subr.bf16.mxu0 %v2334
      %3183 = vmatpush1.bf16.msra.mxu0 %v2333
      %3184 = vmatprep.subr.bf16.mxu0 %v2338
      %3185 = vmatpush1.bf16.msra.mxu0 %v2337
      %3186 = vmatprep.subr.bf16.mxu0 %v2342
      %3187 = vmatpush1.bf16.msra.mxu0 %v2341
      %3188 = vmatprep.subr.bf16.mxu0 %v2346
      %3189 = vmatpush1.bf16.msra.mxu0 %v2345
      %3190 = vmatprep.subr.bf16.mxu0 %v2350
      %3191 = vmatpush1.bf16.msra.mxu0 %v2349
      %3192 = vmatprep.subr.bf16.mxu0 %v2354
      %3193 = vmatpush1.bf16.msra.mxu0 %v2353
      %3194 = vmatprep.subr.bf16.mxu0 %v2358
      %3195 = vmatpush1.bf16.msra.mxu0 %v2357
      %3196 = vmatprep.subr.bf16.mxu0 %v2362
      %3197 = vmatpush1.bf16.msra.mxu0 %v2361
      %3198 = vmatprep.subr.bf16.mxu0 %v2366
      %3199 = vmatpush1.bf16.msra.mxu0 %v2365
      %3200 = vmatprep.subr.bf16.mxu0 %v2370
      %3201 = vmatpush1.bf16.msra.mxu0 %v2369
      %3202 = vmatprep.subr.bf16.mxu0 %v2374
      %3203 = vmatpush1.bf16.msra.mxu0 %v2373
      %3204 = vmatprep.subr.bf16.mxu0 %v2378
      %3205 = vmatpush1.bf16.msra.mxu0 %v2377
      %3206 = vmatprep.subr.bf16.mxu0 %v2382
      %3207 = vmatpush1.bf16.msra.mxu0 %v2381
      %3208 = vmatprep.subr.bf16.mxu0 %v2386
      %3209 = vmatpush1.bf16.msra.mxu0 %v2385
      %3210 = vmatprep.mubr.bf16.mxu0 %v1034
      %3211 = vmatmul.mubr.bf16.gmra.mrb[0].mxu0 %v1033
      %v3212 = vpop.f32.mrb[0].mxu0
      %v3213 = vadd.f32 0.0, %v3212
      %v3214 = vpop.f32.mrb[0].mxu0
      %v3215 = vadd.f32 0.0, %v3214
      %v3216 = vpop.f32.mrb[0].mxu0
      %v3217 = vadd.f32 0.0, %v3216
      %v3218 = vpop.f32.mrb[0].mxu0
      %v3219 = vadd.f32 0.0, %v3218
      %3220 = vdwg.mxu0
      %3221 = vmatprep.subr.bf16.mxu0 %v2390
      %3222 = vmatpush1.bf16.msra.mxu0 %v2389
      %3223 = vmatprep.subr.bf16.mxu0 %v2394
      %3224 = vmatpush1.bf16.msra.mxu0 %v2393
      %3225 = vmatprep.subr.bf16.mxu0 %v2398
      %3226 = vmatpush1.bf16.msra.mxu0 %v2397
      %3227 = vmatprep.subr.bf16.mxu0 %v2402
      %3228 = vmatpush1.bf16.msra.mxu0 %v2401
      %3229 = vmatprep.subr.bf16.mxu0 %v2406
      %3230 = vmatpush1.bf16.msra.mxu0 %v2405
      %3231 = vmatprep.subr.bf16.mxu0 %v2410
      %3232 = vmatpush1.bf16.msra.mxu0 %v2409
      %3233 = vmatprep.subr.bf16.mxu0 %v2414
      %3234 = vmatpush1.bf16.msra.mxu0 %v2413
      %3235 = vmatprep.subr.bf16.mxu0 %v2418
      %3236 = vmatpush1.bf16.msra.mxu0 %v2417
      %3237 = vmatprep.subr.bf16.mxu0 %v2422
      %3238 = vmatpush1.bf16.msra.mxu0 %v2421
      %3239 = vmatprep.subr.bf16.mxu0 %v2426
      %3240 = vmatpush1.bf16.msra.mxu0 %v2425
      %3241 = vmatprep.subr.bf16.mxu0 %v2430
      %3242 = vmatpush1.bf16.msra.mxu0 %v2429
      %3243 = vmatprep.subr.bf16.mxu0 %v2434
      %3244 = vmatpush1.bf16.msra.mxu0 %v2433
      %3245 = vmatprep.subr.bf16.mxu0 %v2438
      %3246 = vmatpush1.bf16.msra.mxu0 %v2437
      %3247 = vmatprep.subr.bf16.mxu0 %v2442
      %3248 = vmatpush1.bf16.msra.mxu0 %v2441
      %3249 = vmatprep.subr.bf16.mxu0 %v2446
      %3250 = vmatpush1.bf16.msra.mxu0 %v2445
      %3251 = vmatprep.subr.bf16.mxu0 %v2450
      %3252 = vmatpush1.bf16.msra.mxu0 %v2449
      %3253 = vmatprep.mubr.bf16.mxu0 %v1036
      %3254 = vmatmul.mubr.bf16.gmra.mrb[0].mxu0 %v1035
      %v3255 = vpop.f32.mrb[0].mxu0
      %v3256 = vadd.f32 %v3213, %v3255
      %v3257 = vpop.f32.mrb[0].mxu0
      %v3258 = vadd.f32 %v3215, %v3257
      %v3259 = vpop.f32.mrb[0].mxu0
      %v3260 = vadd.f32 %v3217, %v3259
      %v3261 = vpop.f32.mrb[0].mxu0
      %v3262 = vadd.f32 %v3219, %v3261
      %3263 = vdwg.mxu0
      %3264 = vmatprep.subr.bf16.mxu0 %v2454
      %3265 = vmatpush1.bf16.msra.mxu0 %v2453
      %3266 = vmatprep.subr.bf16.mxu0 %v2458
      %3267 = vmatpush1.bf16.msra.mxu0 %v2457
      %3268 = vmatprep.subr.bf16.mxu0 %v2462
      %3269 = vmatpush1.bf16.msra.mxu0 %v2461
      %3270 = vmatprep.subr.bf16.mxu0 %v2466
      %3271 = vmatpush1.bf16.msra.mxu0 %v2465
      %3272 = vmatprep.subr.bf16.mxu0 %v2470
      %3273 = vmatpush1.bf16.msra.mxu0 %v2469
      %3274 = vmatprep.subr.bf16.mxu0 %v2474
      %3275 = vmatpush1.bf16.msra.mxu0 %v2473
      %3276 = vmatprep.subr.bf16.mxu0 %v2478
      %3277 = vmatpush1.bf16.msra.mxu0 %v2477
      %3278 = vmatprep.subr.bf16.mxu0 %v2482
      %3279 = vmatpush1.bf16.msra.mxu0 %v2481
      %3280 = vmatprep.subr.bf16.mxu0 %v2486
      %3281 = vmatpush1.bf16.msra.mxu0 %v2485
      %3282 = vmatprep.subr.bf16.mxu0 %v2490
      %3283 = vmatpush1.bf16.msra.mxu0 %v2489
      %3284 = vmatprep.subr.bf16.mxu0 %v2494
      %3285 = vmatpush1.bf16.msra.mxu0 %v2493
      %3286 = vmatprep.subr.bf16.mxu0 %v2498
      %3287 = vmatpush1.bf16.msra.mxu0 %v2497
      %3288 = vmatprep.subr.bf16.mxu0 %v2502
      %3289 = vmatpush1.bf16.msra.mxu0 %v2501
      %3290 = vmatprep.subr.bf16.mxu0 %v2506
      %3291 = vmatpush1.bf16.msra.mxu0 %v2505
      %3292 = vmatprep.subr.bf16.mxu0 %v2510
      %3293 = vmatpush1.bf16.msra.mxu0 %v2509
      %3294 = vmatprep.subr.bf16.mxu0 %v2514
      %3295 = vmatpush1.bf16.msra.mxu0 %v2513
      %3296 = vmatprep.mubr.bf16.mxu0 %v1038
      %3297 = vmatmul.mubr.bf16.gmra.mrb[0].mxu0 %v1037
      %v3298 = vpop.f32.mrb[0].mxu0
      %v3299 = vadd.f32 %v3256, %v3298
      %v3300 = vpop.f32.mrb[0].mxu0
      %v3301 = vadd.f32 %v3258, %v3300
      %v3302 = vpop.f32.mrb[0].mxu0
      %v3303 = vadd.f32 %v3260, %v3302
      %v3304 = vpop.f32.mrb[0].mxu0
      %v3305 = vadd.f32 %v3262, %v3304
      %3306 = vdwg.mxu0
      %3307 = vmatprep.subr.bf16.mxu0 %v2518
      %3308 = vmatpush1.bf16.msra.mxu0 %v2517
      %3309 = vmatprep.subr.bf16.mxu0 %v2522
      %3310 = vmatpush1.bf16.msra.mxu0 %v2521
      %3311 = vmatprep.subr.bf16.mxu0 %v2526
      %3312 = vmatpush1.bf16.msra.mxu0 %v2525
      %3313 = vmatprep.subr.bf16.mxu0 %v2530
      %3314 = vmatpush1.bf16.msra.mxu0 %v2529
      %3315 = vmatprep.subr.bf16.mxu0 %v2534
      %3316 = vmatpush1.bf16.msra.mxu0 %v2533
      %3317 = vmatprep.subr.bf16.mxu0 %v2538
      %3318 = vmatpush1.bf16.msra.mxu0 %v2537
      %3319 = vmatprep.subr.bf16.mxu0 %v2542
      %3320 = vmatpush1.bf16.msra.mxu0 %v2541
      %3321 = vmatprep.subr.bf16.mxu0 %v2546
      %3322 = vmatpush1.bf16.msra.mxu0 %v2545
      %3323 = vmatprep.subr.bf16.mxu0 %v2550
      %3324 = vmatpush1.bf16.msra.mxu0 %v2549
      %3325 = vmatprep.subr.bf16.mxu0 %v2554
      %3326 = vmatpush1.bf16.msra.mxu0 %v2553
      %3327 = vmatprep.subr.bf16.mxu0 %v2558
      %3328 = vmatpush1.bf16.msra.mxu0 %v2557
      %3329 = vmatprep.subr.bf16.mxu0 %v2562
      %3330 = vmatpush1.bf16.msra.mxu0 %v2561
      %3331 = vmatprep.subr.bf16.mxu0 %v2566
      %3332 = vmatpush1.bf16.msra.mxu0 %v2565
      %3333 = vmatprep.subr.bf16.mxu0 %v2570
      %3334 = vmatpush1.bf16.msra.mxu0 %v2569
      %3335 = vmatprep.subr.bf16.mxu0 %v2574
      %3336 = vmatpush1.bf16.msra.mxu0 %v2573
      %3337 = vmatprep.subr.bf16.mxu0 %v2578
      %3338 = vmatpush1.bf16.msra.mxu0 %v2577
      %3339 = vmatprep.mubr.bf16.mxu0 %v1040
      %3340 = vmatmul.mubr.bf16.gmra.mrb[0].mxu0 %v1039
      %v3341 = vpop.f32.mrb[0].mxu0
      %v3342 = vadd.f32 %v3299, %v3341
      %v3343 = vpop.f32.mrb[0].mxu0
      %v3344 = vadd.f32 %v3301, %v3343
      %v3345 = vpop.f32.mrb[0].mxu0
      %v3346 = vadd.f32 %v3303, %v3345
      %v3347 = vpop.f32.mrb[0].mxu0
      %v3348 = vadd.f32 %v3305, %v3347
      %3349 = vdwg.mxu0
      %3350 = vmatprep.subr.bf16.mxu0 %v2582
      %3351 = vmatpush1.bf16.msra.mxu0 %v2581
      %3352 = vmatprep.subr.bf16.mxu0 %v2586
      %3353 = vmatpush1.bf16.msra.mxu0 %v2585
      %3354 = vmatprep.subr.bf16.mxu0 %v2590
      %3355 = vmatpush1.bf16.msra.mxu0 %v2589
      %3356 = vmatprep.subr.bf16.mxu0 %v2594
      %3357 = vmatpush1.bf16.msra.mxu0 %v2593
      %3358 = vmatprep.subr.bf16.mxu0 %v2598
      %3359 = vmatpush1.bf16.msra.mxu0 %v2597
      %3360 = vmatprep.subr.bf16.mxu0 %v2602
      %3361 = vmatpush1.bf16.msra.mxu0 %v2601
      %3362 = vmatprep.subr.bf16.mxu0 %v2606
      %3363 = vmatpush1.bf16.msra.mxu0 %v2605
      %3364 = vmatprep.subr.bf16.mxu0 %v2610
      %3365 = vmatpush1.bf16.msra.mxu0 %v2609
      %3366 = vmatprep.subr.bf16.mxu0 %v2614
      %3367 = vmatpush1.bf16.msra.mxu0 %v2613
      %3368 = vmatprep.subr.bf16.mxu0 %v2618
      %3369 = vmatpush1.bf16.msra.mxu0 %v2617
      %3370 = vmatprep.subr.bf16.mxu0 %v2622
      %3371 = vmatpush1.bf16.msra.mxu0 %v2621
      %3372 = vmatprep.subr.bf16.mxu0 %v2626
      %3373 = vmatpush1.bf16.msra.mxu0 %v2625
      %3374 = vmatprep.subr.bf16.mxu0 %v2630
      %3375 = vmatpush1.bf16.msra.mxu0 %v2629
      %3376 = vmatprep.subr.bf16.mxu0 %v2634
      %3377 = vmatpush1.bf16.msra.mxu0 %v2633
      %3378 = vmatprep.subr.bf16.mxu0 %v2638
      %3379 = vmatpush1.bf16.msra.mxu0 %v2637
      %3380 = vmatprep.subr.bf16.mxu0 %v2642
      %3381 = vmatpush1.bf16.msra.mxu0 %v2641
      %3382 = vmatprep.mubr.bf16.mxu0 %v1042
      %3383 = vmatmul.mubr.bf16.gmra.mrb[0].mxu0 %v1041
      %v3384 = vpop.f32.mrb[0].mxu0
      %v3385 = vadd.f32 %v3342, %v3384
      %v3386 = vpop.f32.mrb[0].mxu0
      %v3387 = vadd.f32 %v3344, %v3386
      %v3388 = vpop.f32.mrb[0].mxu0
      %v3389 = vadd.f32 %v3346, %v3388
      %v3390 = vpop.f32.mrb[0].mxu0
      %v3391 = vadd.f32 %v3348, %v3390
      %3392 = vdwg.mxu0
      %v3393 = vmul.f32 %v3170, 0.1
      %v3394 = vmul.f32 %v3172, 0.1
      %v3395 = vmul.f32 %v3385, 0.1
      %v3396 = vmul.f32 %v3387, 0.1
      %v3397 = vmul.f32 %v3174, 0.1
      %v3398 = vmul.f32 %v3176, 0.1
      %v3399 = vmul.f32 %v3389, 0.1
      %v3400 = vmul.f32 %v3391, 0.1
      %v3401 = vlog2.pop %v3393
      %v3402 = vmul.f32 %v3401, 0.6931472
      %v3403 = vlog2.pop %v3394
      %v3404 = vmul.f32 %v3403, 0.6931472
      %v3405 = vlog2.pop %v3395
      %v3406 = vmul.f32 %v3405, 0.6931472
      %v3407 = vlog2.pop %v3396
      %v3408 = vmul.f32 %v3407, 0.6931472
      %v3409 = vlog2.pop %v3397
      %v3410 = vmul.f32 %v3409, 0.6931472
      %v3411 = vlog2.pop %v3398
      %v3412 = vmul.f32 %v3411, 0.6931472
      %v3413 = vlog2.pop %v3399
      %v3414 = vmul.f32 %v3413, 0.6931472
      %v3415 = vlog2.pop %v3400
      %v3416 = vmul.f32 %v3415, 0.6931472
      %v3417 = vld [vmem:[%s4] sm:$0xff]
      %v3418 = vld [vmem:[%s4 + $0x8] sm:$0xff]
      %v3419 = vld [vmem:[%s4 + $0x10] sm:$0xff]
      %v3420 = vld [vmem:[%s4 + $0x18] sm:$0xff]
      %v3421 = vld [vmem:[%s4 + $0x20] sm:$0xff]
      %v3422 = vld [vmem:[%s4 + $0x28] sm:$0xff]
      %v3423 = vld [vmem:[%s4 + $0x30] sm:$0xff]
      %v3424 = vld [vmem:[%s4 + $0x38] sm:$0xff]
      %v3425 = vld [vmem:[%s4 + $0x40] sm:$0xff]
      %v3426 = vld [vmem:[%s4 + $0x48] sm:$0xff]
      %v3427 = vld [vmem:[%s4 + $0x50] sm:$0xff]
      %v3428 = vld [vmem:[%s4 + $0x58] sm:$0xff]
      %v3429 = vld [vmem:[%s4 + $0x60] sm:$0xff]
      %v3430 = vld [vmem:[%s4 + $0x68] sm:$0xff]
      %v3431 = vld [vmem:[%s4 + $0x70] sm:$0xff]
      %v3432 = vld [vmem:[%s4 + $0x78] sm:$0xff]
      %v3433 = vld [vmem:[%s4 + $0x80] sm:$0xff]
      %v3434 = vld [vmem:[%s4 + $0x88] sm:$0xff]
      %v3435 = vld [vmem:[%s4 + $0x90] sm:$0xff]
      %v3436 = vld [vmem:[%s4 + $0x98] sm:$0xff]
      %v3437 = vld [vmem:[%s4 + $0xa0] sm:$0xff]
      %v3438 = vld [vmem:[%s4 + $0xa8] sm:$0xff]
      %v3439 = vld [vmem:[%s4 + $0xb0] sm:$0xff]
      %v3440 = vld [vmem:[%s4 + $0xb8] sm:$0xff]
      %v3441 = vld [vmem:[%s4 + $0xc0] sm:$0xff]
      %v3442 = vld [vmem:[%s4 + $0xc8] sm:$0xff]
      %v3443 = vld [vmem:[%s4 + $0xd0] sm:$0xff]
      %v3444 = vld [vmem:[%s4 + $0xd8] sm:$0xff]
      %v3445 = vld [vmem:[%s4 + $0xe0] sm:$0xff]
      %v3446 = vld [vmem:[%s4 + $0xe8] sm:$0xff]
      %v3447 = vld [vmem:[%s4 + $0xf0] sm:$0xff]
      %v3448 = vld [vmem:[%s4 + $0xf8] sm:$0xff]
      %v3449 = vld [vmem:[%s4 + $0x100] sm:$0xff]
      %v3450 = vld [vmem:[%s4 + $0x108] sm:$0xff]
      %v3451 = vld [vmem:[%s4 + $0x110] sm:$0xff]
      %v3452 = vld [vmem:[%s4 + $0x118] sm:$0xff]
      %v3453 = vld [vmem:[%s4 + $0x120] sm:$0xff]
      %v3454 = vld [vmem:[%s4 + $0x128] sm:$0xff]
      %v3455 = vld [vmem:[%s4 + $0x130] sm:$0xff]
      %v3456 = vld [vmem:[%s4 + $0x138] sm:$0xff]
      %v3457 = vld [vmem:[%s4 + $0x140] sm:$0xff]
      %v3458 = vld [vmem:[%s4 + $0x148] sm:$0xff]
      %v3459 = vld [vmem:[%s4 + $0x150] sm:$0xff]
      %v3460 = vld [vmem:[%s4 + $0x158] sm:$0xff]
      %v3461 = vld [vmem:[%s4 + $0x160] sm:$0xff]
      %v3462 = vld [vmem:[%s4 + $0x168] sm:$0xff]
      %v3463 = vld [vmem:[%s4 + $0x170] sm:$0xff]
      %v3464 = vld [vmem:[%s4 + $0x178] sm:$0xff]
      %v3465 = vld [vmem:[%s4 + $0x180] sm:$0xff]
      %v3466 = vld [vmem:[%s4 + $0x188] sm:$0xff]
      %v3467 = vld [vmem:[%s5] sm:$0x1]
      %v3469 = vlaneseq
      %v3470 = vshrl.u32 %v3469, 7
      %v3471 = vsub.s32 0, %v3470
      %v3472 = vrot.slane %v3467, %v3471
      %vm3474 = vcmask 130048
      %v3476 = vsel %vm3474, %v3408, 0
      %v3479 = vsel %vm3474, %v3416, 0
      %3481 = vmatprep.subr.mxu0 0.0
      %3482 = vmatpush1.msra.mxu0 %v3417
      %3483 = vmatprep.subr.mxu0 0.0
      %3484 = vmatpush1.msra.mxu0 %v3418
      %3485 = vmatprep.subr.mxu0 0.0
      %3486 = vmatpush1.msra.mxu0 %v3419
      %3487 = vmatprep.subr.mxu0 0.0
      %3488 = vmatpush1.msra.mxu0 %v3420
      %3489 = vmatprep.subr.mxu0 0.0
      %3490 = vmatpush1.msra.mxu0 %v3421
      %3491 = vmatprep.subr.mxu0 0.0
      %3492 = vmatpush1.msra.mxu0 %v3422
      %3493 = vmatprep.subr.mxu0 0.0
      %3494 = vmatpush1.msra.mxu0 %v3423
      %3495 = vmatprep.subr.mxu0 0.0
      %3496 = vmatpush1.msra.mxu0 %v3424
      %3497 = vmatprep.subr.mxu0 0.0
      %3498 = vmatpush1.msra.mxu0 %v3425
      %3499 = vmatprep.subr.mxu0 0.0
      %3500 = vmatpush1.msra.mxu0 %v3426
      %3501 = vmatprep.subr.mxu0 0.0
      %3502 = vmatpush1.msra.mxu0 %v3427
      %3503 = vmatprep.subr.mxu0 0.0
      %3504 = vmatpush1.msra.mxu0 %v3428
      %3505 = vmatprep.subr.mxu0 0.0
      %3506 = vmatpush1.msra.mxu0 %v3429
      %3507 = vmatprep.subr.mxu0 0.0
      %3508 = vmatpush1.msra.mxu0 %v3430
      %3509 = vmatprep.subr.mxu0 0.0
      %3510 = vmatpush1.msra.mxu0 %v3431
      %3511 = vmatprep.subr.mxu0 0.0
      %3512 = vmatpush1.msra.mxu0 %v3432
      %3513 = vmatprep.subr.mxu0 0.0
      %3514 = vmatpush1.msra.mxu0 %v3433
      %3515 = vmatprep.subr.mxu0 0.0
      %3516 = vmatpush1.msra.mxu0 %v3434
      %3517 = vmatprep.subr.mxu0 0.0
      %3518 = vmatpush1.msra.mxu0 %v3435
      %3519 = vmatprep.subr.mxu0 0.0
      %3520 = vmatpush1.msra.mxu0 %v3436
      %3521 = vmatprep.subr.mxu0 0.0
      %3522 = vmatpush1.msra.mxu0 %v3437
      %3523 = vmatprep.subr.mxu0 0.0
      %3524 = vmatpush1.msra.mxu0 %v3438
      %3525 = vmatprep.subr.mxu0 0.0
      %3526 = vmatpush1.msra.mxu0 %v3439
      %3527 = vmatprep.subr.mxu0 0.0
      %3528 = vmatpush1.msra.mxu0 %v3440
      %3529 = vmatprep.subr.mxu0 0.0
      %3530 = vmatpush1.msra.mxu0 %v3441
      %3531 = vmatprep.subr.mxu0 0.0
      %3532 = vmatpush1.msra.mxu0 %v3442
      %3533 = vmatprep.subr.mxu0 0.0
      %3534 = vmatpush1.msra.mxu0 %v3443
      %3535 = vmatprep.subr.mxu0 0.0
      %3536 = vmatpush1.msra.mxu0 %v3444
      %3537 = vmatprep.subr.mxu0 0.0
      %3538 = vmatpush1.msra.mxu0 %v3445
      %3539 = vmatprep.subr.mxu0 0.0
      %3540 = vmatpush1.msra.mxu0 %v3446
      %3541 = vmatprep.subr.mxu0 0.0
      %3542 = vmatpush1.msra.mxu0 %v3447
      %3543 = vmatprep.subr.mxu0 0.0
      %3544 = vmatpush1.msra.mxu0 %v3448
      %3545 = vmatprep.mubr.f32.mxu0 %v3404
      %3546 = vmatmul.mubr.f32.gmra.mrb[0].mxu0 %v3402
      %v3547 = vpop.f32.mrb[0].mxu0
      %v3548 = vadd.f32 %v3472, %v3547
      %v3549 = vpop.f32.mrb[0].mxu0
      %3550 = vmatprep.mubr.f32.mxu0 %v3412
      %3551 = vmatmul.mubr.f32.gmra.mrb[0].mxu0 %v3410
      %v3552 = vpop.f32.mrb[0].mxu0
      %v3553 = vadd.f32 %v3472, %v3552
      %v3554 = vpop.f32.mrb[0].mxu0
      %3555 = vdwg.mxu0
      %3556 = vmatprep.subr.mxu0 0.0
      %3557 = vmatpush1.msra.mxu0 %v3449
      %3558 = vmatprep.subr.mxu0 0.0
      %3559 = vmatpush1.msra.mxu0 %v3450
      %3560 = vmatprep.subr.mxu0 0.0
      %3561 = vmatpush1.msra.mxu0 %v3451
      %3562 = vmatprep.subr.mxu0 0.0
      %3563 = vmatpush1.msra.mxu0 %v3452
      %3564 = vmatprep.subr.mxu0 0.0
      %3565 = vmatpush1.msra.mxu0 %v3453
      %3566 = vmatprep.subr.mxu0 0.0
      %3567 = vmatpush1.msra.mxu0 %v3454
      %3568 = vmatprep.subr.mxu0 0.0
      %3569 = vmatpush1.msra.mxu0 %v3455
      %3570 = vmatprep.subr.mxu0 0.0
      %3571 = vmatpush1.msra.mxu0 %v3456
      %3572 = vmatprep.subr.mxu0 0.0
      %3573 = vmatpush1.msra.mxu0 %v3457
      %3574 = vmatprep.subr.mxu0 0.0
      %3575 = vmatpush1.msra.mxu0 %v3458
      %3576 = vmatprep.subr.mxu0 0.0
      %3577 = vmatpush1.msra.mxu0 %v3459
      %3578 = vmatprep.subr.mxu0 0.0
      %3579 = vmatpush1.msra.mxu0 %v3460
      %3580 = vmatprep.subr.mxu0 0.0
      %3581 = vmatpush1.msra.mxu0 %v3461
      %3582 = vmatprep.subr.mxu0 0.0
      %3583 = vmatpush1.msra.mxu0 %v3462
      %3584 = vmatprep.subr.mxu0 0.0
      %3585 = vmatpush1.msra.mxu0 %v3463
      %3586 = vmatprep.subr.mxu0 0.0
      %3587 = vmatpush1.msra.mxu0 %v3464
      %3588 = vmatprep.subr.mxu0 0.0
      %3589 = vmatpush1.msra.mxu0 %v3465
      %3590 = vmatprep.subr.mxu0 0.0
      %3591 = vmatpush1.msra.mxu0 %v3466
      %3592 = vmatprep.subr.mxu0 0.0
      %3593 = vmatpush1.msra.mxu0 0.0
      %3594 = vmatprep.subr.mxu0 0.0
      %3595 = vmatpush1.msra.mxu0 0.0
      %3596 = vmatprep.subr.mxu0 0.0
      %3597 = vmatpush1.msra.mxu0 0.0
      %3598 = vmatprep.subr.mxu0 0.0
      %3599 = vmatpush1.msra.mxu0 0.0
      %3600 = vmatprep.subr.mxu0 0.0
      %3601 = vmatpush1.msra.mxu0 0.0
      %3602 = vmatprep.subr.mxu0 0.0
      %3603 = vmatpush1.msra.mxu0 0.0
      %3604 = vmatprep.subr.mxu0 0.0
      %3605 = vmatpush1.msra.mxu0 0.0
      %3606 = vmatprep.subr.mxu0 0.0
      %3607 = vmatpush1.msra.mxu0 0.0
      %3608 = vmatprep.subr.mxu0 0.0
      %3609 = vmatpush1.msra.mxu0 0.0
      %3610 = vmatprep.subr.mxu0 0.0
      %3611 = vmatpush1.msra.mxu0 0.0
      %3612 = vmatprep.subr.mxu0 0.0
      %3613 = vmatpush1.msra.mxu0 0.0
      %3614 = vmatprep.subr.mxu0 0.0
      %3615 = vmatpush1.msra.mxu0 0.0
      %3616 = vmatprep.subr.mxu0 0.0
      %3617 = vmatpush1.msra.mxu0 0.0
      %3618 = vmatprep.subr.mxu0 0.0
      %3619 = vmatpush1.msra.mxu0 0.0
      %3620 = vmatprep.mubr.f32.mxu0 %v3476
      %3621 = vmatmul.mubr.f32.gmra.mrb[0].mxu0 %v3406
      %v3622 = vpop.f32.mrb[0].mxu0
      %v3623 = vadd.f32 %v3548, %v3622
      %v3624 = vpop.f32.mrb[0].mxu0
      %3625 = vmatprep.mubr.f32.mxu0 %v3479
      %3626 = vmatmul.mubr.f32.gmra.mrb[0].mxu0 %v3414
      %v3627 = vpop.f32.mrb[0].mxu0
      %v3628 = vadd.f32 %v3553, %v3627
      %v3629 = vpop.f32.mrb[0].mxu0
      %3630 = vdwg.mxu0
      %3631 = vst [vmem:[%s253] sm:$0xff] %v3623
      %3632 = vst [vmem:[%s253 + $0x8] sm:$0xff] %v3628
      %s3633 = smul.u32 2, %s17
      %p3634 = scmp.lt.s32.totalorder %s3633, 3
      %s3635 = scalar_select %p3634, %s3633, 3
      %s3636 = smul.addr %s3635, 8
      %s3637 = scalar_lea.vmem %s6, %s3636
      // Predicated region
      $region45: #{shallow_convnet_forward.1} parent=43 // pred_check
        %p3638 = pneg %p166
      $region46: #{shallow_convnet_forward.1} parent=43 // pred_check_branch
        %3640 = sbr.rel (%p3638) target = $region48
      $region47: #{shallow_convnet_forward.1} parent=43 // pred_region
        %s3641 = smul.u32 2, %s17
      $region48: #{shallow_convnet_forward.1} parent=43 // pred_fallthru
        _
    $region44: #{shallow_convnet_forward.1} parent=5 // pred_fallthru
      _
    %p3642 = scmp.le.s32.totalorder 2, %s12
    // Predicated region
    $region49: #{shallow_convnet_forward.1} parent=5 // pred_check
      %p3643 = pneg %p3642
    $region50: #{shallow_convnet_forward.1} parent=5 // pred_check_branch
      %3645 = sbr.rel (%p3643) target = $region52
    $region51: #{shallow_convnet_forward.1} parent=5 // pred_region
      %s3646 = ssub.s32 %s12, 2
      // Predicated region
      $region53: #{shallow_convnet_forward.1} parent=51 // pred_check
        %p3647 = pneg %p172
      $region54: #{shallow_convnet_forward.1} parent=51 // pred_check_branch
        %3649 = sbr.rel (%p3647) target = $region56
      $region55: #{shallow_convnet_forward.1} parent=51 // pred_region
        %s3650 = smul.u32 2, %s18
        %p3651 = scmp.lt.s32.totalorder %s3650, 3
        %s3652 = scalar_select %p3651, %s3650, 3
        %s3653 = smul.addr %s3652, 8
        %s3654 = scalar_lea.vmem %s6, %s3653
      $region56: #{shallow_convnet_forward.1} parent=51 // pred_fallthru
        _
    $region52: #{shallow_convnet_forward.1} parent=5 // pred_fallthru
      _
  $region6: #{shallow_convnet_forward.1} parent=0 // loop_footer
    %s16 = sadd.s32 1, %s12
  $region7: #{shallow_convnet_forward.1} parent=0 // loop_footer_branch
    %11 = sbr.rel target = $region3
  $region8: #{shallow_convnet_forward.1} parent=0 // loop_exit
    _

</llo_original>
